<compile_context>
chip_gen: v6e
topology: v6e:2x2x1
jax: 0.10.0
libtpu: 0.0.40
codegen_flags: <defaults>
</compile_context>

<pallas_src>
import functools

import jax
import jax.numpy as jnp
from jax import lax
from jax.experimental import pallas as pl
from jax.experimental.pallas import tpu as pltpu


# ----------------------------- configuration --------------------------------
NEIGHB = 8          # k nearest neighbors
GROUPS = 4          # GroupNorm groups (module default 32; scaled with channels)
INC = 4             # input channels consumed by self.conv / Branch2 (C == 4 path)
OUTC = 16           # output feature channels (module default 64; scaled down)
HALF = OUTC // 2
ATT_MID = 32        # hidden width of attention_mode
GN_EPS = 1e-5

LANE = 128
VMEM_LIMIT = 48 * 1024 * 1024   # > default scoped limits, < v7x 64 MiB physical


def _round_up(x, m):
    return (x + m - 1) // m * m


def _pick_tile(total, candidates):
    for c in candidates:
        if c <= total and total % c == 0:
            return c
    return total


# ----------------------- Pallas kernel: fused kNN top-k ----------------------
def _knn_topk_kernel(x_ref, sel_ref, idx_ref, bv_ref, bi_ref, *, k, p_true, tile_p):
    # x_ref  : (3, tile_p)  raw points tile
    # sel_ref: (3, tile_s)  selected points tile
    # idx_ref: (tile_s, k)  int32 neighbor indices (written on last P step)
    # bv/bi  : (tile_s, 128) running best values / indices (lanes [0:k] used)
    pi = pl.program_id(2)

    @pl.when(pi == 0)
    def _():
        bv_ref[...] = jnp.full_like(bv_ref, -jnp.inf)
        bi_ref[...] = jnp.zeros_like(bi_ref)

    x = x_ref[...]
    sel = sel_ref[...]
    dn = (((0,), (0,)), ((), ()))
    inner = lax.dot_general(sel, x, dn, preferred_element_type=jnp.float32)  # (ts, tp)
    xx = jnp.sum(x * x, axis=0, keepdims=True)                               # (1, tp)
    # torch's extra -||sel||^2 term is constant along P -> identical top-k.
    d = 2.0 * inner - xx

    tile_s = d.shape[0]
    p_glob = pi * tile_p + lax.broadcasted_iota(jnp.int32, (tile_s, tile_p), 1)
    d = jnp.where(p_glob < p_true, d, -jnp.inf)          # mask padded points

    cand_v = jnp.concatenate([bv_ref[...], d], axis=1)                        # (ts, 128+tp)
    cand_i = jnp.concatenate([bi_ref[...].astype(jnp.float32),
                              p_glob.astype(jnp.float32)], axis=1)

    big = jnp.float32(3.0e38)
    for j in range(k):
        m = jnp.max(cand_v, axis=1, keepdims=True)                            # (ts, 1)
        sel_i = jnp.min(jnp.where(cand_v == m, cand_i, big),
                        axis=1, keepdims=True)                                # (ts, 1)
        bv_ref[:, j:j + 1] = m
        bi_ref[:, j:j + 1] = sel_i.astype(jnp.int32)
        cand_v = jnp.where((cand_v == m) & (cand_i == sel_i), -jnp.inf, cand_v)

    @pl.when(pi == pl.num_programs(2) - 1)
    def _():
        idx_ref[...] = bi_ref[:, 0:k]


def knn_pallas(x3_pad, sel3_pad, k, p_true):
    # x3_pad: (B, 3, P_pad), sel3_pad: (B, 3, S_pad) -> idx (B, S_pad, k) int32
    B, _, P_pad = x3_pad.shape
    S_pad = sel3_pad.shape[2]
    tile_p = _pick_tile(P_pad, (512, 256, 128))
    tile_s = _pick_tile(S_pad, (256, 128))
    n_p = P_pad // tile_p
    n_s = S_pad // tile_s
    kern = functools.partial(_knn_topk_kernel, k=k, p_true=p_true, tile_p=tile_p)
    return pl.pallas_call(
        kern,
        out_shape=jax.ShapeDtypeStruct((B, S_pad, k), jnp.int32),
        grid=(B, n_s, n_p),
        in_specs=[
            pl.BlockSpec((None, 3, tile_p), lambda b, si, pi: (b, 0, pi)),
            pl.BlockSpec((None, 3, tile_s), lambda b, si, pi: (b, 0, si)),
        ],
        out_specs=pl.BlockSpec((None, tile_s, k), lambda b, si, pi: (b, si, 0)),
        scratch_shapes=[
            pltpu.VMEM((tile_s, LANE), jnp.float32),
            pltpu.VMEM((tile_s, LANE), jnp.int32),
        ],
        compiler_params=pltpu.CompilerParams(
            dimension_semantics=("parallel", "parallel", "arbitrary"),
            vmem_limit_bytes=VMEM_LIMIT),
    )(x3_pad.astype(jnp.float32), sel3_pad.astype(jnp.float32))


# ---------------- Pallas kernel 1: GroupNorm statistics (pass 1) -------------
def _fe_stats_kernel(x1_ref, w_pre_ref, stat_ref, *, k, s_true, tile_s, outc, inc):
    # x1_ref  : (K, C, tile_s) gathered neighborhoods (per-k slabs contiguous)
    # w_pre   : (OUTC, inc+4) = [w_main | w_pc_full | w_t_full]
    # stat_ref: (OUTC, 2)     accumulated [sum, sum_sq] over all N = K*S_true
    si = pl.program_id(1)

    @pl.when(si == 0)
    def _():
        stat_ref[...] = jnp.zeros_like(stat_ref)

    w_main = w_pre_ref[:, 0:inc]
    w_pcf = w_pre_ref[:, inc:inc + 3]
    w_tf = w_pre_ref[:, inc + 3:inc + 4]

    center = x1_ref[0]                       # (C, tile_s)  == torch x1[:, :, :, 0]
    center3 = center[0:3, :]
    dn = (((1,), (0,)), ((), ()))
    pe_c = lax.dot_general(w_pcf, center3, dn, preferred_element_type=jnp.float32)

    s_glob = si * tile_s + lax.broadcasted_iota(jnp.int32, (1, tile_s), 1)
    valid = (s_glob < s_true).astype(jnp.float32)          # mask padded columns

    acc_s = jnp.zeros((outc, 1), jnp.float32)
    acc_q = jnp.zeros((outc, 1), jnp.float32)
    for kk in range(k):
        xk = x1_ref[kk]                                     # (C, tile_s)
        diff = xk[0:3, :] - center3
        temp = jnp.sqrt(jnp.sum(diff * diff, axis=0, keepdims=True))
        pre = (lax.dot_general(w_main, xk, dn, preferred_element_type=jnp.float32)
               + pe_c + w_tf * temp)                        # (OUTC, tile_s)
        pre = pre * valid
        acc_s = acc_s + jnp.sum(pre, axis=1, keepdims=True)
        acc_q = acc_q + jnp.sum(pre * pre, axis=1, keepdims=True)

    stat_ref[:, 0:1] = stat_ref[:, 0:1] + acc_s
    stat_ref[:, 1:2] = stat_ref[:, 1:2] + acc_q


# ------------- Pallas kernel 2: normalize + attention + branches -------------
def _fe_main_kernel(x1_ref, scale_ref, shift_ref, w_pre_ref, w_att_ref, w_br_ref,
                    out_ref, *, k, outc, inc):
    # x1_ref : (K, C, tile_s); scale/shift: (OUTC, 1) per-sample GroupNorm affine
    # w_att  : (32, OUTC+1) = [w_a1 | w_a2^T]; w_br: (OUTC, OUTC+inc) = [w_b1 | w_b2]
    # out_ref: (OUTC, tile_s) feature rows only (center rows added in wrapper)
    w_main = w_pre_ref[:, 0:inc]
    w_pcf = w_pre_ref[:, inc:inc + 3]
    w_tf = w_pre_ref[:, inc + 3:inc + 4]
    w_a1 = w_att_ref[:, 0:outc]
    w_a2t = w_att_ref[:, outc:outc + 1]
    w_b1 = w_br_ref[:, 0:outc]
    w_b2 = w_br_ref[:, outc:outc + inc]

    scale = scale_ref[...]
    shift = shift_ref[...]

    center = x1_ref[0]                        # (C, tile_s)
    center3 = center[0:3, :]
    tile_s = center.shape[1]
    dn = (((1,), (0,)), ((), ()))
    dn0 = (((0,), (0,)), ((), ()))
    pe_c = lax.dot_general(w_pcf, center3, dn, preferred_element_type=jnp.float32)

    # online softmax over the K neighbors (only one (OUTC, tile_s) feature live)
    m = jnp.full((1, tile_s), -jnp.inf, jnp.float32)
    l = jnp.zeros((1, tile_s), jnp.float32)
    acc = jnp.zeros((outc, tile_s), jnp.float32)

    for kk in range(k):
        xk = x1_ref[kk]
        diff = xk[0:3, :] - center3
        temp = jnp.sqrt(jnp.sum(diff * diff, axis=0, keepdims=True))
        pre = (lax.dot_general(w_main, xk, dn, preferred_element_type=jnp.float32)
               + pe_c + w_tf * temp)
        y = pre * scale + shift
        f = jnp.where(y >= 0, y, 0.2 * y)                                     # (OUTC, S)
        a = lax.dot_general(w_a1, f, dn, preferred_element_type=jnp.float32)  # (32, S)
        a = jnp.where(a >= 0, a, 0.2 * a)
        logit = lax.dot_general(w_a2t, a, dn0,
                                preferred_element_type=jnp.float32)           # (1, S)

        m_new = jnp.maximum(m, logit)
        alpha = jnp.exp(m - m_new)
        p = jnp.exp(logit - m_new)
        l = alpha * l + p
        acc = alpha * acc + p * f
        m = m_new

    fsum = acc * (1.0 / l)                                                    # (OUTC, S)
    fea = (lax.dot_general(w_b1, fsum, dn, preferred_element_type=jnp.float32)
           + lax.dot_general(w_b2, center, dn, preferred_element_type=jnp.float32))
    out_ref[...] = jnp.where(fea >= 0, fea, 0.1 * fea)


# ------------------------------ weight folding -------------------------------
def _prepare_weights(params):
    w_pe = params["w_pe"]                                    # (HALF, 10)
    w_pa = w_pe[:, 0:3] + w_pe[:, 6:9]
    w_pc = w_pe[:, 3:6] - w_pe[:, 6:9]
    w_t = w_pe[:, 9:10]
    # stacked halves: rows [0:HALF] = self.conv, rows [HALF:] = PosEncoding PA-part
    w_main = jnp.concatenate(
        [params["w_c"], jnp.pad(w_pa, ((0, 0), (0, INC - 3)))], axis=0)       # (OUTC, INC)
    w_pc_full = jnp.concatenate([jnp.zeros((HALF, 3), jnp.float32), w_pc], axis=0)
    w_t_full = jnp.concatenate([jnp.zeros((HALF, 1), jnp.float32), w_t], axis=0)
    w_pre = jnp.concatenate([w_main, w_pc_full, w_t_full], axis=1)            # (OUTC, INC+4)
    w_att = jnp.concatenate([params["w_a1"], params["w_a2"].T], axis=1)       # (32, OUTC+1)
    w_br = jnp.concatenate([params["w_b1"], params["w_b2"]], axis=1)          # (OUTC, OUTC+INC)
    gamma = jnp.concatenate([params["g_c"], params["g_pe"]], axis=0)[:, 0]    # (OUTC,)
    beta = jnp.concatenate([params["b_c"], params["b_pe"]], axis=0)[:, 0]
    return w_pre, w_att, w_br, gamma, beta


# --------------------------- feature-extraction wrapper ----------------------
def feature_extract_pallas(x1, s_true, w_pre, w_att, w_br, gamma, beta):
    # x1: (B, K, C, S_pad) gathered neighborhoods
    B, K, C, S_pad = x1.shape
    tile_s = _pick_tile(S_pad, (1024, 512, 256, 128))
    n_s = S_pad // tile_s

    def wspec(arr):
        shp = arr.shape
        return pl.BlockSpec(shp, lambda b, si: (0,) * len(shp))

    # ---- pass 1: per-channel sum / sum-of-squares accumulated over S tiles
    stats = pl.pallas_call(
        functools.partial(_fe_stats_kernel, k=K, s_true=s_true, tile_s=tile_s,
                          outc=OUTC, inc=C),
        out_shape=jax.ShapeDtypeStruct((B, OUTC, 2), jnp.float32),
        grid=(B, n_s),
        in_specs=[
            pl.BlockSpec((None, K, C, tile_s), lambda b, si: (b, 0, 0, si)),
            wspec(w_pre),
        ],
        out_specs=pl.BlockSpec((None, OUTC, 2), lambda b, si: (b, 0, 0)),
        compiler_params=pltpu.CompilerParams(
            dimension_semantics=("parallel", "arbitrary"),
            vmem_limit_bytes=VMEM_LIMIT),
    )(x1, w_pre)

    # ---- tiny glue: fold GroupNorm stats (2*GROUPS groups, boundaries do not
    #      cross the stacked halves -> exact) + gamma/beta into scale/shift.
    #      NOTE: E[x^2]-E[x]^2 in f32; var clamped at 0 against cancellation.
    g2 = 2 * GROUPS
    cpg = OUTC // g2
    n_true = float(K * s_true)
    sums = stats[:, :, 0]
    sqs = stats[:, :, 1]
    gsum = sums.reshape(B, g2, cpg).sum(-1)
    gsq = sqs.reshape(B, g2, cpg).sum(-1)
    cnt = cpg * n_true
    mean = gsum / cnt
    var = jnp.maximum(gsq / cnt - mean * mean, 0.0)
    inv = lax.rsqrt(var + GN_EPS)
    mean_c = jnp.repeat(mean, cpg, axis=1)
    inv_c = jnp.repeat(inv, cpg, axis=1)
    scale = (gamma[None, :] * inv_c)[:, :, None]                       # (B, OUTC, 1)
    shift = (beta[None, :] - mean_c * gamma[None, :] * inv_c)[:, :, None]

    # ---- pass 2: normalize + attention + weighted sum + branches
    feat = pl.pallas_call(
        functools.partial(_fe_main_kernel, k=K, outc=OUTC, inc=C),
        out_shape=jax.ShapeDtypeStruct((B, OUTC, S_pad), jnp.float32),
        grid=(B, n_s),
        in_specs=[
            pl.BlockSpec((None, K, C, tile_s), lambda b, si: (b, 0, 0, si)),
            pl.BlockSpec((None, OUTC, 1), lambda b, si: (b, 0, 0)),
            pl.BlockSpec((None, OUTC, 1), lambda b, si: (b, 0, 0)),
            wspec(w_pre), wspec(w_att), wspec(w_br),
        ],
        out_specs=pl.BlockSpec((None, OUTC, tile_s), lambda b, si: (b, 0, si)),
        compiler_params=pltpu.CompilerParams(
            dimension_semantics=("parallel", "parallel"),
            vmem_limit_bytes=VMEM_LIMIT),
    )(x1, scale, shift, w_pre, w_att, w_br)
    return feat


# --------------------------- Dynamic_sampling + layer ------------------------
def feature_extraction_layer(key, x, num_points, params, k=NEIGHB):
    # Mirrors Dynamic_sampling.forward (s_num <= P, Is_temp=False, C == 4 path)
    # including torch's flat-gather + view reinterpretation, then the
    # Feature_extraction_layer forward.
    B, C, P = x.shape
    assert C == INC == 4
    assert num_points <= P and k <= P
    S = num_points
    S_pad = _round_up(S, LANE)
    P_pad = _round_up(P, LANE)
    assert P_pad <= (1 << 24)   # indices kept exactly representable in f32

    x = x.astype(jnp.float32)

    # random subsampling: argsort of uniform, first S (matches torch semantics)
    rand = jax.random.uniform(key, (B, P))
    perm = jnp.argsort(rand, axis=1)[:, :S]
    sel = jnp.take_along_axis(x, perm[:, None, :], axis=2)            # (B, C, S)

    # fused kNN distance + top-k (padded P / S, masking done in-kernel)
    x3_pad = jnp.pad(x[:, :3, :], ((0, 0), (0, 0), (0, P_pad - P)))
    sel3_pad = jnp.pad(sel[:, :3, :], ((0, 0), (0, 0), (0, S_pad - S)))
    idx_sp = knn_pallas(x3_pad, sel3_pad, k, P)                       # (B, S_pad, k)

    # torch's flat-gather / view reinterpretation:
    #   x1[b, c, s2, k2] = x[b, c, idx[b, (s2*k + k2) // S, (s2*k + k2) % S]]
    flat = jnp.arange(k)[:, None] + jnp.arange(S)[None, :] * k        # (k, S)
    jj = flat // S
    ss = flat % S
    g = idx_sp[jnp.arange(B)[:, None, None], ss[None], jj[None]]      # (B, k, S)
    g = jnp.pad(g, ((0, 0), (0, 0), (0, S_pad - S)))                  # pads -> point 0
    # gather directly in (B, K, C, S_pad): contiguous per-k slabs inside kernel
    x1 = jnp.take_along_axis(x[:, None, :, :], g[:, :, None, :], axis=3)

    w_pre, w_att, w_br, gamma, beta = _prepare_weights(params)
    feat = feature_extract_pallas(x1, S, w_pre, w_att, w_br, gamma, beta)

    # cat([x1[:, :4, :, 0], output], dim=1); drop the S padding
    return jnp.concatenate([x1[:, 0, :, :S], feat[:, :, :S]], axis=1)


# ------------------------------- parameters ----------------------------------
def init_params(key):
    ks = jax.random.split(key, 6)

    def w(k_, shape):
        fan_in = shape[-1]
        return jax.random.normal(k_, shape, jnp.float32) / jnp.sqrt(float(fan_in))

    return {
        # PosEncoding: Conv2d(10, HALF, 1, bias=False) + GroupNorm(GROUPS, HALF)
        "w_pe": w(ks[0], (HALF, 10)),
        "g_pe": jnp.ones((HALF, 1), jnp.float32),
        "b_pe": jnp.zeros((HALF, 1), jnp.float32),
        # conv: Conv2d(INC, HALF, 1, bias=False) + GroupNorm(GROUPS, HALF)
        "w_c": w(ks[1], (HALF, INC)),
        "g_c": jnp.ones((HALF, 1), jnp.float32),
        "b_c": jnp.zeros((HALF, 1), jnp.float32),
        # attention_mode: Conv2d(OUTC, 32, 1) -> LeakyReLU -> Conv2d(32, 1, 1)
        "w_a1": w(ks[2], (ATT_MID, OUTC)),
        "w_a2": w(ks[3], (1, ATT_MID)),
        # Branch1: Conv1d(OUTC, OUTC, 1); Branch2: Conv1d(INC, OUTC, 1)
        "w_b1": w(ks[4], (OUTC, OUTC)),
        "w_b2": w(ks[5], (OUTC, INC)),
    }


# ---------------------------------- main --------------------------------------
if __name__ == "__main__":
    B, C, P = 2, 4, 16
    NUM_POINTS = 8

    root = jax.random.PRNGKey(0)
    k_x, k_samp, k_params = jax.random.split(root, 3)

    x = jax.random.normal(k_x, (B, C, P), jnp.float32)
    params = init_params(k_params)

    out = feature_extraction_layer(k_samp, x, NUM_POINTS, params, k=NEIGHB)
    out = jax.block_until_ready(out)

    assert out.shape == (B, 4 + OUTC, NUM_POINTS), out.shape
    assert bool(jnp.isfinite(out).all())
    print("KERNEL_OK")
</pallas_src>

<mosaic_0001>
module attributes {stable_mosaic.version = 11 : i64} {
  func.func @_knn_topk_kernel(%arg0: i32, %arg1: i32, %arg2: i32, %arg3: memref<1x3x128xf32, #tpu.memory_space<vmem>>, %arg4: memref<1x3x128xf32, #tpu.memory_space<vmem>>, %arg5: memref<1x128x8xi32, #tpu.memory_space<vmem>>, %arg6: memref<128x128xf32, #tpu.memory_space<vmem>>, %arg7: memref<128x128xi32, #tpu.memory_space<vmem>>) attributes {dimension_semantics = [#tpu.dimension_semantics<parallel>, #tpu.dimension_semantics<parallel>, #tpu.dimension_semantics<arbitrary>], iteration_bounds = array<i64: 2, 1, 1>, scalar_prefetch = 0 : i64, scratch_operands = 2 : i64, tpu.core_type = #tpu.core_type<tc>, window_params = [{transform_indices = @transform_0, window_bounds = array<i64: 1, 3, 128>}, {transform_indices = @transform_1, window_bounds = array<i64: 1, 3, 128>}, {transform_indices = @transform_2, window_bounds = array<i64: 1, 128, 8>}]} {
    %c0_i32 = arith.constant 0 : i32
    %0 = arith.cmpi eq, %arg2, %c0_i32 : i32
    %1 = arith.extui %0 : i1 to i32
    %c0_i32_0 = arith.constant 0 : i32
    %2 = arith.cmpi ne, %1, %c0_i32_0 : i32
    scf.if %2 {
      %cst_71 = arith.constant 0xFF800000 : f32
      %169 = vector.broadcast %cst_71 : f32 to vector<128x128xf32>
      %c0_72 = arith.constant 0 : index
      %c0_73 = arith.constant 0 : index
      %170 = vector.load %arg6[%c0_72, %c0_73] : memref<128x128xf32, #tpu.memory_space<vmem>>, vector<128x128xf32>
      tpu.vector_store %arg6[%c0_72, %c0_73], %169 {strides = array<i32>} : memref<128x128xf32, #tpu.memory_space<vmem>>, vector<128x128xf32>,
      %c0_i32_74 = arith.constant 0 : i32
      %171 = vector.broadcast %c0_i32_74 : i32 to vector<128x128xi32>
      %c0_75 = arith.constant 0 : index
      %c0_76 = arith.constant 0 : index
      %172 = vector.load %arg7[%c0_75, %c0_76] : memref<128x128xi32, #tpu.memory_space<vmem>>, vector<128x128xi32>
      tpu.vector_store %arg7[%c0_75, %c0_76], %171 {strides = array<i32>} : memref<128x128xi32, #tpu.memory_space<vmem>>, vector<128x128xi32>,
    } else {
    }
    %c0 = arith.constant 0 : index
    %c0_1 = arith.constant 0 : index
    %c0_2 = arith.constant 0 : index
    %3 = vector.load %arg3[%c0, %c0_1, %c0_2] : memref<1x3x128xf32, #tpu.memory_space<vmem>>, vector<1x3x128xf32>
    %4 = vector.shape_cast %3 : vector<1x3x128xf32> to vector<3x128xf32>
    %c0_3 = arith.constant 0 : index
    %c0_4 = arith.constant 0 : index
    %c0_5 = arith.constant 0 : index
    %5 = vector.load %arg4[%c0_3, %c0_4, %c0_5] : memref<1x3x128xf32, #tpu.memory_space<vmem>>, vector<1x3x128xf32>
    %6 = vector.shape_cast %5 : vector<1x3x128xf32> to vector<3x128xf32>
    %cst = arith.constant dense<0.000000e+00> : vector<128x128xf32>
    %7 = tpu.matmul %6, %4, %cst {dimension_numbers = #tpu.dot_dimension_numbers<[0], [0], [1], [1], [0, 1, 1, 1], [], []>} : vector<3x128xf32>, vector<3x128xf32>, vector<128x128xf32> -> vector<128x128xf32>
    %8 = arith.mulf %4, %4 : vector<3x128xf32>
    %cst_6 = arith.constant dense<0.000000e+00> : vector<128xf32>
    %9 = vector.multi_reduction <add>, %8, %cst_6 [0] : vector<3x128xf32> to vector<128xf32>
    %10 = vector.shape_cast %9 : vector<128xf32> to vector<1x128xf32>
    %cst_7 = arith.constant 2.000000e+00 : f32
    %11 = vector.broadcast %cst_7 : f32 to vector<128x128xf32>
    %12 = arith.mulf %11, %7 : vector<128x128xf32>
    %13 = vector.broadcast %10 : vector<1x128xf32> to vector<128x128xf32>
    %14 = arith.subf %12, %13 : vector<128x128xf32>
    %c128_i32 = arith.constant 128 : i32
    %15 = arith.muli %arg2, %c128_i32 : i32
    %16 = tpu.iota {dimensions = array<i32: 1>} : vector<128x128xi32>
    %17 = vector.broadcast %15 : i32 to vector<128x128xi32>
    %18 = arith.addi %17, %16 : vector<128x128xi32>
    %c16_i32 = arith.constant 16 : i32
    %19 = vector.broadcast %c16_i32 : i32 to vector<128x128xi32>
    %20 = arith.cmpi slt, %18, %19 : vector<128x128xi32>
    %cst_8 = arith.constant 0xFF800000 : f32
    %21 = vector.broadcast %cst_8 : f32 to vector<128x128xf32>
    %22 = arith.select %20, %14, %21 : vector<128x128xi1>, vector<128x128xf32>
    %c0_9 = arith.constant 0 : index
    %c0_10 = arith.constant 0 : index
    %23 = vector.load %arg6[%c0_9, %c0_10] : memref<128x128xf32, #tpu.memory_space<vmem>>, vector<128x128xf32>
    %24 = tpu.concatenate %23, %22 in 1 : vector<128x128xf32>, vector<128x128xf32> -> vector<128x256xf32>
    %c0_11 = arith.constant 0 : index
    %c0_12 = arith.constant 0 : index
    %25 = vector.load %arg7[%c0_11, %c0_12] : memref<128x128xi32, #tpu.memory_space<vmem>>, vector<128x128xi32>
    %26 = arith.sitofp %25 : vector<128x128xi32> to vector<128x128xf32>
    %27 = arith.sitofp %18 : vector<128x128xi32> to vector<128x128xf32>
    %28 = tpu.concatenate %26, %27 in 1 : vector<128x128xf32>, vector<128x128xf32> -> vector<128x256xf32>
    %cst_13 = arith.constant dense<0xFF800000> : vector<128xf32>
    %29 = vector.multi_reduction <maximumf>, %24, %cst_13 [1] : vector<128x256xf32> to vector<128xf32>
    %30 = vector.shape_cast %29 : vector<128xf32> to vector<128x1xf32>
    %31 = vector.broadcast %30 : vector<128x1xf32> to vector<128x256xf32>
    %32 = arith.cmpf oeq, %24, %31 : vector<128x256xf32>
    %cst_14 = arith.constant 3.000000e+38 : f32
    %33 = vector.broadcast %cst_14 : f32 to vector<128x256xf32>
    %34 = arith.select %32, %28, %33 : vector<128x256xi1>, vector<128x256xf32>
    %cst_15 = arith.constant dense<0x7F800000> : vector<128xf32>
    %35 = vector.multi_reduction <minimumf>, %34, %cst_15 [1] : vector<128x256xf32> to vector<128xf32>
    %36 = vector.shape_cast %35 : vector<128xf32> to vector<128x1xf32>
    %c0_16 = arith.constant 0 : index
    %c0_17 = arith.constant 0 : index
    %37 = vector.load %arg6[%c0_16, %c0_17] : memref<128x128xf32, #tpu.memory_space<vmem>>, vector<128x1xf32>
    tpu.vector_store %arg6[%c0_16, %c0_17], %30 {strides = array<i32>} : memref<128x128xf32, #tpu.memory_space<vmem>>, vector<128x1xf32>,
    %38 = arith.fptosi %36 : vector<128x1xf32> to vector<128x1xi32>
    %c0_18 = arith.constant 0 : index
    %c0_19 = arith.constant 0 : index
    %39 = vector.load %arg7[%c0_18, %c0_19] : memref<128x128xi32, #tpu.memory_space<vmem>>, vector<128x1xi32>
    tpu.vector_store %arg7[%c0_18, %c0_19], %38 {strides = array<i32>} : memref<128x128xi32, #tpu.memory_space<vmem>>, vector<128x1xi32>,
    %40 = vector.broadcast %30 : vector<128x1xf32> to vector<128x256xf32>
    %41 = arith.cmpf oeq, %24, %40 : vector<128x256xf32>
    %42 = vector.broadcast %36 : vector<128x1xf32> to vector<128x256xf32>
    %43 = arith.cmpf oeq, %28, %42 : vector<128x256xf32>
    %44 = arith.andi %41, %43 : vector<128x256xi1>
    %cst_20 = arith.constant 0xFF800000 : f32
    %45 = vector.broadcast %cst_20 : f32 to vector<128x256xf32>
    %46 = arith.select %44, %45, %24 : vector<128x256xi1>, vector<128x256xf32>
    %cst_21 = arith.constant dense<0xFF800000> : vector<128xf32>
    %47 = vector.multi_reduction <maximumf>, %46, %cst_21 [1] : vector<128x256xf32> to vector<128xf32>
    %48 = vector.shape_cast %47 : vector<128xf32> to vector<128x1xf32>
    %49 = vector.broadcast %48 : vector<128x1xf32> to vector<128x256xf32>
    %50 = arith.cmpf oeq, %46, %49 : vector<128x256xf32>
    %cst_22 = arith.constant 3.000000e+38 : f32
    %51 = vector.broadcast %cst_22 : f32 to vector<128x256xf32>
    %52 = arith.select %50, %28, %51 : vector<128x256xi1>, vector<128x256xf32>
    %cst_23 = arith.constant dense<0x7F800000> : vector<128xf32>
    %53 = vector.multi_reduction <minimumf>, %52, %cst_23 [1] : vector<128x256xf32> to vector<128xf32>
    %54 = vector.shape_cast %53 : vector<128xf32> to vector<128x1xf32>
    %c0_24 = arith.constant 0 : index
    %c1 = arith.constant 1 : index
    %55 = vector.load %arg6[%c0_24, %c1] : memref<128x128xf32, #tpu.memory_space<vmem>>, vector<128x1xf32>
    tpu.vector_store %arg6[%c0_24, %c1], %48 {strides = array<i32>} : memref<128x128xf32, #tpu.memory_space<vmem>>, vector<128x1xf32>,
    %56 = arith.fptosi %54 : vector<128x1xf32> to vector<128x1xi32>
    %c0_25 = arith.constant 0 : index
    %c1_26 = arith.constant 1 : index
    %57 = vector.load %arg7[%c0_25, %c1_26] : memref<128x128xi32, #tpu.memory_space<vmem>>, vector<128x1xi32>
    tpu.vector_store %arg7[%c0_25, %c1_26], %56 {strides = array<i32>} : memref<128x128xi32, #tpu.memory_space<vmem>>, vector<128x1xi32>,
    %58 = vector.broadcast %48 : vector<128x1xf32> to vector<128x256xf32>
    %59 = arith.cmpf oeq, %46, %58 : vector<128x256xf32>
    %60 = vector.broadcast %54 : vector<128x1xf32> to vector<128x256xf32>
    %61 = arith.cmpf oeq, %28, %60 : vector<128x256xf32>
    %62 = arith.andi %59, %61 : vector<128x256xi1>
    %cst_27 = arith.constant 0xFF800000 : f32
    %63 = vector.broadcast %cst_27 : f32 to vector<128x256xf32>
    %64 = arith.select %62, %63, %46 : vector<128x256xi1>, vector<128x256xf32>
    %cst_28 = arith.constant dense<0xFF800000> : vector<128xf32>
    %65 = vector.multi_reduction <maximumf>, %64, %cst_28 [1] : vector<128x256xf32> to vector<128xf32>
    %66 = vector.shape_cast %65 : vector<128xf32> to vector<128x1xf32>
    %67 = vector.broadcast %66 : vector<128x1xf32> to vector<128x256xf32>
    %68 = arith.cmpf oeq, %64, %67 : vector<128x256xf32>
    %cst_29 = arith.constant 3.000000e+38 : f32
    %69 = vector.broadcast %cst_29 : f32 to vector<128x256xf32>
    %70 = arith.select %68, %28, %69 : vector<128x256xi1>, vector<128x256xf32>
    %cst_30 = arith.constant dense<0x7F800000> : vector<128xf32>
    %71 = vector.multi_reduction <minimumf>, %70, %cst_30 [1] : vector<128x256xf32> to vector<128xf32>
    %72 = vector.shape_cast %71 : vector<128xf32> to vector<128x1xf32>
    %c0_31 = arith.constant 0 : index
    %c2 = arith.constant 2 : index
    %73 = vector.load %arg6[%c0_31, %c2] : memref<128x128xf32, #tpu.memory_space<vmem>>, vector<128x1xf32>
    tpu.vector_store %arg6[%c0_31, %c2], %66 {strides = array<i32>} : memref<128x128xf32, #tpu.memory_space<vmem>>, vector<128x1xf32>,
    %74 = arith.fptosi %72 : vector<128x1xf32> to vector<128x1xi32>
    %c0_32 = arith.constant 0 : index
    %c2_33 = arith.constant 2 : index
    %75 = vector.load %arg7[%c0_32, %c2_33] : memref<128x128xi32, #tpu.memory_space<vmem>>, vector<128x1xi32>
    tpu.vector_store %arg7[%c0_32, %c2_33], %74 {strides = array<i32>} : memref<128x128xi32, #tpu.memory_space<vmem>>, vector<128x1xi32>,
    %76 = vector.broadcast %66 : vector<128x1xf32> to vector<128x256xf32>
    %77 = arith.cmpf oeq, %64, %76 : vector<128x256xf32>
    %78 = vector.broadcast %72 : vector<128x1xf32> to vector<128x256xf32>
    %79 = arith.cmpf oeq, %28, %78 : vector<128x256xf32>
    %80 = arith.andi %77, %79 : vector<128x256xi1>
    %cst_34 = arith.constant 0xFF800000 : f32
    %81 = vector.broadcast %cst_34 : f32 to vector<128x256xf32>
    %82 = arith.select %80, %81, %64 : vector<128x256xi1>, vector<128x256xf32>
    %cst_35 = arith.constant dense<0xFF800000> : vector<128xf32>
    %83 = vector.multi_reduction <maximumf>, %82, %cst_35 [1] : vector<128x256xf32> to vector<128xf32>
    %84 = vector.shape_cast %83 : vector<128xf32> to vector<128x1xf32>
    %85 = vector.broadcast %84 : vector<128x1xf32> to vector<128x256xf32>
    %86 = arith.cmpf oeq, %82, %85 : vector<128x256xf32>
    %cst_36 = arith.constant 3.000000e+38 : f32
    %87 = vector.broadcast %cst_36 : f32 to vector<128x256xf32>
    %88 = arith.select %86, %28, %87 : vector<128x256xi1>, vector<128x256xf32>
    %cst_37 = arith.constant dense<0x7F800000> : vector<128xf32>
    %89 = vector.multi_reduction <minimumf>, %88, %cst_37 [1] : vector<128x256xf32> to vector<128xf32>
    %90 = vector.shape_cast %89 : vector<128xf32> to vector<128x1xf32>
    %c0_38 = arith.constant 0 : index
    %c3 = arith.constant 3 : index
    %91 = vector.load %arg6[%c0_38, %c3] : memref<128x128xf32, #tpu.memory_space<vmem>>, vector<128x1xf32>
    tpu.vector_store %arg6[%c0_38, %c3], %84 {strides = array<i32>} : memref<128x128xf32, #tpu.memory_space<vmem>>, vector<128x1xf32>,
    %92 = arith.fptosi %90 : vector<128x1xf32> to vector<128x1xi32>
    %c0_39 = arith.constant 0 : index
    %c3_40 = arith.constant 3 : index
    %93 = vector.load %arg7[%c0_39, %c3_40] : memref<128x128xi32, #tpu.memory_space<vmem>>, vector<128x1xi32>
    tpu.vector_store %arg7[%c0_39, %c3_40], %92 {strides = array<i32>} : memref<128x128xi32, #tpu.memory_space<vmem>>, vector<128x1xi32>,
    %94 = vector.broadcast %84 : vector<128x1xf32> to vector<128x256xf32>
    %95 = arith.cmpf oeq, %82, %94 : vector<128x256xf32>
    %96 = vector.broadcast %90 : vector<128x1xf32> to vector<128x256xf32>
    %97 = arith.cmpf oeq, %28, %96 : vector<128x256xf32>
    %98 = arith.andi %95, %97 : vector<128x256xi1>
    %cst_41 = arith.constant 0xFF800000 : f32
    %99 = vector.broadcast %cst_41 : f32 to vector<128x256xf32>
    %100 = arith.select %98, %99, %82 : vector<128x256xi1>, vector<128x256xf32>
    %cst_42 = arith.constant dense<0xFF800000> : vector<128xf32>
    %101 = vector.multi_reduction <maximumf>, %100, %cst_42 [1] : vector<128x256xf32> to vector<128xf32>
    %102 = vector.shape_cast %101 : vector<128xf32> to vector<128x1xf32>
    %103 = vector.broadcast %102 : vector<128x1xf32> to vector<128x256xf32>
    %104 = arith.cmpf oeq, %100, %103 : vector<128x256xf32>
    %cst_43 = arith.constant 3.000000e+38 : f32
    %105 = vector.broadcast %cst_43 : f32 to vector<128x256xf32>
    %106 = arith.select %104, %28, %105 : vector<128x256xi1>, vector<128x256xf32>
    %cst_44 = arith.constant dense<0x7F800000> : vector<128xf32>
    %107 = vector.multi_reduction <minimumf>, %106, %cst_44 [1] : vector<128x256xf32> to vector<128xf32>
    %108 = vector.shape_cast %107 : vector<128xf32> to vector<128x1xf32>
    %c0_45 = arith.constant 0 : index
    %c4 = arith.constant 4 : index
    %109 = vector.load %arg6[%c0_45, %c4] : memref<128x128xf32, #tpu.memory_space<vmem>>, vector<128x1xf32>
    tpu.vector_store %arg6[%c0_45, %c4], %102 {strides = array<i32>} : memref<128x128xf32, #tpu.memory_space<vmem>>, vector<128x1xf32>,
    %110 = arith.fptosi %108 : vector<128x1xf32> to vector<128x1xi32>
    %c0_46 = arith.constant 0 : index
    %c4_47 = arith.constant 4 : index
    %111 = vector.load %arg7[%c0_46, %c4_47] : memref<128x128xi32, #tpu.memory_space<vmem>>, vector<128x1xi32>
    tpu.vector_store %arg7[%c0_46, %c4_47], %110 {strides = array<i32>} : memref<128x128xi32, #tpu.memory_space<vmem>>, vector<128x1xi32>,
    %112 = vector.broadcast %102 : vector<128x1xf32> to vector<128x256xf32>
    %113 = arith.cmpf oeq, %100, %112 : vector<128x256xf32>
    %114 = vector.broadcast %108 : vector<128x1xf32> to vector<128x256xf32>
    %115 = arith.cmpf oeq, %28, %114 : vector<128x256xf32>
    %116 = arith.andi %113, %115 : vector<128x256xi1>
    %cst_48 = arith.constant 0xFF800000 : f32
    %117 = vector.broadcast %cst_48 : f32 to vector<128x256xf32>
    %118 = arith.select %116, %117, %100 : vector<128x256xi1>, vector<128x256xf32>
    %cst_49 = arith.constant dense<0xFF800000> : vector<128xf32>
    %119 = vector.multi_reduction <maximumf>, %118, %cst_49 [1] : vector<128x256xf32> to vector<128xf32>
    %120 = vector.shape_cast %119 : vector<128xf32> to vector<128x1xf32>
    %121 = vector.broadcast %120 : vector<128x1xf32> to vector<128x256xf32>
    %122 = arith.cmpf oeq, %118, %121 : vector<128x256xf32>
    %cst_50 = arith.constant 3.000000e+38 : f32
    %123 = vector.broadcast %cst_50 : f32 to vector<128x256xf32>
    %124 = arith.select %122, %28, %123 : vector<128x256xi1>, vector<128x256xf32>
    %cst_51 = arith.constant dense<0x7F800000> : vector<128xf32>
    %125 = vector.multi_reduction <minimumf>, %124, %cst_51 [1] : vector<128x256xf32> to vector<128xf32>
    %126 = vector.shape_cast %125 : vector<128xf32> to vector<128x1xf32>
    %c0_52 = arith.constant 0 : index
    %c5 = arith.constant 5 : index
    %127 = vector.load %arg6[%c0_52, %c5] : memref<128x128xf32, #tpu.memory_space<vmem>>, vector<128x1xf32>
    tpu.vector_store %arg6[%c0_52, %c5], %120 {strides = array<i32>} : memref<128x128xf32, #tpu.memory_space<vmem>>, vector<128x1xf32>,
    %128 = arith.fptosi %126 : vector<128x1xf32> to vector<128x1xi32>
    %c0_53 = arith.constant 0 : index
    %c5_54 = arith.constant 5 : index
    %129 = vector.load %arg7[%c0_53, %c5_54] : memref<128x128xi32, #tpu.memory_space<vmem>>, vector<128x1xi32>
    tpu.vector_store %arg7[%c0_53, %c5_54], %128 {strides = array<i32>} : memref<128x128xi32, #tpu.memory_space<vmem>>, vector<128x1xi32>,
    %130 = vector.broadcast %120 : vector<128x1xf32> to vector<128x256xf32>
    %131 = arith.cmpf oeq, %118, %130 : vector<128x256xf32>
    %132 = vector.broadcast %126 : vector<128x1xf32> to vector<128x256xf32>
    %133 = arith.cmpf oeq, %28, %132 : vector<128x256xf32>
    %134 = arith.andi %131, %133 : vector<128x256xi1>
    %cst_55 = arith.constant 0xFF800000 : f32
    %135 = vector.broadcast %cst_55 : f32 to vector<128x256xf32>
    %136 = arith.select %134, %135, %118 : vector<128x256xi1>, vector<128x256xf32>
    %cst_56 = arith.constant dense<0xFF800000> : vector<128xf32>
    %137 = vector.multi_reduction <maximumf>, %136, %cst_56 [1] : vector<128x256xf32> to vector<128xf32>
    %138 = vector.shape_cast %137 : vector<128xf32> to vector<128x1xf32>
    %139 = vector.broadcast %138 : vector<128x1xf32> to vector<128x256xf32>
    %140 = arith.cmpf oeq, %136, %139 : vector<128x256xf32>
    %cst_57 = arith.constant 3.000000e+38 : f32
    %141 = vector.broadcast %cst_57 : f32 to vector<128x256xf32>
    %142 = arith.select %140, %28, %141 : vector<128x256xi1>, vector<128x256xf32>
    %cst_58 = arith.constant dense<0x7F800000> : vector<128xf32>
    %143 = vector.multi_reduction <minimumf>, %142, %cst_58 [1] : vector<128x256xf32> to vector<128xf32>
    %144 = vector.shape_cast %143 : vector<128xf32> to vector<128x1xf32>
    %c0_59 = arith.constant 0 : index
    %c6 = arith.constant 6 : index
    %145 = vector.load %arg6[%c0_59, %c6] : memref<128x128xf32, #tpu.memory_space<vmem>>, vector<128x1xf32>
    tpu.vector_store %arg6[%c0_59, %c6], %138 {strides = array<i32>} : memref<128x128xf32, #tpu.memory_space<vmem>>, vector<128x1xf32>,
    %146 = arith.fptosi %144 : vector<128x1xf32> to vector<128x1xi32>
    %c0_60 = arith.constant 0 : index
    %c6_61 = arith.constant 6 : index
    %147 = vector.load %arg7[%c0_60, %c6_61] : memref<128x128xi32, #tpu.memory_space<vmem>>, vector<128x1xi32>
    tpu.vector_store %arg7[%c0_60, %c6_61], %146 {strides = array<i32>} : memref<128x128xi32, #tpu.memory_space<vmem>>, vector<128x1xi32>,
    %148 = vector.broadcast %138 : vector<128x1xf32> to vector<128x256xf32>
    %149 = arith.cmpf oeq, %136, %148 : vector<128x256xf32>
    %150 = vector.broadcast %144 : vector<128x1xf32> to vector<128x256xf32>
    %151 = arith.cmpf oeq, %28, %150 : vector<128x256xf32>
    %152 = arith.andi %149, %151 : vector<128x256xi1>
    %cst_62 = arith.constant 0xFF800000 : f32
    %153 = vector.broadcast %cst_62 : f32 to vector<128x256xf32>
    %154 = arith.select %152, %153, %136 : vector<128x256xi1>, vector<128x256xf32>
    %cst_63 = arith.constant dense<0xFF800000> : vector<128xf32>
    %155 = vector.multi_reduction <maximumf>, %154, %cst_63 [1] : vector<128x256xf32> to vector<128xf32>
    %156 = vector.shape_cast %155 : vector<128xf32> to vector<128x1xf32>
    %157 = vector.broadcast %156 : vector<128x1xf32> to vector<128x256xf32>
    %158 = arith.cmpf oeq, %154, %157 : vector<128x256xf32>
    %cst_64 = arith.constant 3.000000e+38 : f32
    %159 = vector.broadcast %cst_64 : f32 to vector<128x256xf32>
    %160 = arith.select %158, %28, %159 : vector<128x256xi1>, vector<128x256xf32>
    %cst_65 = arith.constant dense<0x7F800000> : vector<128xf32>
    %161 = vector.multi_reduction <minimumf>, %160, %cst_65 [1] : vector<128x256xf32> to vector<128xf32>
    %162 = vector.shape_cast %161 : vector<128xf32> to vector<128x1xf32>
    %c0_66 = arith.constant 0 : index
    %c7 = arith.constant 7 : index
    %163 = vector.load %arg6[%c0_66, %c7] : memref<128x128xf32, #tpu.memory_space<vmem>>, vector<128x1xf32>
    tpu.vector_store %arg6[%c0_66, %c7], %156 {strides = array<i32>} : memref<128x128xf32, #tpu.memory_space<vmem>>, vector<128x1xf32>,
    %164 = arith.fptosi %162 : vector<128x1xf32> to vector<128x1xi32>
    %c0_67 = arith.constant 0 : index
    %c7_68 = arith.constant 7 : index
    %165 = vector.load %arg7[%c0_67, %c7_68] : memref<128x128xi32, #tpu.memory_space<vmem>>, vector<128x1xi32>
    tpu.vector_store %arg7[%c0_67, %c7_68], %164 {strides = array<i32>} : memref<128x128xi32, #tpu.memory_space<vmem>>, vector<128x1xi32>,
    %c0_i32_69 = arith.constant 0 : i32
    %166 = arith.cmpi eq, %arg2, %c0_i32_69 : i32
    %167 = arith.extui %166 : i1 to i32
    %c0_i32_70 = arith.constant 0 : i32
    %168 = arith.cmpi ne, %167, %c0_i32_70 : i32
    scf.if %168 {
      %c0_71 = arith.constant 0 : index
      %c0_72 = arith.constant 0 : index
      %169 = vector.load %arg7[%c0_71, %c0_72] : memref<128x128xi32, #tpu.memory_space<vmem>>, vector<128x8xi32>
      %c0_73 = arith.constant 0 : index
      %c0_74 = arith.constant 0 : index
      %c0_75 = arith.constant 0 : index
      %170 = vector.load %arg5[%c0_73, %c0_74, %c0_75] : memref<1x128x8xi32, #tpu.memory_space<vmem>>, vector<1x128x8xi32>
      %171 = vector.shape_cast %170 : vector<1x128x8xi32> to vector<128x8xi32>
      %172 = vector.shape_cast %169 : vector<128x8xi32> to vector<1x128x8xi32>
      tpu.vector_store %arg5[%c0_73, %c0_74, %c0_75], %172 {strides = array<i32>} : memref<1x128x8xi32, #tpu.memory_space<vmem>>, vector<1x128x8xi32>,
    } else {
    }
    return
  }
  func.func @transform_0(%arg0: i32, %arg1: i32, %arg2: i32) -> (i32, i32, i32) {
    %c0_i32 = arith.constant 0 : i32
    %c0_i32_0 = arith.constant 0 : i32
    return %arg0, %c0_i32, %arg2 : i32, i32, i32
  }
  func.func @transform_1(%arg0: i32, %arg1: i32, %arg2: i32) -> (i32, i32, i32) {
    %c0_i32 = arith.constant 0 : i32
    %c0_i32_0 = arith.constant 0 : i32
    return %arg0, %c0_i32, %arg1 : i32, i32, i32
  }
  func.func @transform_2(%arg0: i32, %arg1: i32, %arg2: i32) -> (i32, i32, i32) {
    %c0_i32 = arith.constant 0 : i32
    %c0_i32_0 = arith.constant 0 : i32
    return %arg0, %arg1, %c0_i32 : i32, i32, i32
  }
}

</mosaic_0001>

<llo_original>
// kernel: tpu_custom_call.1
$region0: #{tpu_custom_call.1}
  #allocation0 [shape = 'u32[]', space=smem, size = 0x4, offset = 0x4, fixed_abs, tag = 'smem constant byte address 0x4 - core index']
  #allocation1 [shape = 'u32[144,128]{1,0:T(1,128)}', space=vmem, size = 0x12000, scoped, tag = 'internal scratch']
  #allocation2 [shape = 'f32[128,128]{1,0:T(8,128)}', space=vmem, size = 0x10000, scoped, tag = 'scratch operand']
  #allocation3 [shape = 's32[128,128]{1,0:T(8,128)}', space=vmem, size = 0x10000, scoped, tag = 'scratch operand']
  %s0 = inlined_call_operand.vmem [shape: f32[2,3,128], index: 0, kind: input, shape index: {}]
  %s1 = inlined_call_operand.vmem [shape: f32[2,3,128], index: 1, kind: input, shape index: {}]
  %s2 = inlined_call_operand.vmem [shape: s32[2,128,8], index: 2, kind: output, shape index: {}]
  %s3 = sld [smem:[#allocation0]]
  $region49: #{tpu_custom_call.1} parent=0
    _
  %s5 = ssub.s32 1, %s3
  %s6 = scalar_select 0, %s5, %s3
  loop: start=0, step=1, limit=4
  $region2: #{tpu_custom_call.1} parent=0 // loop_pre_header
    _
  $region3: #{tpu_custom_call.1} parent=0 // loop_header
    %s8 = sphi 0, %s12
    %p9 = scmp.ge.s32.totalorder %s8, 4
    %s15 = sphi 0, %s34
    %s16 = sphi 0, %s30
    %s17 = sphi 0, %s26
    %s18 = sphi 0, %s15
    %s19 = sphi 0, %s16
    %s20 = sphi 0, %s17
    %s21 = sphi 0, %s18
    %s22 = sphi 0, %s19
    %s23 = sphi 0, %s20
    %s39 = sphi 0, %s41
    %s42 = sphi 0, %s39
    %s43 = sphi 0, %s42
    %s59 = sphi 0, %s43
    %s67 = sphi 0, %s69
    %s70 = sphi 0, %s67
    %s71 = sphi 0, %s70
    %s87 = sphi 0, %s71
    %s95 = sphi 0, %s97
    %s98 = sphi 0, %s95
    %s99 = sphi 0, %s98
    %s115 = sphi 0, %s99
  $region4: #{tpu_custom_call.1} parent=0 // loop_header_branch
    %11 = sbr.rel (%p9) target = $region8
  $region5: #{tpu_custom_call.1} parent=0 // loop_body
    %s13 = ssub.s32 %s8, 1
    %s14 = ssub.s32 %s8, 2
    %s24 = sadd.s32 1, %s17
    %p25 = scmp.ge.s32.totalorder %s24, 1
    %s26 = scalar_select %p25, 0, %s24
    %s27 = sadd.s32 1, %s16
    %s28 = scalar_select %p25, %s27, %s16
    %p29 = scmp.ge.s32.totalorder %s28, 1
    %s30 = scalar_select %p29, 0, %s28
    %s31 = sadd.s32 1, %s15
    %s32 = scalar_select %p29, %s31, %s15
    %p33 = scmp.ge.s32.totalorder %s32, 2
    %s34 = scalar_select %p33, 0, %s32
    %s35 = ssub.s32 %s15, %s34
    %s36 = ssub.s32 %s17, %s26
    %s37 = sor.u32 %s35, %s36
    %p38 = scmp.eq.s32.totalorder %s37, 0
    %s40 = sadd.s32 %s39, 1
    %s41 = scalar_select %p38, %s39, %s40
    %p44 = pneg %p38
    %p45 = scmp.eq.s32.totalorder %s8, 1
    %p46 = por %p44, %p45
    %p47 = scmp.ne.s32.totalorder %s39, %s42
    %p48 = scmp.eq.s32.totalorder %s8, 0
    %p49 = por %p47, %p48
    %p50 = scmp.ne.s32.totalorder %s39, %s42
    %p51 = scmp.eq.s32.totalorder %s13, 1
    %p52 = por %p50, %p51
    %p53 = scmp.ne.s32.totalorder %s42, %s43
    %p54 = scmp.eq.s32.totalorder %s13, 0
    %p55 = por %p53, %p54
    %p56 = scmp.ne.s32.totalorder %s42, %s43
    %p57 = scmp.eq.s32.totalorder %s14, 1
    %p58 = por %p56, %p57
    %p60 = scmp.ne.s32.totalorder %s43, %s59
    %p61 = scmp.eq.s32.totalorder %s14, 0
    %p62 = por %p60, %p61
    %s63 = ssub.s32 %s15, %s34
    %s64 = ssub.s32 %s16, %s30
    %s65 = sor.u32 %s63, %s64
    %p66 = scmp.eq.s32.totalorder %s65, 0
    %s68 = sadd.s32 %s67, 1
    %s69 = scalar_select %p66, %s67, %s68
    %p72 = pneg %p66
    %p73 = scmp.eq.s32.totalorder %s8, 1
    %p74 = por %p72, %p73
    %p75 = scmp.ne.s32.totalorder %s67, %s70
    %p76 = scmp.eq.s32.totalorder %s8, 0
    %p77 = por %p75, %p76
    %p78 = scmp.ne.s32.totalorder %s67, %s70
    %p79 = scmp.eq.s32.totalorder %s13, 1
    %p80 = por %p78, %p79
    %p81 = scmp.ne.s32.totalorder %s70, %s71
    %p82 = scmp.eq.s32.totalorder %s13, 0
    %p83 = por %p81, %p82
    %p84 = scmp.ne.s32.totalorder %s70, %s71
    %p85 = scmp.eq.s32.totalorder %s14, 1
    %p86 = por %p84, %p85
    %p88 = scmp.ne.s32.totalorder %s71, %s87
    %p89 = scmp.eq.s32.totalorder %s14, 0
    %p90 = por %p88, %p89
    %s91 = ssub.s32 %s15, %s34
    %s92 = ssub.s32 %s16, %s30
    %s93 = sor.u32 %s91, %s92
    %p94 = scmp.eq.s32.totalorder %s93, 0
    %s96 = sadd.s32 %s95, 1
    %s97 = scalar_select %p94, %s95, %s96
    %p100 = pneg %p94
    %p101 = scmp.eq.s32.totalorder %s8, 1
    %p102 = por %p100, %p101
    %p103 = scmp.ne.s32.totalorder %s95, %s98
    %p104 = scmp.eq.s32.totalorder %s8, 0
    %p105 = por %p103, %p104
    %p106 = scmp.ne.s32.totalorder %s95, %s98
    %p107 = scmp.eq.s32.totalorder %s13, 1
    %p108 = por %p106, %p107
    %p109 = scmp.ne.s32.totalorder %s98, %s99
    %p110 = scmp.eq.s32.totalorder %s13, 0
    %p111 = por %p109, %p110
    %p112 = scmp.ne.s32.totalorder %s98, %s99
    %p113 = scmp.eq.s32.totalorder %s14, 1
    %p114 = por %p112, %p113
    %p116 = scmp.ne.s32.totalorder %s99, %s115
    %p117 = scmp.eq.s32.totalorder %s14, 0
    %p118 = por %p116, %p117
    %p119 = scmp.le.s32.totalorder 1, %s8
    %p120 = scmp.lt.s32.totalorder %s8, 3
    %p121 = pnand %p119, %p120
    %p122 = pneg %p121
    // Predicated region
    $region9: #{tpu_custom_call.1} parent=5 // pred_check
      _
    $region10: #{tpu_custom_call.1} parent=5 // pred_check_branch
      %124 = sbr.rel (%p121) target = $region12
    $region11: #{tpu_custom_call.1} parent=5 // pred_region
      %s125 = ssub.s32 %s8, 1
    $region12: #{tpu_custom_call.1} parent=5 // pred_fallthru
      _
    %p126 = scmp.lt.s32.totalorder %s8, 2
    // Predicated region
    $region13: #{tpu_custom_call.1} parent=5 // pred_check
      %p127 = pneg %p126
    $region14: #{tpu_custom_call.1} parent=5 // pred_check_branch
      %129 = sbr.rel (%p127) target = $region16
    $region15: #{tpu_custom_call.1} parent=5 // pred_region
      // Predicated region
      $region17: #{tpu_custom_call.1} parent=15 // pred_check
        %p130 = pneg %p49
      $region18: #{tpu_custom_call.1} parent=15 // pred_check_branch
        %132 = sbr.rel (%p130) target = $region20
      $region19: #{tpu_custom_call.1} parent=15 // pred_region
        %p133 = scmp.lt.s32.totalorder %s15, 1
        %s134 = scalar_select %p133, %s15, 1
        %p135 = scmp.lt.s32.totalorder %s17, 0
        %s136 = scalar_select %p135, %s17, 0
        %s137 = sadd.s32 %s136, %s134
        %s138 = smul.addr %s137, 4
        %s139 = scalar_lea.vmem %s0, %s138
      $region20: #{tpu_custom_call.1} parent=15 // pred_fallthru
        _
      // Predicated region
      $region21: #{tpu_custom_call.1} parent=15 // pred_check
        %p140 = pneg %p77
      $region22: #{tpu_custom_call.1} parent=15 // pred_check_branch
        %142 = sbr.rel (%p140) target = $region24
      $region23: #{tpu_custom_call.1} parent=15 // pred_region
        %p143 = scmp.lt.s32.totalorder %s15, 1
        %s144 = scalar_select %p143, %s15, 1
        %p145 = scmp.lt.s32.totalorder %s16, 0
        %s146 = scalar_select %p145, %s16, 0
        %s147 = sadd.s32 %s146, %s144
        %s148 = smul.addr %s147, 4
        %s149 = scalar_lea.vmem %s1, %s148
      $region24: #{tpu_custom_call.1} parent=15 // pred_fallthru
        _
    $region16: #{tpu_custom_call.1} parent=5 // pred_fallthru
      _
    %p150 = scmp.le.s32.totalorder 1, %s8
    %p151 = scmp.lt.s32.totalorder %s8, 3
    %p152 = pnand %p150, %p151
    %p153 = pneg %p152
    // Predicated region
    $region25: #{tpu_custom_call.1} parent=5 // pred_check
      _
    $region26: #{tpu_custom_call.1} parent=5 // pred_check_branch
      %155 = sbr.rel (%p152) target = $region28
    $region27: #{tpu_custom_call.1} parent=5 // pred_region
      %s156 = ssub.s32 %s8, 1
      %p157 = scmp.lt.s32.totalorder %s18, 1
      %s158 = scalar_select %p157, %s18, 1
      %p159 = scmp.lt.s32.totalorder %s20, 0
      %s160 = scalar_select %p159, %s20, 0
      %s161 = sadd.s32 %s160, %s158
      %s162 = smul.addr %s161, 4
      %s163 = scalar_lea.vmem %s0, %s162
      %p164 = pneg %p55
      %p165 = pneg %p52
      %p166 = scmp.lt.s32.totalorder %s18, 1
      %s167 = scalar_select %p166, %s18, 1
      %p168 = scmp.lt.s32.totalorder %s19, 0
      %s169 = scalar_select %p168, %s19, 0
      %s170 = sadd.s32 %s169, %s167
      %s171 = smul.addr %s170, 4
      %s172 = scalar_lea.vmem %s1, %s171
      %p173 = pneg %p83
      %p174 = pneg %p80
      %p175 = pneg %p111
      %p176 = pneg %p108
      %s177 = smul.u32 16, %s19
      %p178 = scmp.lt.s32.totalorder %s18, 1
      %s179 = scalar_select %p178, %s18, 1
      %p180 = scmp.lt.s32.totalorder %s177, 15
      %s181 = scalar_select %p180, %s177, 15
      %s182 = smul.addr %s179, 16
      %s183 = sadd.s32 %s181, %s182
      %s184 = smul.addr %s183, 8
      %s185 = scalar_lea.vmem %s2, %s184
      %p186 = scmp.lt.s32.totalorder %s18, 1
      %s187 = scalar_select %p186, %s18, 1
      %p188 = scmp.lt.s32.totalorder %s20, 0
      %s189 = scalar_select %p188, %s20, 0
      %s190 = sadd.s32 %s189, %s187
      %s191 = smul.addr %s190, 4
      %s192 = scalar_lea.vmem %s0, %s191
      %p193 = scmp.lt.s32.totalorder %s18, 1
      %s194 = scalar_select %p193, %s18, 1
      %p195 = scmp.lt.s32.totalorder %s19, 0
      %s196 = scalar_select %p195, %s19, 0
      %s197 = sadd.s32 %s196, %s194
      %s198 = smul.addr %s197, 4
      %s199 = scalar_lea.vmem %s1, %s198
      %s200 = smul.u32 16, %s19
      %p201 = scmp.lt.s32.totalorder %s18, 1
      %s202 = scalar_select %p201, %s18, 1
      %p203 = scmp.lt.s32.totalorder %s200, 15
      %s204 = scalar_select %p203, %s200, 15
      %s205 = smul.addr %s202, 16
      %s206 = sadd.s32 %s204, %s205
      %s207 = smul.addr %s206, 8
      %s208 = scalar_lea.vmem %s2, %s207
      %s209 = smul.u32 16, %s19
      %p210 = scmp.eq.s32.totalorder %s20, 0
      // Predicated region
      $region29: #{tpu_custom_call.1} parent=27 // pred_check
        %p211 = pneg %p210
      $region30: #{tpu_custom_call.1} parent=27 // pred_check_branch
        %213 = sbr.rel (%p211) target = $region32
      $region31: #{tpu_custom_call.1} parent=27 // pred_region
        %214 = vst [vmem:[#allocation2] sm:$0xff] -inf
        %215 = vst [vmem:[#allocation2 + $0x8] sm:$0xff] -inf
        %216 = vst [vmem:[#allocation2 + $0x10] sm:$0xff] -inf
        %217 = vst [vmem:[#allocation2 + $0x18] sm:$0xff] -inf
        %218 = vst [vmem:[#allocation2 + $0x20] sm:$0xff] -inf
        %219 = vst [vmem:[#allocation2 + $0x28] sm:$0xff] -inf
        %220 = vst [vmem:[#allocation2 + $0x30] sm:$0xff] -inf
        %221 = vst [vmem:[#allocation2 + $0x38] sm:$0xff] -inf
        %222 = vst [vmem:[#allocation2 + $0x40] sm:$0xff] -inf
        %223 = vst [vmem:[#allocation2 + $0x48] sm:$0xff] -inf
        %224 = vst [vmem:[#allocation2 + $0x50] sm:$0xff] -inf
        %225 = vst [vmem:[#allocation2 + $0x58] sm:$0xff] -inf
        %226 = vst [vmem:[#allocation2 + $0x60] sm:$0xff] -inf
        %227 = vst [vmem:[#allocation2 + $0x68] sm:$0xff] -inf
        %228 = vst [vmem:[#allocation2 + $0x70] sm:$0xff] -inf
        %229 = vst [vmem:[#allocation2 + $0x78] sm:$0xff] -inf
        %230 = vst [vmem:[#allocation3] sm:$0xff] 0
        %231 = vst [vmem:[#allocation3 + $0x8] sm:$0xff] 0
        %232 = vst [vmem:[#allocation3 + $0x10] sm:$0xff] 0
        %233 = vst [vmem:[#allocation3 + $0x18] sm:$0xff] 0
        %234 = vst [vmem:[#allocation3 + $0x20] sm:$0xff] 0
        %235 = vst [vmem:[#allocation3 + $0x28] sm:$0xff] 0
        %236 = vst [vmem:[#allocation3 + $0x30] sm:$0xff] 0
        %237 = vst [vmem:[#allocation3 + $0x38] sm:$0xff] 0
        %238 = vst [vmem:[#allocation3 + $0x40] sm:$0xff] 0
        %239 = vst [vmem:[#allocation3 + $0x48] sm:$0xff] 0
        %240 = vst [vmem:[#allocation3 + $0x50] sm:$0xff] 0
        %241 = vst [vmem:[#allocation3 + $0x58] sm:$0xff] 0
        %242 = vst [vmem:[#allocation3 + $0x60] sm:$0xff] 0
        %243 = vst [vmem:[#allocation3 + $0x68] sm:$0xff] 0
        %244 = vst [vmem:[#allocation3 + $0x70] sm:$0xff] 0
        %245 = vst [vmem:[#allocation3 + $0x78] sm:$0xff] 0
      $region32: #{tpu_custom_call.1} parent=27 // pred_fallthru
        _
      %v246 = vld [vmem:[%s192] sm:$0x7]
      %v247 = vld [vmem:[%s199] sm:$0x7]
      %248 = vxpose.xlu0.b32.start [1/16] %v247, 128
      %249 = vxpose.xlu0.b32.cont [2/16] 0.0, 128
      %250 = vxpose.xlu0.b32.cont [3/16] 0.0, 128
      %251 = vxpose.xlu0.b32.cont [4/16] 0.0, 128
      %252 = vxpose.xlu0.b32.cont [5/16] 0.0, 128
      %253 = vxpose.xlu0.b32.cont [6/16] 0.0, 128
      %254 = vxpose.xlu0.b32.cont [7/16] 0.0, 128
      %255 = vxpose.xlu0.b32.cont [8/16] 0.0, 128
      %256 = vxpose.xlu0.b32.cont [9/16] 0.0, 128
      %257 = vxpose.xlu0.b32.cont [10/16] 0.0, 128
      %258 = vxpose.xlu0.b32.cont [11/16] 0.0, 128
      %259 = vxpose.xlu0.b32.cont [12/16] 0.0, 128
      %260 = vxpose.xlu0.b32.cont [13/16] 0.0, 128
      %261 = vxpose.xlu0.b32.cont [14/16] 0.0, 128
      %262 = vxpose.xlu0.b32.cont [15/16] 0.0, 128
      %263 = vxpose.xlu0.b32.end [16/16] 0.0, 128
      %v264 = vpop.trf.xlu0
      %v265 = vpop.trf.xlu0
      %v266 = vpop.trf.xlu0
      %v267 = vpop.trf.xlu0
      %v268 = vpop.trf.xlu0
      %v269 = vpop.trf.xlu0
      %v270 = vpop.trf.xlu0
      %v271 = vpop.trf.xlu0
      %v272 = vpop.trf.xlu0
      %v273 = vpop.trf.xlu0
      %v274 = vpop.trf.xlu0
      %v275 = vpop.trf.xlu0
      %v276 = vpop.trf.xlu0
      %v277 = vpop.trf.xlu0
      %v278 = vpop.trf.xlu0
      %v279 = vpop.trf.xlu0
      %vm280 = vcmask 23552
      %v282 = vsel %vm280, %v264, 0
      %v285 = vsel %vm280, %v265, 0
      %v288 = vsel %vm280, %v266, 0
      %v291 = vsel %vm280, %v267, 0
      %v294 = vsel %vm280, %v268, 0
      %v297 = vsel %vm280, %v269, 0
      %v300 = vsel %vm280, %v270, 0
      %v303 = vsel %vm280, %v271, 0
      %v306 = vsel %vm280, %v272, 0
      %v309 = vsel %vm280, %v273, 0
      %v312 = vsel %vm280, %v274, 0
      %v315 = vsel %vm280, %v275, 0
      %v318 = vsel %vm280, %v276, 0
      %v321 = vsel %vm280, %v277, 0
      %v324 = vsel %vm280, %v278, 0
      %v327 = vsel %vm280, %v279, 0
      %vm329 = vcmask 1042432
      %v331 = vsel %vm329, %v246, 0
      %333 = vmatprep.subr.mxu0 0.0
      %334 = vmatpush1.msra.mxu0 0.0
      %335 = vmatprep.subr.mxu0 0.0
      %336 = vmatpush1.msra.mxu0 0.0
      %337 = vmatprep.subr.mxu0 0.0
      %338 = vmatpush1.msra.mxu0 0.0
      %339 = vmatprep.subr.mxu0 0.0
      %340 = vmatpush1.msra.mxu0 0.0
      %341 = vmatprep.subr.mxu0 0.0
      %342 = vmatpush1.msra.mxu0 0.0
      %343 = vmatprep.subr.mxu0 0.0
      %344 = vmatpush1.msra.mxu0 0.0
      %345 = vmatprep.subr.mxu0 0.0
      %346 = vmatpush1.msra.mxu0 0.0
      %347 = vmatprep.subr.mxu0 0.0
      %348 = vmatpush1.msra.mxu0 0.0
      %349 = vmatprep.subr.mxu0 0.0
      %350 = vmatpush1.msra.mxu0 0.0
      %351 = vmatprep.subr.mxu0 0.0
      %352 = vmatpush1.msra.mxu0 0.0
      %353 = vmatprep.subr.mxu0 0.0
      %354 = vmatpush1.msra.mxu0 0.0
      %355 = vmatprep.subr.mxu0 0.0
      %356 = vmatpush1.msra.mxu0 0.0
      %357 = vmatprep.subr.mxu0 0.0
      %358 = vmatpush1.msra.mxu0 0.0
      %359 = vmatprep.subr.mxu0 0.0
      %360 = vmatpush1.msra.mxu0 0.0
      %361 = vmatprep.subr.mxu0 0.0
      %362 = vmatpush1.msra.mxu0 0.0
      %363 = vmatprep.subr.mxu0 0.0
      %364 = vmatpush1.msra.mxu0 %v331
      %365 = vmatprep.subr.mxu0 0.0
      %366 = vmatpush2.msra.mxu0 0.0
      %367 = vmatprep.subr.mxu0 0.0
      %368 = vmatpush2.msra.mxu0 0.0
      %369 = vmatprep.subr.mxu0 0.0
      %370 = vmatpush2.msra.mxu0 0.0
      %371 = vmatprep.subr.mxu0 0.0
      %372 = vmatpush2.msra.mxu0 0.0
      %373 = vmatprep.subr.mxu0 0.0
      %374 = vmatpush2.msra.mxu0 0.0
      %375 = vmatprep.subr.mxu0 0.0
      %376 = vmatpush2.msra.mxu0 0.0
      %377 = vmatprep.subr.mxu0 0.0
      %378 = vmatpush2.msra.mxu0 0.0
      %379 = vmatprep.subr.mxu0 0.0
      %380 = vmatpush2.msra.mxu0 0.0
      %381 = vmatprep.subr.mxu0 0.0
      %382 = vmatpush2.msra.mxu0 0.0
      %383 = vmatprep.subr.mxu0 0.0
      %384 = vmatpush2.msra.mxu0 0.0
      %385 = vmatprep.subr.mxu0 0.0
      %386 = vmatpush2.msra.mxu0 0.0
      %387 = vmatprep.subr.mxu0 0.0
      %388 = vmatpush2.msra.mxu0 0.0
      %389 = vmatprep.subr.mxu0 0.0
      %390 = vmatpush2.msra.mxu0 0.0
      %391 = vmatprep.subr.mxu0 0.0
      %392 = vmatpush2.msra.mxu0 0.0
      %393 = vmatprep.subr.mxu0 0.0
      %394 = vmatpush2.msra.mxu0 0.0
      %395 = vmatprep.subr.mxu0 0.0
      %396 = vmatpush2.msra.mxu0 0.0
      %397 = vmatprep.mubr.f32.mxu0 0.0
      %398 = vmatmul.mubr.f32.gmra.mxu0 %v282
      %v399 = vpop.f32.mrf.mxu0
      %v400 = vadd.f32 0.0, %v399
      %v401 = vpop.f32.mrf.mxu0
      %402 = vmatprep.mubr.f32.mxu0 0.0
      %403 = vmatmul.mubr.f32.gmra.mxu0 %v285
      %v404 = vpop.f32.mrf.mxu0
      %v405 = vadd.f32 0.0, %v404
      %v406 = vpop.f32.mrf.mxu0
      %407 = vmatprep.mubr.f32.mxu0 0.0
      %408 = vmatmul.mubr.f32.gmra.mxu0 %v288
      %v409 = vpop.f32.mrf.mxu0
      %v410 = vadd.f32 0.0, %v409
      %v411 = vpop.f32.mrf.mxu0
      %412 = vmatprep.mubr.f32.mxu0 0.0
      %413 = vmatmul.mubr.f32.gmra.mxu0 %v291
      %v414 = vpop.f32.mrf.mxu0
      %v415 = vadd.f32 0.0, %v414
      %v416 = vpop.f32.mrf.mxu0
      %417 = vmatprep.mubr.f32.mxu0 0.0
      %418 = vmatmul.mubr.f32.gmra.mxu0 %v294
      %v419 = vpop.f32.mrf.mxu0
      %v420 = vadd.f32 0.0, %v419
      %v421 = vpop.f32.mrf.mxu0
      %422 = vmatprep.mubr.f32.mxu0 0.0
      %423 = vmatmul.mubr.f32.gmra.mxu0 %v297
      %v424 = vpop.f32.mrf.mxu0
      %v425 = vadd.f32 0.0, %v424
      %v426 = vpop.f32.mrf.mxu0
      %427 = vmatprep.mubr.f32.mxu0 0.0
      %428 = vmatmul.mubr.f32.gmra.mxu0 %v300
      %v429 = vpop.f32.mrf.mxu0
      %v430 = vadd.f32 0.0, %v429
      %v431 = vpop.f32.mrf.mxu0
      %432 = vmatprep.mubr.f32.mxu0 0.0
      %433 = vmatmul.mubr.f32.gmra.mxu0 %v303
      %v434 = vpop.f32.mrf.mxu0
      %v435 = vadd.f32 0.0, %v434
      %v436 = vpop.f32.mrf.mxu0
      %437 = vmatprep.mubr.f32.mxu0 0.0
      %438 = vmatmul.mubr.f32.gmra.mxu0 %v306
      %v439 = vpop.f32.mrf.mxu0
      %v440 = vadd.f32 0.0, %v439
      %v441 = vpop.f32.mrf.mxu0
      %442 = vmatprep.mubr.f32.mxu0 0.0
      %443 = vmatmul.mubr.f32.gmra.mxu0 %v309
      %v444 = vpop.f32.mrf.mxu0
      %v445 = vadd.f32 0.0, %v444
      %v446 = vpop.f32.mrf.mxu0
      %447 = vmatprep.mubr.f32.mxu0 0.0
      %448 = vmatmul.mubr.f32.gmra.mxu0 %v312
      %v449 = vpop.f32.mrf.mxu0
      %v450 = vadd.f32 0.0, %v449
      %v451 = vpop.f32.mrf.mxu0
      %452 = vmatprep.mubr.f32.mxu0 0.0
      %453 = vmatmul.mubr.f32.gmra.mxu0 %v315
      %v454 = vpop.f32.mrf.mxu0
      %v455 = vadd.f32 0.0, %v454
      %v456 = vpop.f32.mrf.mxu0
      %457 = vmatprep.mubr.f32.mxu0 0.0
      %458 = vmatmul.mubr.f32.gmra.mxu0 %v318
      %v459 = vpop.f32.mrf.mxu0
      %v460 = vadd.f32 0.0, %v459
      %v461 = vpop.f32.mrf.mxu0
      %462 = vmatprep.mubr.f32.mxu0 0.0
      %463 = vmatmul.mubr.f32.gmra.mxu0 %v321
      %v464 = vpop.f32.mrf.mxu0
      %v465 = vadd.f32 0.0, %v464
      %v466 = vpop.f32.mrf.mxu0
      %467 = vmatprep.mubr.f32.mxu0 0.0
      %468 = vmatmul.mubr.f32.gmra.mxu0 %v324
      %v469 = vpop.f32.mrf.mxu0
      %v470 = vadd.f32 0.0, %v469
      %v471 = vpop.f32.mrf.mxu0
      %472 = vmatprep.mubr.f32.mxu0 0.0
      %473 = vmatmul.mubr.f32.gmra.mxu0 %v327
      %v474 = vpop.f32.mrf.mxu0
      %v475 = vadd.f32 0.0, %v474
      %v476 = vpop.f32.mrf.mxu0
      %477 = vdwg.mxu0
      %v478 = vmul.f32 %v246, %v246
      %v479 = vsel %vm329, %v478, 0.0
      %v480 = vrot.slane %v479, 4
      %v481 = vadd.f32 %v479, %v480
      %v482 = vrot.slane %v481, 2
      %v483 = vadd.f32 %v481, %v482
      %v484 = vrot.slane %v483, 1
      %v485 = vadd.f32 %v483, %v484
      %v486 = vmul.f32 %v400, 2.0
      %v487 = vmul.f32 %v405, 2.0
      %v488 = vmul.f32 %v410, 2.0
      %v489 = vmul.f32 %v415, 2.0
      %v490 = vmul.f32 %v420, 2.0
      %v491 = vmul.f32 %v425, 2.0
      %v492 = vmul.f32 %v430, 2.0
      %v493 = vmul.f32 %v435, 2.0
      %v494 = vmul.f32 %v440, 2.0
      %v495 = vmul.f32 %v445, 2.0
      %v496 = vmul.f32 %v450, 2.0
      %v497 = vmul.f32 %v455, 2.0
      %v498 = vmul.f32 %v460, 2.0
      %v499 = vmul.f32 %v465, 2.0
      %v500 = vmul.f32 %v470, 2.0
      %v501 = vmul.f32 %v475, 2.0
      %v502 = vsub.f32 %v486, %v485
      %v503 = vsub.f32 %v487, %v485
      %v504 = vsub.f32 %v488, %v485
      %v505 = vsub.f32 %v489, %v485
      %v506 = vsub.f32 %v490, %v485
      %v507 = vsub.f32 %v491, %v485
      %v508 = vsub.f32 %v492, %v485
      %v509 = vsub.f32 %v493, %v485
      %v510 = vsub.f32 %v494, %v485
      %v511 = vsub.f32 %v495, %v485
      %v512 = vsub.f32 %v496, %v485
      %v513 = vsub.f32 %v497, %v485
      %v514 = vsub.f32 %v498, %v485
      %v515 = vsub.f32 %v499, %v485
      %v516 = vsub.f32 %v500, %v485
      %v517 = vsub.f32 %v501, %v485
      %s518 = smul.u32 %s20, 128
      %v519 = vlaneseq
      %v520 = vand.u32 %v519, 127
      %v521 = vstv %s518
      %v522 = vadd.s32 %v521, %v520
      %vm523 = vcmp.lt.s32.totalorder %v522, 16
      %v524 = vsel %vm523, %v502, -inf
      %v525 = vsel %vm523, %v503, -inf
      %v526 = vsel %vm523, %v504, -inf
      %v527 = vsel %vm523, %v505, -inf
      %v528 = vsel %vm523, %v506, -inf
      %v529 = vsel %vm523, %v507, -inf
      %v530 = vsel %vm523, %v508, -inf
      %v531 = vsel %vm523, %v509, -inf
      %v532 = vsel %vm523, %v510, -inf
      %v533 = vsel %vm523, %v511, -inf
      %v534 = vsel %vm523, %v512, -inf
      %v535 = vsel %vm523, %v513, -inf
      %v536 = vsel %vm523, %v514, -inf
      %v537 = vsel %vm523, %v515, -inf
      %v538 = vsel %vm523, %v516, -inf
      %v539 = vsel %vm523, %v517, -inf
      %v540 = vld [vmem:[#allocation2] sm:$0xff]
      %v541 = vld [vmem:[#allocation2 + $0x8] sm:$0xff]
      %v542 = vld [vmem:[#allocation2 + $0x10] sm:$0xff]
      %v543 = vld [vmem:[#allocation2 + $0x18] sm:$0xff]
      %v544 = vld [vmem:[#allocation2 + $0x20] sm:$0xff]
      %v545 = vld [vmem:[#allocation2 + $0x28] sm:$0xff]
      %v546 = vld [vmem:[#allocation2 + $0x30] sm:$0xff]
      %v547 = vld [vmem:[#allocation2 + $0x38] sm:$0xff]
      %v548 = vld [vmem:[#allocation2 + $0x40] sm:$0xff]
      %v549 = vld [vmem:[#allocation2 + $0x48] sm:$0xff]
      %v550 = vld [vmem:[#allocation2 + $0x50] sm:$0xff]
      %v551 = vld [vmem:[#allocation2 + $0x58] sm:$0xff]
      %v552 = vld [vmem:[#allocation2 + $0x60] sm:$0xff]
      %v553 = vld [vmem:[#allocation2 + $0x68] sm:$0xff]
      %v554 = vld [vmem:[#allocation2 + $0x70] sm:$0xff]
      %v555 = vld [vmem:[#allocation2 + $0x78] sm:$0xff]
      %v556 = vld [vmem:[#allocation3] sm:$0xff]
      %v557 = vld [vmem:[#allocation3 + $0x8] sm:$0xff]
      %v558 = vld [vmem:[#allocation3 + $0x10] sm:$0xff]
      %v559 = vld [vmem:[#allocation3 + $0x18] sm:$0xff]
      %v560 = vld [vmem:[#allocation3 + $0x20] sm:$0xff]
      %v561 = vld [vmem:[#allocation3 + $0x28] sm:$0xff]
      %v562 = vld [vmem:[#allocation3 + $0x30] sm:$0xff]
      %v563 = vld [vmem:[#allocation3 + $0x38] sm:$0xff]
      %v564 = vld [vmem:[#allocation3 + $0x40] sm:$0xff]
      %v565 = vld [vmem:[#allocation3 + $0x48] sm:$0xff]
      %v566 = vld [vmem:[#allocation3 + $0x50] sm:$0xff]
      %v567 = vld [vmem:[#allocation3 + $0x58] sm:$0xff]
      %v568 = vld [vmem:[#allocation3 + $0x60] sm:$0xff]
      %v569 = vld [vmem:[#allocation3 + $0x68] sm:$0xff]
      %v570 = vld [vmem:[#allocation3 + $0x70] sm:$0xff]
      %v571 = vld [vmem:[#allocation3 + $0x78] sm:$0xff]
      %v572 = vcvt.s32.f32 %v556
      %v573 = vcvt.s32.f32 %v557
      %v574 = vcvt.s32.f32 %v558
      %v575 = vcvt.s32.f32 %v559
      %v576 = vcvt.s32.f32 %v560
      %v577 = vcvt.s32.f32 %v561
      %v578 = vcvt.s32.f32 %v562
      %v579 = vcvt.s32.f32 %v563
      %v580 = vcvt.s32.f32 %v564
      %v581 = vcvt.s32.f32 %v565
      %v582 = vcvt.s32.f32 %v566
      %v583 = vcvt.s32.f32 %v567
      %v584 = vcvt.s32.f32 %v568
      %v585 = vcvt.s32.f32 %v569
      %v586 = vcvt.s32.f32 %v570
      %v587 = vcvt.s32.f32 %v571
      %v588 = vcvt.s32.f32 %v522
      %v589 = vmax.f32 %v540, %v524
      %590 = vmax.xlane.f32.xlu0 %v589
      %v591 = vpop.xlane.xlu0 %590
      %v592 = vmax.f32 %v541, %v525
      %593 = vmax.xlane.f32.xlu0 %v592
      %v594 = vpop.xlane.xlu0 %593
      %v595 = vmax.f32 %v542, %v526
      %596 = vmax.xlane.f32.xlu0 %v595
      %v597 = vpop.xlane.xlu0 %596
      %v598 = vmax.f32 %v543, %v527
      %599 = vmax.xlane.f32.xlu0 %v598
      %v600 = vpop.xlane.xlu0 %599
      %v601 = vmax.f32 %v544, %v528
      %602 = vmax.xlane.f32.xlu0 %v601
      %v603 = vpop.xlane.xlu0 %602
      %v604 = vmax.f32 %v545, %v529
      %605 = vmax.xlane.f32.xlu0 %v604
      %v606 = vpop.xlane.xlu0 %605
      %v607 = vmax.f32 %v546, %v530
      %608 = vmax.xlane.f32.xlu0 %v607
      %v609 = vpop.xlane.xlu0 %608
      %v610 = vmax.f32 %v547, %v531
      %611 = vmax.xlane.f32.xlu0 %v610
      %v612 = vpop.xlane.xlu0 %611
      %v613 = vmax.f32 %v548, %v532
      %614 = vmax.xlane.f32.xlu0 %v613
      %v615 = vpop.xlane.xlu0 %614
      %v616 = vmax.f32 %v549, %v533
      %617 = vmax.xlane.f32.xlu0 %v616
      %v618 = vpop.xlane.xlu0 %617
      %v619 = vmax.f32 %v550, %v534
      %620 = vmax.xlane.f32.xlu0 %v619
      %v621 = vpop.xlane.xlu0 %620
      %v622 = vmax.f32 %v551, %v535
      %623 = vmax.xlane.f32.xlu0 %v622
      %v624 = vpop.xlane.xlu0 %623
      %v625 = vmax.f32 %v552, %v536
      %626 = vmax.xlane.f32.xlu0 %v625
      %v627 = vpop.xlane.xlu0 %626
      %v628 = vmax.f32 %v553, %v537
      %629 = vmax.xlane.f32.xlu0 %v628
      %v630 = vpop.xlane.xlu0 %629
      %v631 = vmax.f32 %v554, %v538
      %632 = vmax.xlane.f32.xlu0 %v631
      %v633 = vpop.xlane.xlu0 %632
      %v634 = vmax.f32 %v555, %v539
      %635 = vmax.xlane.f32.xlu0 %v634
      %v636 = vpop.xlane.xlu0 %635
      %vm637 = vcmp.eq.f32.partialorder %v540, %v591
      %vm638 = vcmp.eq.f32.partialorder %v524, %v591
      %vm639 = vcmp.eq.f32.partialorder %v541, %v594
      %vm640 = vcmp.eq.f32.partialorder %v525, %v594
      %vm641 = vcmp.eq.f32.partialorder %v542, %v597
      %vm642 = vcmp.eq.f32.partialorder %v526, %v597
      %vm643 = vcmp.eq.f32.partialorder %v543, %v600
      %vm644 = vcmp.eq.f32.partialorder %v527, %v600
      %vm645 = vcmp.eq.f32.partialorder %v544, %v603
      %vm646 = vcmp.eq.f32.partialorder %v528, %v603
      %vm647 = vcmp.eq.f32.partialorder %v545, %v606
      %vm648 = vcmp.eq.f32.partialorder %v529, %v606
      %vm649 = vcmp.eq.f32.partialorder %v546, %v609
      %vm650 = vcmp.eq.f32.partialorder %v530, %v609
      %vm651 = vcmp.eq.f32.partialorder %v547, %v612
      %vm652 = vcmp.eq.f32.partialorder %v531, %v612
      %vm653 = vcmp.eq.f32.partialorder %v548, %v615
      %vm654 = vcmp.eq.f32.partialorder %v532, %v615
      %vm655 = vcmp.eq.f32.partialorder %v549, %v618
      %vm656 = vcmp.eq.f32.partialorder %v533, %v618
      %vm657 = vcmp.eq.f32.partialorder %v550, %v621
      %vm658 = vcmp.eq.f32.partialorder %v534, %v621
      %vm659 = vcmp.eq.f32.partialorder %v551, %v624
      %vm660 = vcmp.eq.f32.partialorder %v535, %v624
      %vm661 = vcmp.eq.f32.partialorder %v552, %v627
      %vm662 = vcmp.eq.f32.partialorder %v536, %v627
      %vm663 = vcmp.eq.f32.partialorder %v553, %v630
      %vm664 = vcmp.eq.f32.partialorder %v537, %v630
      %vm665 = vcmp.eq.f32.partialorder %v554, %v633
      %vm666 = vcmp.eq.f32.partialorder %v538, %v633
      %vm667 = vcmp.eq.f32.partialorder %v555, %v636
      %vm668 = vcmp.eq.f32.partialorder %v539, %v636
      %v669 = vsel %vm637, %v572, 3e+38
      %v670 = vsel %vm638, %v588, 3e+38
      %v671 = vsel %vm639, %v573, 3e+38
      %v672 = vsel %vm640, %v588, 3e+38
      %v673 = vsel %vm641, %v574, 3e+38
      %v674 = vsel %vm642, %v588, 3e+38
      %v675 = vsel %vm643, %v575, 3e+38
      %v676 = vsel %vm644, %v588, 3e+38
      %v677 = vsel %vm645, %v576, 3e+38
      %v678 = vsel %vm646, %v588, 3e+38
      %v679 = vsel %vm647, %v577, 3e+38
      %v680 = vsel %vm648, %v588, 3e+38
      %v681 = vsel %vm649, %v578, 3e+38
      %v682 = vsel %vm650, %v588, 3e+38
      %v683 = vsel %vm651, %v579, 3e+38
      %v684 = vsel %vm652, %v588, 3e+38
      %v685 = vsel %vm653, %v580, 3e+38
      %v686 = vsel %vm654, %v588, 3e+38
      %v687 = vsel %vm655, %v581, 3e+38
      %v688 = vsel %vm656, %v588, 3e+38
      %v689 = vsel %vm657, %v582, 3e+38
      %v690 = vsel %vm658, %v588, 3e+38
      %v691 = vsel %vm659, %v583, 3e+38
      %v692 = vsel %vm660, %v588, 3e+38
      %v693 = vsel %vm661, %v584, 3e+38
      %v694 = vsel %vm662, %v588, 3e+38
      %v695 = vsel %vm663, %v585, 3e+38
      %v696 = vsel %vm664, %v588, 3e+38
      %v697 = vsel %vm665, %v586, 3e+38
      %v698 = vsel %vm666, %v588, 3e+38
      %v699 = vsel %vm667, %v587, 3e+38
      %v700 = vsel %vm668, %v588, 3e+38
      %v701 = vmin.f32 %v669, %v670
      %702 = vmin.xlane.f32.xlu0 %v701
      %v703 = vpop.xlane.xlu0 %702
      %v704 = vmin.f32 %v671, %v672
      %705 = vmin.xlane.f32.xlu0 %v704
      %v706 = vpop.xlane.xlu0 %705
      %v707 = vmin.f32 %v673, %v674
      %708 = vmin.xlane.f32.xlu0 %v707
      %v709 = vpop.xlane.xlu0 %708
      %v710 = vmin.f32 %v675, %v676
      %711 = vmin.xlane.f32.xlu0 %v710
      %v712 = vpop.xlane.xlu0 %711
      %v713 = vmin.f32 %v677, %v678
      %714 = vmin.xlane.f32.xlu0 %v713
      %v715 = vpop.xlane.xlu0 %714
      %v716 = vmin.f32 %v679, %v680
      %717 = vmin.xlane.f32.xlu0 %v716
      %v718 = vpop.xlane.xlu0 %717
      %v719 = vmin.f32 %v681, %v682
      %720 = vmin.xlane.f32.xlu0 %v719
      %v721 = vpop.xlane.xlu0 %720
      %v722 = vmin.f32 %v683, %v684
      %723 = vmin.xlane.f32.xlu0 %v722
      %v724 = vpop.xlane.xlu0 %723
      %v725 = vmin.f32 %v685, %v686
      %726 = vmin.xlane.f32.xlu0 %v725
      %v727 = vpop.xlane.xlu0 %726
      %v728 = vmin.f32 %v687, %v688
      %729 = vmin.xlane.f32.xlu0 %v728
      %v730 = vpop.xlane.xlu0 %729
      %v731 = vmin.f32 %v689, %v690
      %732 = vmin.xlane.f32.xlu0 %v731
      %v733 = vpop.xlane.xlu0 %732
      %v734 = vmin.f32 %v691, %v692
      %735 = vmin.xlane.f32.xlu0 %v734
      %v736 = vpop.xlane.xlu0 %735
      %v737 = vmin.f32 %v693, %v694
      %738 = vmin.xlane.f32.xlu0 %v737
      %v739 = vpop.xlane.xlu0 %738
      %v740 = vmin.f32 %v695, %v696
      %741 = vmin.xlane.f32.xlu0 %v740
      %v742 = vpop.xlane.xlu0 %741
      %v743 = vmin.f32 %v697, %v698
      %744 = vmin.xlane.f32.xlu0 %v743
      %v745 = vpop.xlane.xlu0 %744
      %v746 = vmin.f32 %v699, %v700
      %747 = vmin.xlane.f32.xlu0 %v746
      %v748 = vpop.xlane.xlu0 %747
      %vm749 = vcmask 7168
      %750 = vst.msk [vmem:[#allocation2] sm:$0xff] %vm749, %v591
      %751 = vst.msk [vmem:[#allocation2 + $0x8] sm:$0xff] %vm749, %v594
      %752 = vst.msk [vmem:[#allocation2 + $0x10] sm:$0xff] %vm749, %v597
      %753 = vst.msk [vmem:[#allocation2 + $0x18] sm:$0xff] %vm749, %v600
      %754 = vst.msk [vmem:[#allocation2 + $0x20] sm:$0xff] %vm749, %v603
      %755 = vst.msk [vmem:[#allocation2 + $0x28] sm:$0xff] %vm749, %v606
      %756 = vst.msk [vmem:[#allocation2 + $0x30] sm:$0xff] %vm749, %v609
      %757 = vst.msk [vmem:[#allocation2 + $0x38] sm:$0xff] %vm749, %v612
      %758 = vst.msk [vmem:[#allocation2 + $0x40] sm:$0xff] %vm749, %v615
      %759 = vst.msk [vmem:[#allocation2 + $0x48] sm:$0xff] %vm749, %v618
      %760 = vst.msk [vmem:[#allocation2 + $0x50] sm:$0xff] %vm749, %v621
      %761 = vst.msk [vmem:[#allocation2 + $0x58] sm:$0xff] %vm749, %v624
      %762 = vst.msk [vmem:[#allocation2 + $0x60] sm:$0xff] %vm749, %v627
      %763 = vst.msk [vmem:[#allocation2 + $0x68] sm:$0xff] %vm749, %v630
      %764 = vst.msk [vmem:[#allocation2 + $0x70] sm:$0xff] %vm749, %v633
      %765 = vst.msk [vmem:[#allocation2 + $0x78] sm:$0xff] %vm749, %v636
      %v766 = vcvt.f32.s32.to.zero.pseudo %v703
      %v767 = vcvt.f32.s32.to.zero.pseudo %v706
      %v768 = vcvt.f32.s32.to.zero.pseudo %v709
      %v769 = vcvt.f32.s32.to.zero.pseudo %v712
      %v770 = vcvt.f32.s32.to.zero.pseudo %v715
      %v771 = vcvt.f32.s32.to.zero.pseudo %v718
      %v772 = vcvt.f32.s32.to.zero.pseudo %v721
      %v773 = vcvt.f32.s32.to.zero.pseudo %v724
      %v774 = vcvt.f32.s32.to.zero.pseudo %v727
      %v775 = vcvt.f32.s32.to.zero.pseudo %v730
      %v776 = vcvt.f32.s32.to.zero.pseudo %v733
      %v777 = vcvt.f32.s32.to.zero.pseudo %v736
      %v778 = vcvt.f32.s32.to.zero.pseudo %v739
      %v779 = vcvt.f32.s32.to.zero.pseudo %v742
      %v780 = vcvt.f32.s32.to.zero.pseudo %v745
      %v781 = vcvt.f32.s32.to.zero.pseudo %v748
      %782 = vst.msk [vmem:[#allocation3] sm:$0xff] %vm749, %v766
      %783 = vst.msk [vmem:[#allocation3 + $0x8] sm:$0xff] %vm749, %v767
      %784 = vst.msk [vmem:[#allocation3 + $0x10] sm:$0xff] %vm749, %v768
      %785 = vst.msk [vmem:[#allocation3 + $0x18] sm:$0xff] %vm749, %v769
      %786 = vst.msk [vmem:[#allocation3 + $0x20] sm:$0xff] %vm749, %v770
      %787 = vst.msk [vmem:[#allocation3 + $0x28] sm:$0xff] %vm749, %v771
      %788 = vst.msk [vmem:[#allocation3 + $0x30] sm:$0xff] %vm749, %v772
      %789 = vst.msk [vmem:[#allocation3 + $0x38] sm:$0xff] %vm749, %v773
      %790 = vst.msk [vmem:[#allocation3 + $0x40] sm:$0xff] %vm749, %v774
      %791 = vst.msk [vmem:[#allocation3 + $0x48] sm:$0xff] %vm749, %v775
      %792 = vst.msk [vmem:[#allocation3 + $0x50] sm:$0xff] %vm749, %v776
      %793 = vst.msk [vmem:[#allocation3 + $0x58] sm:$0xff] %vm749, %v777
      %794 = vst.msk [vmem:[#allocation3 + $0x60] sm:$0xff] %vm749, %v778
      %795 = vst.msk [vmem:[#allocation3 + $0x68] sm:$0xff] %vm749, %v779
      %796 = vst.msk [vmem:[#allocation3 + $0x70] sm:$0xff] %vm749, %v780
      %797 = vst.msk [vmem:[#allocation3 + $0x78] sm:$0xff] %vm749, %v781
      %vm798 = vcmp.eq.f32.partialorder %v572, %v703
      %vm799 = vcmp.eq.f32.partialorder %v588, %v703
      %vm800 = vcmp.eq.f32.partialorder %v573, %v706
      %vm801 = vcmp.eq.f32.partialorder %v588, %v706
      %vm802 = vcmp.eq.f32.partialorder %v574, %v709
      %vm803 = vcmp.eq.f32.partialorder %v588, %v709
      %vm804 = vcmp.eq.f32.partialorder %v575, %v712
      %vm805 = vcmp.eq.f32.partialorder %v588, %v712
      %vm806 = vcmp.eq.f32.partialorder %v576, %v715
      %vm807 = vcmp.eq.f32.partialorder %v588, %v715
      %vm808 = vcmp.eq.f32.partialorder %v577, %v718
      %vm809 = vcmp.eq.f32.partialorder %v588, %v718
      %vm810 = vcmp.eq.f32.partialorder %v578, %v721
      %vm811 = vcmp.eq.f32.partialorder %v588, %v721
      %vm812 = vcmp.eq.f32.partialorder %v579, %v724
      %vm813 = vcmp.eq.f32.partialorder %v588, %v724
      %vm814 = vcmp.eq.f32.partialorder %v580, %v727
      %vm815 = vcmp.eq.f32.partialorder %v588, %v727
      %vm816 = vcmp.eq.f32.partialorder %v581, %v730
      %vm817 = vcmp.eq.f32.partialorder %v588, %v730
      %vm818 = vcmp.eq.f32.partialorder %v582, %v733
      %vm819 = vcmp.eq.f32.partialorder %v588, %v733
      %vm820 = vcmp.eq.f32.partialorder %v583, %v736
      %vm821 = vcmp.eq.f32.partialorder %v588, %v736
      %vm822 = vcmp.eq.f32.partialorder %v584, %v739
      %vm823 = vcmp.eq.f32.partialorder %v588, %v739
      %vm824 = vcmp.eq.f32.partialorder %v585, %v742
      %vm825 = vcmp.eq.f32.partialorder %v588, %v742
      %vm826 = vcmp.eq.f32.partialorder %v586, %v745
      %vm827 = vcmp.eq.f32.partialorder %v588, %v745
      %vm828 = vcmp.eq.f32.partialorder %v587, %v748
      %vm829 = vcmp.eq.f32.partialorder %v588, %v748
      %vm830 = vmand %vm637, %vm798
      %vm831 = vmand %vm638, %vm799
      %vm832 = vmand %vm639, %vm800
      %vm833 = vmand %vm640, %vm801
      %vm834 = vmand %vm641, %vm802
      %vm835 = vmand %vm642, %vm803
      %vm836 = vmand %vm643, %vm804
      %vm837 = vmand %vm644, %vm805
      %vm838 = vmand %vm645, %vm806
      %vm839 = vmand %vm646, %vm807
      %vm840 = vmand %vm647, %vm808
      %vm841 = vmand %vm648, %vm809
      %vm842 = vmand %vm649, %vm810
      %vm843 = vmand %vm650, %vm811
      %vm844 = vmand %vm651, %vm812
      %vm845 = vmand %vm652, %vm813
      %vm846 = vmand %vm653, %vm814
      %vm847 = vmand %vm654, %vm815
      %vm848 = vmand %vm655, %vm816
      %vm849 = vmand %vm656, %vm817
      %vm850 = vmand %vm657, %vm818
      %vm851 = vmand %vm658, %vm819
      %vm852 = vmand %vm659, %vm820
      %vm853 = vmand %vm660, %vm821
      %vm854 = vmand %vm661, %vm822
      %vm855 = vmand %vm662, %vm823
      %vm856 = vmand %vm663, %vm824
      %vm857 = vmand %vm664, %vm825
      %vm858 = vmand %vm665, %vm826
      %vm859 = vmand %vm666, %vm827
      %vm860 = vmand %vm667, %vm828
      %vm861 = vmand %vm668, %vm829
      %v862 = vsel %vm830, -inf, %v540
      %v863 = vsel %vm831, -inf, %v524
      %v864 = vsel %vm832, -inf, %v541
      %v865 = vsel %vm833, -inf, %v525
      %v866 = vsel %vm834, -inf, %v542
      %v867 = vsel %vm835, -inf, %v526
      %v868 = vsel %vm836, -inf, %v543
      %v869 = vsel %vm837, -inf, %v527
      %v870 = vsel %vm838, -inf, %v544
      %v871 = vsel %vm839, -inf, %v528
      %v872 = vsel %vm840, -inf, %v545
      %v873 = vsel %vm841, -inf, %v529
      %v874 = vsel %vm842, -inf, %v546
      %v875 = vsel %vm843, -inf, %v530
      %v876 = vsel %vm844, -inf, %v547
      %v877 = vsel %vm845, -inf, %v531
      %v878 = vsel %vm846, -inf, %v548
      %v879 = vsel %vm847, -inf, %v532
      %v880 = vsel %vm848, -inf, %v549
      %v881 = vsel %vm849, -inf, %v533
      %v882 = vsel %vm850, -inf, %v550
      %v883 = vsel %vm851, -inf, %v534
      %v884 = vsel %vm852, -inf, %v551
      %v885 = vsel %vm853, -inf, %v535
      %v886 = vsel %vm854, -inf, %v552
      %v887 = vsel %vm855, -inf, %v536
      %v888 = vsel %vm856, -inf, %v553
      %v889 = vsel %vm857, -inf, %v537
      %v890 = vsel %vm858, -inf, %v554
      %v891 = vsel %vm859, -inf, %v538
      %v892 = vsel %vm860, -inf, %v555
      %v893 = vsel %vm861, -inf, %v539
      %v894 = vmax.f32 %v862, %v863
      %895 = vmax.xlane.f32.xlu0 %v894
      %v896 = vpop.xlane.xlu0 %895
      %v897 = vmax.f32 %v864, %v865
      %898 = vmax.xlane.f32.xlu0 %v897
      %v899 = vpop.xlane.xlu0 %898
      %v900 = vmax.f32 %v866, %v867
      %901 = vmax.xlane.f32.xlu0 %v900
      %v902 = vpop.xlane.xlu0 %901
      %v903 = vmax.f32 %v868, %v869
      %904 = vmax.xlane.f32.xlu0 %v903
      %v905 = vpop.xlane.xlu0 %904
      %v906 = vmax.f32 %v870, %v871
      %907 = vmax.xlane.f32.xlu0 %v906
      %v908 = vpop.xlane.xlu0 %907
      %v909 = vmax.f32 %v872, %v873
      %910 = vmax.xlane.f32.xlu0 %v909
      %v911 = vpop.xlane.xlu0 %910
      %v912 = vmax.f32 %v874, %v875
      %913 = vmax.xlane.f32.xlu0 %v912
      %v914 = vpop.xlane.xlu0 %913
      %v915 = vmax.f32 %v876, %v877
      %916 = vmax.xlane.f32.xlu0 %v915
      %v917 = vpop.xlane.xlu0 %916
      %v918 = vmax.f32 %v878, %v879
      %919 = vmax.xlane.f32.xlu0 %v918
      %v920 = vpop.xlane.xlu0 %919
      %v921 = vmax.f32 %v880, %v881
      %922 = vmax.xlane.f32.xlu0 %v921
      %v923 = vpop.xlane.xlu0 %922
      %v924 = vmax.f32 %v882, %v883
      %925 = vmax.xlane.f32.xlu0 %v924
      %v926 = vpop.xlane.xlu0 %925
      %v927 = vmax.f32 %v884, %v885
      %928 = vmax.xlane.f32.xlu0 %v927
      %v929 = vpop.xlane.xlu0 %928
      %v930 = vmax.f32 %v886, %v887
      %931 = vmax.xlane.f32.xlu0 %v930
      %v932 = vpop.xlane.xlu0 %931
      %v933 = vmax.f32 %v888, %v889
      %934 = vmax.xlane.f32.xlu0 %v933
      %v935 = vpop.xlane.xlu0 %934
      %v936 = vmax.f32 %v890, %v891
      %937 = vmax.xlane.f32.xlu0 %v936
      %v938 = vpop.xlane.xlu0 %937
      %v939 = vmax.f32 %v892, %v893
      %940 = vmax.xlane.f32.xlu0 %v939
      %v941 = vpop.xlane.xlu0 %940
      %vm942 = vcmp.eq.f32.partialorder %v862, %v896
      %vm943 = vcmp.eq.f32.partialorder %v863, %v896
      %vm944 = vcmp.eq.f32.partialorder %v864, %v899
      %vm945 = vcmp.eq.f32.partialorder %v865, %v899
      %vm946 = vcmp.eq.f32.partialorder %v866, %v902
      %vm947 = vcmp.eq.f32.partialorder %v867, %v902
      %vm948 = vcmp.eq.f32.partialorder %v868, %v905
      %vm949 = vcmp.eq.f32.partialorder %v869, %v905
      %vm950 = vcmp.eq.f32.partialorder %v870, %v908
      %vm951 = vcmp.eq.f32.partialorder %v871, %v908
      %vm952 = vcmp.eq.f32.partialorder %v872, %v911
      %vm953 = vcmp.eq.f32.partialorder %v873, %v911
      %vm954 = vcmp.eq.f32.partialorder %v874, %v914
      %vm955 = vcmp.eq.f32.partialorder %v875, %v914
      %vm956 = vcmp.eq.f32.partialorder %v876, %v917
      %vm957 = vcmp.eq.f32.partialorder %v877, %v917
      %vm958 = vcmp.eq.f32.partialorder %v878, %v920
      %vm959 = vcmp.eq.f32.partialorder %v879, %v920
      %vm960 = vcmp.eq.f32.partialorder %v880, %v923
      %vm961 = vcmp.eq.f32.partialorder %v881, %v923
      %vm962 = vcmp.eq.f32.partialorder %v882, %v926
      %vm963 = vcmp.eq.f32.partialorder %v883, %v926
      %vm964 = vcmp.eq.f32.partialorder %v884, %v929
      %vm965 = vcmp.eq.f32.partialorder %v885, %v929
      %vm966 = vcmp.eq.f32.partialorder %v886, %v932
      %vm967 = vcmp.eq.f32.partialorder %v887, %v932
      %vm968 = vcmp.eq.f32.partialorder %v888, %v935
      %vm969 = vcmp.eq.f32.partialorder %v889, %v935
      %vm970 = vcmp.eq.f32.partialorder %v890, %v938
      %vm971 = vcmp.eq.f32.partialorder %v891, %v938
      %vm972 = vcmp.eq.f32.partialorder %v892, %v941
      %vm973 = vcmp.eq.f32.partialorder %v893, %v941
      %v974 = vsel %vm942, %v572, 3e+38
      %v975 = vsel %vm943, %v588, 3e+38
      %v976 = vsel %vm944, %v573, 3e+38
      %v977 = vsel %vm945, %v588, 3e+38
      %v978 = vsel %vm946, %v574, 3e+38
      %v979 = vsel %vm947, %v588, 3e+38
      %v980 = vsel %vm948, %v575, 3e+38
      %v981 = vsel %vm949, %v588, 3e+38
      %v982 = vsel %vm950, %v576, 3e+38
      %v983 = vsel %vm951, %v588, 3e+38
      %v984 = vsel %vm952, %v577, 3e+38
      %v985 = vsel %vm953, %v588, 3e+38
      %v986 = vsel %vm954, %v578, 3e+38
      %v987 = vsel %vm955, %v588, 3e+38
      %v988 = vsel %vm956, %v579, 3e+38
      %v989 = vsel %vm957, %v588, 3e+38
      %v990 = vsel %vm958, %v580, 3e+38
      %v991 = vsel %vm959, %v588, 3e+38
      %v992 = vsel %vm960, %v581, 3e+38
      %v993 = vsel %vm961, %v588, 3e+38
      %v994 = vsel %vm962, %v582, 3e+38
      %v995 = vsel %vm963, %v588, 3e+38
      %v996 = vsel %vm964, %v583, 3e+38
      %v997 = vsel %vm965, %v588, 3e+38
      %v998 = vsel %vm966, %v584, 3e+38
      %v999 = vsel %vm967, %v588, 3e+38
      %v1000 = vsel %vm968, %v585, 3e+38
      %v1001 = vsel %vm969, %v588, 3e+38
      %v1002 = vsel %vm970, %v586, 3e+38
      %v1003 = vsel %vm971, %v588, 3e+38
      %v1004 = vsel %vm972, %v587, 3e+38
      %v1005 = vsel %vm973, %v588, 3e+38
      %v1006 = vmin.f32 %v974, %v975
      %1007 = vmin.xlane.f32.xlu0 %v1006
      %v1008 = vpop.xlane.xlu0 %1007
      %v1009 = vmin.f32 %v976, %v977
      %1010 = vmin.xlane.f32.xlu0 %v1009
      %v1011 = vpop.xlane.xlu0 %1010
      %v1012 = vmin.f32 %v978, %v979
      %1013 = vmin.xlane.f32.xlu0 %v1012
      %v1014 = vpop.xlane.xlu0 %1013
      %v1015 = vmin.f32 %v980, %v981
      %1016 = vmin.xlane.f32.xlu0 %v1015
      %v1017 = vpop.xlane.xlu0 %1016
      %v1018 = vmin.f32 %v982, %v983
      %1019 = vmin.xlane.f32.xlu0 %v1018
      %v1020 = vpop.xlane.xlu0 %1019
      %v1021 = vmin.f32 %v984, %v985
      %1022 = vmin.xlane.f32.xlu0 %v1021
      %v1023 = vpop.xlane.xlu0 %1022
      %v1024 = vmin.f32 %v986, %v987
      %1025 = vmin.xlane.f32.xlu0 %v1024
      %v1026 = vpop.xlane.xlu0 %1025
      %v1027 = vmin.f32 %v988, %v989
      %1028 = vmin.xlane.f32.xlu0 %v1027
      %v1029 = vpop.xlane.xlu0 %1028
      %v1030 = vmin.f32 %v990, %v991
      %1031 = vmin.xlane.f32.xlu0 %v1030
      %v1032 = vpop.xlane.xlu0 %1031
      %v1033 = vmin.f32 %v992, %v993
      %1034 = vmin.xlane.f32.xlu0 %v1033
      %v1035 = vpop.xlane.xlu0 %1034
      %v1036 = vmin.f32 %v994, %v995
      %1037 = vmin.xlane.f32.xlu0 %v1036
      %v1038 = vpop.xlane.xlu0 %1037
      %v1039 = vmin.f32 %v996, %v997
      %1040 = vmin.xlane.f32.xlu0 %v1039
      %v1041 = vpop.xlane.xlu0 %1040
      %v1042 = vmin.f32 %v998, %v999
      %1043 = vmin.xlane.f32.xlu0 %v1042
      %v1044 = vpop.xlane.xlu0 %1043
      %v1045 = vmin.f32 %v1000, %v1001
      %1046 = vmin.xlane.f32.xlu0 %v1045
      %v1047 = vpop.xlane.xlu0 %1046
      %v1048 = vmin.f32 %v1002, %v1003
      %1049 = vmin.xlane.f32.xlu0 %v1048
      %v1050 = vpop.xlane.xlu0 %1049
      %v1051 = vmin.f32 %v1004, %v1005
      %1052 = vmin.xlane.f32.xlu0 %v1051
      %v1053 = vpop.xlane.xlu0 %1052
      %vm1054 = vcmask 15368
      %1055 = vst.msk [vmem:[#allocation2] sm:$0xff] %vm1054, %v896
      %1056 = vst.msk [vmem:[#allocation2 + $0x8] sm:$0xff] %vm1054, %v899
      %1057 = vst.msk [vmem:[#allocation2 + $0x10] sm:$0xff] %vm1054, %v902
      %1058 = vst.msk [vmem:[#allocation2 + $0x18] sm:$0xff] %vm1054, %v905
      %1059 = vst.msk [vmem:[#allocation2 + $0x20] sm:$0xff] %vm1054, %v908
      %1060 = vst.msk [vmem:[#allocation2 + $0x28] sm:$0xff] %vm1054, %v911
      %1061 = vst.msk [vmem:[#allocation2 + $0x30] sm:$0xff] %vm1054, %v914
      %1062 = vst.msk [vmem:[#allocation2 + $0x38] sm:$0xff] %vm1054, %v917
      %1063 = vst.msk [vmem:[#allocation2 + $0x40] sm:$0xff] %vm1054, %v920
      %1064 = vst.msk [vmem:[#allocation2 + $0x48] sm:$0xff] %vm1054, %v923
      %1065 = vst.msk [vmem:[#allocation2 + $0x50] sm:$0xff] %vm1054, %v926
      %1066 = vst.msk [vmem:[#allocation2 + $0x58] sm:$0xff] %vm1054, %v929
      %1067 = vst.msk [vmem:[#allocation2 + $0x60] sm:$0xff] %vm1054, %v932
      %1068 = vst.msk [vmem:[#allocation2 + $0x68] sm:$0xff] %vm1054, %v935
      %1069 = vst.msk [vmem:[#allocation2 + $0x70] sm:$0xff] %vm1054, %v938
      %1070 = vst.msk [vmem:[#allocation2 + $0x78] sm:$0xff] %vm1054, %v941
      %v1071 = vcvt.f32.s32.to.zero.pseudo %v1008
      %v1072 = vcvt.f32.s32.to.zero.pseudo %v1011
      %v1073 = vcvt.f32.s32.to.zero.pseudo %v1014
      %v1074 = vcvt.f32.s32.to.zero.pseudo %v1017
      %v1075 = vcvt.f32.s32.to.zero.pseudo %v1020
      %v1076 = vcvt.f32.s32.to.zero.pseudo %v1023
      %v1077 = vcvt.f32.s32.to.zero.pseudo %v1026
      %v1078 = vcvt.f32.s32.to.zero.pseudo %v1029
      %v1079 = vcvt.f32.s32.to.zero.pseudo %v1032
      %v1080 = vcvt.f32.s32.to.zero.pseudo %v1035
      %v1081 = vcvt.f32.s32.to.zero.pseudo %v1038
      %v1082 = vcvt.f32.s32.to.zero.pseudo %v1041
      %v1083 = vcvt.f32.s32.to.zero.pseudo %v1044
      %v1084 = vcvt.f32.s32.to.zero.pseudo %v1047
      %v1085 = vcvt.f32.s32.to.zero.pseudo %v1050
      %v1086 = vcvt.f32.s32.to.zero.pseudo %v1053
      %1087 = vst.msk [vmem:[#allocation3] sm:$0xff] %vm1054, %v1071
      %1088 = vst.msk [vmem:[#allocation3 + $0x8] sm:$0xff] %vm1054, %v1072
      %1089 = vst.msk [vmem:[#allocation3 + $0x10] sm:$0xff] %vm1054, %v1073
      %1090 = vst.msk [vmem:[#allocation3 + $0x18] sm:$0xff] %vm1054, %v1074
      %1091 = vst.msk [vmem:[#allocation3 + $0x20] sm:$0xff] %vm1054, %v1075
      %1092 = vst.msk [vmem:[#allocation3 + $0x28] sm:$0xff] %vm1054, %v1076
      %1093 = vst.msk [vmem:[#allocation3 + $0x30] sm:$0xff] %vm1054, %v1077
      %1094 = vst.msk [vmem:[#allocation3 + $0x38] sm:$0xff] %vm1054, %v1078
      %1095 = vst.msk [vmem:[#allocation3 + $0x40] sm:$0xff] %vm1054, %v1079
      %1096 = vst.msk [vmem:[#allocation3 + $0x48] sm:$0xff] %vm1054, %v1080
      %1097 = vst.msk [vmem:[#allocation3 + $0x50] sm:$0xff] %vm1054, %v1081
      %1098 = vst.msk [vmem:[#allocation3 + $0x58] sm:$0xff] %vm1054, %v1082
      %1099 = vst.msk [vmem:[#allocation3 + $0x60] sm:$0xff] %vm1054, %v1083
      %1100 = vst.msk [vmem:[#allocation3 + $0x68] sm:$0xff] %vm1054, %v1084
      %1101 = vst.msk [vmem:[#allocation3 + $0x70] sm:$0xff] %vm1054, %v1085
      %1102 = vst.msk [vmem:[#allocation3 + $0x78] sm:$0xff] %vm1054, %v1086
      %vm1103 = vcmp.eq.f32.partialorder %v572, %v1008
      %vm1104 = vcmp.eq.f32.partialorder %v588, %v1008
      %vm1105 = vcmp.eq.f32.partialorder %v573, %v1011
      %vm1106 = vcmp.eq.f32.partialorder %v588, %v1011
      %vm1107 = vcmp.eq.f32.partialorder %v574, %v1014
      %vm1108 = vcmp.eq.f32.partialorder %v588, %v1014
      %vm1109 = vcmp.eq.f32.partialorder %v575, %v1017
      %vm1110 = vcmp.eq.f32.partialorder %v588, %v1017
      %vm1111 = vcmp.eq.f32.partialorder %v576, %v1020
      %vm1112 = vcmp.eq.f32.partialorder %v588, %v1020
      %vm1113 = vcmp.eq.f32.partialorder %v577, %v1023
      %vm1114 = vcmp.eq.f32.partialorder %v588, %v1023
      %vm1115 = vcmp.eq.f32.partialorder %v578, %v1026
      %vm1116 = vcmp.eq.f32.partialorder %v588, %v1026
      %vm1117 = vcmp.eq.f32.partialorder %v579, %v1029
      %vm1118 = vcmp.eq.f32.partialorder %v588, %v1029
      %vm1119 = vcmp.eq.f32.partialorder %v580, %v1032
      %vm1120 = vcmp.eq.f32.partialorder %v588, %v1032
      %vm1121 = vcmp.eq.f32.partialorder %v581, %v1035
      %vm1122 = vcmp.eq.f32.partialorder %v588, %v1035
      %vm1123 = vcmp.eq.f32.partialorder %v582, %v1038
      %vm1124 = vcmp.eq.f32.partialorder %v588, %v1038
      %vm1125 = vcmp.eq.f32.partialorder %v583, %v1041
      %vm1126 = vcmp.eq.f32.partialorder %v588, %v1041
      %vm1127 = vcmp.eq.f32.partialorder %v584, %v1044
      %vm1128 = vcmp.eq.f32.partialorder %v588, %v1044
      %vm1129 = vcmp.eq.f32.partialorder %v585, %v1047
      %vm1130 = vcmp.eq.f32.partialorder %v588, %v1047
      %vm1131 = vcmp.eq.f32.partialorder %v586, %v1050
      %vm1132 = vcmp.eq.f32.partialorder %v588, %v1050
      %vm1133 = vcmp.eq.f32.partialorder %v587, %v1053
      %vm1134 = vcmp.eq.f32.partialorder %v588, %v1053
      %vm1135 = vmand %vm942, %vm1103
      %vm1136 = vmand %vm943, %vm1104
      %vm1137 = vmand %vm944, %vm1105
      %vm1138 = vmand %vm945, %vm1106
      %vm1139 = vmand %vm946, %vm1107
      %vm1140 = vmand %vm947, %vm1108
      %vm1141 = vmand %vm948, %vm1109
      %vm1142 = vmand %vm949, %vm1110
      %vm1143 = vmand %vm950, %vm1111
      %vm1144 = vmand %vm951, %vm1112
      %vm1145 = vmand %vm952, %vm1113
      %vm1146 = vmand %vm953, %vm1114
      %vm1147 = vmand %vm954, %vm1115
      %vm1148 = vmand %vm955, %vm1116
      %vm1149 = vmand %vm956, %vm1117
      %vm1150 = vmand %vm957, %vm1118
      %vm1151 = vmand %vm958, %vm1119
      %vm1152 = vmand %vm959, %vm1120
      %vm1153 = vmand %vm960, %vm1121
      %vm1154 = vmand %vm961, %vm1122
      %vm1155 = vmand %vm962, %vm1123
      %vm1156 = vmand %vm963, %vm1124
      %vm1157 = vmand %vm964, %vm1125
      %vm1158 = vmand %vm965, %vm1126
      %vm1159 = vmand %vm966, %vm1127
      %vm1160 = vmand %vm967, %vm1128
      %vm1161 = vmand %vm968, %vm1129
      %vm1162 = vmand %vm969, %vm1130
      %vm1163 = vmand %vm970, %vm1131
      %vm1164 = vmand %vm971, %vm1132
      %vm1165 = vmand %vm972, %vm1133
      %vm1166 = vmand %vm973, %vm1134
      %v1167 = vsel %vm1135, -inf, %v862
      %v1168 = vsel %vm1136, -inf, %v863
      %v1169 = vsel %vm1137, -inf, %v864
      %v1170 = vsel %vm1138, -inf, %v865
      %v1171 = vsel %vm1139, -inf, %v866
      %v1172 = vsel %vm1140, -inf, %v867
      %v1173 = vsel %vm1141, -inf, %v868
      %v1174 = vsel %vm1142, -inf, %v869
      %v1175 = vsel %vm1143, -inf, %v870
      %v1176 = vsel %vm1144, -inf, %v871
      %v1177 = vsel %vm1145, -inf, %v872
      %v1178 = vsel %vm1146, -inf, %v873
      %v1179 = vsel %vm1147, -inf, %v874
      %v1180 = vsel %vm1148, -inf, %v875
      %v1181 = vsel %vm1149, -inf, %v876
      %v1182 = vsel %vm1150, -inf, %v877
      %v1183 = vsel %vm1151, -inf, %v878
      %v1184 = vsel %vm1152, -inf, %v879
      %v1185 = vsel %vm1153, -inf, %v880
      %v1186 = vsel %vm1154, -inf, %v881
      %v1187 = vsel %vm1155, -inf, %v882
      %v1188 = vsel %vm1156, -inf, %v883
      %v1189 = vsel %vm1157, -inf, %v884
      %v1190 = vsel %vm1158, -inf, %v885
      %v1191 = vsel %vm1159, -inf, %v886
      %v1192 = vsel %vm1160, -inf, %v887
      %v1193 = vsel %vm1161, -inf, %v888
      %v1194 = vsel %vm1162, -inf, %v889
      %v1195 = vsel %vm1163, -inf, %v890
      %v1196 = vsel %vm1164, -inf, %v891
      %v1197 = vsel %vm1165, -inf, %v892
      %v1198 = vsel %vm1166, -inf, %v893
      %v1199 = vmax.f32 %v1167, %v1168
      %1200 = vmax.xlane.f32.xlu0 %v1199
      %v1201 = vpop.xlane.xlu0 %1200
      %v1202 = vmax.f32 %v1169, %v1170
      %1203 = vmax.xlane.f32.xlu0 %v1202
      %v1204 = vpop.xlane.xlu0 %1203
      %v1205 = vmax.f32 %v1171, %v1172
      %1206 = vmax.xlane.f32.xlu0 %v1205
      %v1207 = vpop.xlane.xlu0 %1206
      %v1208 = vmax.f32 %v1173, %v1174
      %1209 = vmax.xlane.f32.xlu0 %v1208
      %v1210 = vpop.xlane.xlu0 %1209
      %v1211 = vmax.f32 %v1175, %v1176
      %1212 = vmax.xlane.f32.xlu0 %v1211
      %v1213 = vpop.xlane.xlu0 %1212
      %v1214 = vmax.f32 %v1177, %v1178
      %1215 = vmax.xlane.f32.xlu0 %v1214
      %v1216 = vpop.xlane.xlu0 %1215
      %v1217 = vmax.f32 %v1179, %v1180
      %1218 = vmax.xlane.f32.xlu0 %v1217
      %v1219 = vpop.xlane.xlu0 %1218
      %v1220 = vmax.f32 %v1181, %v1182
      %1221 = vmax.xlane.f32.xlu0 %v1220
      %v1222 = vpop.xlane.xlu0 %1221
      %v1223 = vmax.f32 %v1183, %v1184
      %1224 = vmax.xlane.f32.xlu0 %v1223
      %v1225 = vpop.xlane.xlu0 %1224
      %v1226 = vmax.f32 %v1185, %v1186
      %1227 = vmax.xlane.f32.xlu0 %v1226
      %v1228 = vpop.xlane.xlu0 %1227
      %v1229 = vmax.f32 %v1187, %v1188
      %1230 = vmax.xlane.f32.xlu0 %v1229
      %v1231 = vpop.xlane.xlu0 %1230
      %v1232 = vmax.f32 %v1189, %v1190
      %1233 = vmax.xlane.f32.xlu0 %v1232
      %v1234 = vpop.xlane.xlu0 %1233
      %v1235 = vmax.f32 %v1191, %v1192
      %1236 = vmax.xlane.f32.xlu0 %v1235
      %v1237 = vpop.xlane.xlu0 %1236
      %v1238 = vmax.f32 %v1193, %v1194
      %1239 = vmax.xlane.f32.xlu0 %v1238
      %v1240 = vpop.xlane.xlu0 %1239
      %v1241 = vmax.f32 %v1195, %v1196
      %1242 = vmax.xlane.f32.xlu0 %v1241
      %v1243 = vpop.xlane.xlu0 %1242
      %v1244 = vmax.f32 %v1197, %v1198
      %1245 = vmax.xlane.f32.xlu0 %v1244
      %v1246 = vpop.xlane.xlu0 %1245
      %vm1247 = vcmp.eq.f32.partialorder %v1167, %v1201
      %vm1248 = vcmp.eq.f32.partialorder %v1168, %v1201
      %vm1249 = vcmp.eq.f32.partialorder %v1169, %v1204
      %vm1250 = vcmp.eq.f32.partialorder %v1170, %v1204
      %vm1251 = vcmp.eq.f32.partialorder %v1171, %v1207
      %vm1252 = vcmp.eq.f32.partialorder %v1172, %v1207
      %vm1253 = vcmp.eq.f32.partialorder %v1173, %v1210
      %vm1254 = vcmp.eq.f32.partialorder %v1174, %v1210
      %vm1255 = vcmp.eq.f32.partialorder %v1175, %v1213
      %vm1256 = vcmp.eq.f32.partialorder %v1176, %v1213
      %vm1257 = vcmp.eq.f32.partialorder %v1177, %v1216
      %vm1258 = vcmp.eq.f32.partialorder %v1178, %v1216
      %vm1259 = vcmp.eq.f32.partialorder %v1179, %v1219
      %vm1260 = vcmp.eq.f32.partialorder %v1180, %v1219
      %vm1261 = vcmp.eq.f32.partialorder %v1181, %v1222
      %vm1262 = vcmp.eq.f32.partialorder %v1182, %v1222
      %vm1263 = vcmp.eq.f32.partialorder %v1183, %v1225
      %vm1264 = vcmp.eq.f32.partialorder %v1184, %v1225
      %vm1265 = vcmp.eq.f32.partialorder %v1185, %v1228
      %vm1266 = vcmp.eq.f32.partialorder %v1186, %v1228
      %vm1267 = vcmp.eq.f32.partialorder %v1187, %v1231
      %vm1268 = vcmp.eq.f32.partialorder %v1188, %v1231
      %vm1269 = vcmp.eq.f32.partialorder %v1189, %v1234
      %vm1270 = vcmp.eq.f32.partialorder %v1190, %v1234
      %vm1271 = vcmp.eq.f32.partialorder %v1191, %v1237
      %vm1272 = vcmp.eq.f32.partialorder %v1192, %v1237
      %vm1273 = vcmp.eq.f32.partialorder %v1193, %v1240
      %vm1274 = vcmp.eq.f32.partialorder %v1194, %v1240
      %vm1275 = vcmp.eq.f32.partialorder %v1195, %v1243
      %vm1276 = vcmp.eq.f32.partialorder %v1196, %v1243
      %vm1277 = vcmp.eq.f32.partialorder %v1197, %v1246
      %vm1278 = vcmp.eq.f32.partialorder %v1198, %v1246
      %v1279 = vsel %vm1247, %v572, 3e+38
      %v1280 = vsel %vm1248, %v588, 3e+38
      %v1281 = vsel %vm1249, %v573, 3e+38
      %v1282 = vsel %vm1250, %v588, 3e+38
      %v1283 = vsel %vm1251, %v574, 3e+38
      %v1284 = vsel %vm1252, %v588, 3e+38
      %v1285 = vsel %vm1253, %v575, 3e+38
      %v1286 = vsel %vm1254, %v588, 3e+38
      %v1287 = vsel %vm1255, %v576, 3e+38
      %v1288 = vsel %vm1256, %v588, 3e+38
      %v1289 = vsel %vm1257, %v577, 3e+38
      %v1290 = vsel %vm1258, %v588, 3e+38
      %v1291 = vsel %vm1259, %v578, 3e+38
      %v1292 = vsel %vm1260, %v588, 3e+38
      %v1293 = vsel %vm1261, %v579, 3e+38
      %v1294 = vsel %vm1262, %v588, 3e+38
      %v1295 = vsel %vm1263, %v580, 3e+38
      %v1296 = vsel %vm1264, %v588, 3e+38
      %v1297 = vsel %vm1265, %v581, 3e+38
      %v1298 = vsel %vm1266, %v588, 3e+38
      %v1299 = vsel %vm1267, %v582, 3e+38
      %v1300 = vsel %vm1268, %v588, 3e+38
      %v1301 = vsel %vm1269, %v583, 3e+38
      %v1302 = vsel %vm1270, %v588, 3e+38
      %v1303 = vsel %vm1271, %v584, 3e+38
      %v1304 = vsel %vm1272, %v588, 3e+38
      %v1305 = vsel %vm1273, %v585, 3e+38
      %v1306 = vsel %vm1274, %v588, 3e+38
      %v1307 = vsel %vm1275, %v586, 3e+38
      %v1308 = vsel %vm1276, %v588, 3e+38
      %v1309 = vsel %vm1277, %v587, 3e+38
      %v1310 = vsel %vm1278, %v588, 3e+38
      %v1311 = vmin.f32 %v1279, %v1280
      %1312 = vmin.xlane.f32.xlu0 %v1311
      %v1313 = vpop.xlane.xlu0 %1312
      %v1314 = vmin.f32 %v1281, %v1282
      %1315 = vmin.xlane.f32.xlu0 %v1314
      %v1316 = vpop.xlane.xlu0 %1315
      %v1317 = vmin.f32 %v1283, %v1284
      %1318 = vmin.xlane.f32.xlu0 %v1317
      %v1319 = vpop.xlane.xlu0 %1318
      %v1320 = vmin.f32 %v1285, %v1286
      %1321 = vmin.xlane.f32.xlu0 %v1320
      %v1322 = vpop.xlane.xlu0 %1321
      %v1323 = vmin.f32 %v1287, %v1288
      %1324 = vmin.xlane.f32.xlu0 %v1323
      %v1325 = vpop.xlane.xlu0 %1324
      %v1326 = vmin.f32 %v1289, %v1290
      %1327 = vmin.xlane.f32.xlu0 %v1326
      %v1328 = vpop.xlane.xlu0 %1327
      %v1329 = vmin.f32 %v1291, %v1292
      %1330 = vmin.xlane.f32.xlu0 %v1329
      %v1331 = vpop.xlane.xlu0 %1330
      %v1332 = vmin.f32 %v1293, %v1294
      %1333 = vmin.xlane.f32.xlu0 %v1332
      %v1334 = vpop.xlane.xlu0 %1333
      %v1335 = vmin.f32 %v1295, %v1296
      %1336 = vmin.xlane.f32.xlu0 %v1335
      %v1337 = vpop.xlane.xlu0 %1336
      %v1338 = vmin.f32 %v1297, %v1298
      %1339 = vmin.xlane.f32.xlu0 %v1338
      %v1340 = vpop.xlane.xlu0 %1339
      %v1341 = vmin.f32 %v1299, %v1300
      %1342 = vmin.xlane.f32.xlu0 %v1341
      %v1343 = vpop.xlane.xlu0 %1342
      %v1344 = vmin.f32 %v1301, %v1302
      %1345 = vmin.xlane.f32.xlu0 %v1344
      %v1346 = vpop.xlane.xlu0 %1345
      %v1347 = vmin.f32 %v1303, %v1304
      %1348 = vmin.xlane.f32.xlu0 %v1347
      %v1349 = vpop.xlane.xlu0 %1348
      %v1350 = vmin.f32 %v1305, %v1306
      %1351 = vmin.xlane.f32.xlu0 %v1350
      %v1352 = vpop.xlane.xlu0 %1351
      %v1353 = vmin.f32 %v1307, %v1308
      %1354 = vmin.xlane.f32.xlu0 %v1353
      %v1355 = vpop.xlane.xlu0 %1354
      %v1356 = vmin.f32 %v1309, %v1310
      %1357 = vmin.xlane.f32.xlu0 %v1356
      %v1358 = vpop.xlane.xlu0 %1357
      %vm1359 = vcmask 23568
      %1360 = vst.msk [vmem:[#allocation2] sm:$0xff] %vm1359, %v1201
      %1361 = vst.msk [vmem:[#allocation2 + $0x8] sm:$0xff] %vm1359, %v1204
      %1362 = vst.msk [vmem:[#allocation2 + $0x10] sm:$0xff] %vm1359, %v1207
      %1363 = vst.msk [vmem:[#allocation2 + $0x18] sm:$0xff] %vm1359, %v1210
      %1364 = vst.msk [vmem:[#allocation2 + $0x20] sm:$0xff] %vm1359, %v1213
      %1365 = vst.msk [vmem:[#allocation2 + $0x28] sm:$0xff] %vm1359, %v1216
      %1366 = vst.msk [vmem:[#allocation2 + $0x30] sm:$0xff] %vm1359, %v1219
      %1367 = vst.msk [vmem:[#allocation2 + $0x38] sm:$0xff] %vm1359, %v1222
      %1368 = vst.msk [vmem:[#allocation2 + $0x40] sm:$0xff] %vm1359, %v1225
      %1369 = vst.msk [vmem:[#allocation2 + $0x48] sm:$0xff] %vm1359, %v1228
      %1370 = vst.msk [vmem:[#allocation2 + $0x50] sm:$0xff] %vm1359, %v1231
      %1371 = vst.msk [vmem:[#allocation2 + $0x58] sm:$0xff] %vm1359, %v1234
      %1372 = vst.msk [vmem:[#allocation2 + $0x60] sm:$0xff] %vm1359, %v1237
      %1373 = vst.msk [vmem:[#allocation2 + $0x68] sm:$0xff] %vm1359, %v1240
      %1374 = vst.msk [vmem:[#allocation2 + $0x70] sm:$0xff] %vm1359, %v1243
      %1375 = vst.msk [vmem:[#allocation2 + $0x78] sm:$0xff] %vm1359, %v1246
      %v1376 = vcvt.f32.s32.to.zero.pseudo %v1313
      %v1377 = vcvt.f32.s32.to.zero.pseudo %v1316
      %v1378 = vcvt.f32.s32.to.zero.pseudo %v1319
      %v1379 = vcvt.f32.s32.to.zero.pseudo %v1322
      %v1380 = vcvt.f32.s32.to.zero.pseudo %v1325
      %v1381 = vcvt.f32.s32.to.zero.pseudo %v1328
      %v1382 = vcvt.f32.s32.to.zero.pseudo %v1331
      %v1383 = vcvt.f32.s32.to.zero.pseudo %v1334
      %v1384 = vcvt.f32.s32.to.zero.pseudo %v1337
      %v1385 = vcvt.f32.s32.to.zero.pseudo %v1340
      %v1386 = vcvt.f32.s32.to.zero.pseudo %v1343
      %v1387 = vcvt.f32.s32.to.zero.pseudo %v1346
      %v1388 = vcvt.f32.s32.to.zero.pseudo %v1349
      %v1389 = vcvt.f32.s32.to.zero.pseudo %v1352
      %v1390 = vcvt.f32.s32.to.zero.pseudo %v1355
      %v1391 = vcvt.f32.s32.to.zero.pseudo %v1358
      %1392 = vst.msk [vmem:[#allocation3] sm:$0xff] %vm1359, %v1376
      %1393 = vst.msk [vmem:[#allocation3 + $0x8] sm:$0xff] %vm1359, %v1377
      %1394 = vst.msk [vmem:[#allocation3 + $0x10] sm:$0xff] %vm1359, %v1378
      %1395 = vst.msk [vmem:[#allocation3 + $0x18] sm:$0xff] %vm1359, %v1379
      %1396 = vst.msk [vmem:[#allocation3 + $0x20] sm:$0xff] %vm1359, %v1380
      %1397 = vst.msk [vmem:[#allocation3 + $0x28] sm:$0xff] %vm1359, %v1381
      %1398 = vst.msk [vmem:[#allocation3 + $0x30] sm:$0xff] %vm1359, %v1382
      %1399 = vst.msk [vmem:[#allocation3 + $0x38] sm:$0xff] %vm1359, %v1383
      %1400 = vst.msk [vmem:[#allocation3 + $0x40] sm:$0xff] %vm1359, %v1384
      %1401 = vst.msk [vmem:[#allocation3 + $0x48] sm:$0xff] %vm1359, %v1385
      %1402 = vst.msk [vmem:[#allocation3 + $0x50] sm:$0xff] %vm1359, %v1386
      %1403 = vst.msk [vmem:[#allocation3 + $0x58] sm:$0xff] %vm1359, %v1387
      %1404 = vst.msk [vmem:[#allocation3 + $0x60] sm:$0xff] %vm1359, %v1388
      %1405 = vst.msk [vmem:[#allocation3 + $0x68] sm:$0xff] %vm1359, %v1389
      %1406 = vst.msk [vmem:[#allocation3 + $0x70] sm:$0xff] %vm1359, %v1390
      %1407 = vst.msk [vmem:[#allocation3 + $0x78] sm:$0xff] %vm1359, %v1391
      %vm1408 = vcmp.eq.f32.partialorder %v572, %v1313
      %vm1409 = vcmp.eq.f32.partialorder %v588, %v1313
      %vm1410 = vcmp.eq.f32.partialorder %v573, %v1316
      %vm1411 = vcmp.eq.f32.partialorder %v588, %v1316
      %vm1412 = vcmp.eq.f32.partialorder %v574, %v1319
      %vm1413 = vcmp.eq.f32.partialorder %v588, %v1319
      %vm1414 = vcmp.eq.f32.partialorder %v575, %v1322
      %vm1415 = vcmp.eq.f32.partialorder %v588, %v1322
      %vm1416 = vcmp.eq.f32.partialorder %v576, %v1325
      %vm1417 = vcmp.eq.f32.partialorder %v588, %v1325
      %vm1418 = vcmp.eq.f32.partialorder %v577, %v1328
      %vm1419 = vcmp.eq.f32.partialorder %v588, %v1328
      %vm1420 = vcmp.eq.f32.partialorder %v578, %v1331
      %vm1421 = vcmp.eq.f32.partialorder %v588, %v1331
      %vm1422 = vcmp.eq.f32.partialorder %v579, %v1334
      %vm1423 = vcmp.eq.f32.partialorder %v588, %v1334
      %vm1424 = vcmp.eq.f32.partialorder %v580, %v1337
      %vm1425 = vcmp.eq.f32.partialorder %v588, %v1337
      %vm1426 = vcmp.eq.f32.partialorder %v581, %v1340
      %vm1427 = vcmp.eq.f32.partialorder %v588, %v1340
      %vm1428 = vcmp.eq.f32.partialorder %v582, %v1343
      %vm1429 = vcmp.eq.f32.partialorder %v588, %v1343
      %vm1430 = vcmp.eq.f32.partialorder %v583, %v1346
      %vm1431 = vcmp.eq.f32.partialorder %v588, %v1346
      %vm1432 = vcmp.eq.f32.partialorder %v584, %v1349
      %vm1433 = vcmp.eq.f32.partialorder %v588, %v1349
      %vm1434 = vcmp.eq.f32.partialorder %v585, %v1352
      %vm1435 = vcmp.eq.f32.partialorder %v588, %v1352
      %vm1436 = vcmp.eq.f32.partialorder %v586, %v1355
      %vm1437 = vcmp.eq.f32.partialorder %v588, %v1355
      %vm1438 = vcmp.eq.f32.partialorder %v587, %v1358
      %vm1439 = vcmp.eq.f32.partialorder %v588, %v1358
      %vm1440 = vmand %vm1247, %vm1408
      %vm1441 = vmand %vm1248, %vm1409
      %vm1442 = vmand %vm1249, %vm1410
      %vm1443 = vmand %vm1250, %vm1411
      %vm1444 = vmand %vm1251, %vm1412
      %vm1445 = vmand %vm1252, %vm1413
      %vm1446 = vmand %vm1253, %vm1414
      %vm1447 = vmand %vm1254, %vm1415
      %vm1448 = vmand %vm1255, %vm1416
      %vm1449 = vmand %vm1256, %vm1417
      %vm1450 = vmand %vm1257, %vm1418
      %vm1451 = vmand %vm1258, %vm1419
      %vm1452 = vmand %vm1259, %vm1420
      %vm1453 = vmand %vm1260, %vm1421
      %vm1454 = vmand %vm1261, %vm1422
      %vm1455 = vmand %vm1262, %vm1423
      %vm1456 = vmand %vm1263, %vm1424
      %vm1457 = vmand %vm1264, %vm1425
      %vm1458 = vmand %vm1265, %vm1426
      %vm1459 = vmand %vm1266, %vm1427
      %vm1460 = vmand %vm1267, %vm1428
      %vm1461 = vmand %vm1268, %vm1429
      %vm1462 = vmand %vm1269, %vm1430
      %vm1463 = vmand %vm1270, %vm1431
      %vm1464 = vmand %vm1271, %vm1432
      %vm1465 = vmand %vm1272, %vm1433
      %vm1466 = vmand %vm1273, %vm1434
      %vm1467 = vmand %vm1274, %vm1435
      %vm1468 = vmand %vm1275, %vm1436
      %vm1469 = vmand %vm1276, %vm1437
      %vm1470 = vmand %vm1277, %vm1438
      %vm1471 = vmand %vm1278, %vm1439
      %v1472 = vsel %vm1440, -inf, %v1167
      %v1473 = vsel %vm1441, -inf, %v1168
      %v1474 = vsel %vm1442, -inf, %v1169
      %v1475 = vsel %vm1443, -inf, %v1170
      %v1476 = vsel %vm1444, -inf, %v1171
      %v1477 = vsel %vm1445, -inf, %v1172
      %v1478 = vsel %vm1446, -inf, %v1173
      %v1479 = vsel %vm1447, -inf, %v1174
      %v1480 = vsel %vm1448, -inf, %v1175
      %v1481 = vsel %vm1449, -inf, %v1176
      %v1482 = vsel %vm1450, -inf, %v1177
      %v1483 = vsel %vm1451, -inf, %v1178
      %v1484 = vsel %vm1452, -inf, %v1179
      %v1485 = vsel %vm1453, -inf, %v1180
      %v1486 = vsel %vm1454, -inf, %v1181
      %v1487 = vsel %vm1455, -inf, %v1182
      %v1488 = vsel %vm1456, -inf, %v1183
      %v1489 = vsel %vm1457, -inf, %v1184
      %v1490 = vsel %vm1458, -inf, %v1185
      %v1491 = vsel %vm1459, -inf, %v1186
      %v1492 = vsel %vm1460, -inf, %v1187
      %v1493 = vsel %vm1461, -inf, %v1188
      %v1494 = vsel %vm1462, -inf, %v1189
      %v1495 = vsel %vm1463, -inf, %v1190
      %v1496 = vsel %vm1464, -inf, %v1191
      %v1497 = vsel %vm1465, -inf, %v1192
      %v1498 = vsel %vm1466, -inf, %v1193
      %v1499 = vsel %vm1467, -inf, %v1194
      %v1500 = vsel %vm1468, -inf, %v1195
      %v1501 = vsel %vm1469, -inf, %v1196
      %v1502 = vsel %vm1470, -inf, %v1197
      %v1503 = vsel %vm1471, -inf, %v1198
      %v1504 = vmax.f32 %v1472, %v1473
      %1505 = vmax.xlane.f32.xlu0 %v1504
      %v1506 = vpop.xlane.xlu0 %1505
      %v1507 = vmax.f32 %v1474, %v1475
      %1508 = vmax.xlane.f32.xlu0 %v1507
      %v1509 = vpop.xlane.xlu0 %1508
      %v1510 = vmax.f32 %v1476, %v1477
      %1511 = vmax.xlane.f32.xlu0 %v1510
      %v1512 = vpop.xlane.xlu0 %1511
      %v1513 = vmax.f32 %v1478, %v1479
      %1514 = vmax.xlane.f32.xlu0 %v1513
      %v1515 = vpop.xlane.xlu0 %1514
      %v1516 = vmax.f32 %v1480, %v1481
      %1517 = vmax.xlane.f32.xlu0 %v1516
      %v1518 = vpop.xlane.xlu0 %1517
      %v1519 = vmax.f32 %v1482, %v1483
      %1520 = vmax.xlane.f32.xlu0 %v1519
      %v1521 = vpop.xlane.xlu0 %1520
      %v1522 = vmax.f32 %v1484, %v1485
      %1523 = vmax.xlane.f32.xlu0 %v1522
      %v1524 = vpop.xlane.xlu0 %1523
      %v1525 = vmax.f32 %v1486, %v1487
      %1526 = vmax.xlane.f32.xlu0 %v1525
      %v1527 = vpop.xlane.xlu0 %1526
      %v1528 = vmax.f32 %v1488, %v1489
      %1529 = vmax.xlane.f32.xlu0 %v1528
      %v1530 = vpop.xlane.xlu0 %1529
      %v1531 = vmax.f32 %v1490, %v1491
      %1532 = vmax.xlane.f32.xlu0 %v1531
      %v1533 = vpop.xlane.xlu0 %1532
      %v1534 = vmax.f32 %v1492, %v1493
      %1535 = vmax.xlane.f32.xlu0 %v1534
      %v1536 = vpop.xlane.xlu0 %1535
      %v1537 = vmax.f32 %v1494, %v1495
      %1538 = vmax.xlane.f32.xlu0 %v1537
      %v1539 = vpop.xlane.xlu0 %1538
      %v1540 = vmax.f32 %v1496, %v1497
      %1541 = vmax.xlane.f32.xlu0 %v1540
      %v1542 = vpop.xlane.xlu0 %1541
      %v1543 = vmax.f32 %v1498, %v1499
      %1544 = vmax.xlane.f32.xlu0 %v1543
      %v1545 = vpop.xlane.xlu0 %1544
      %v1546 = vmax.f32 %v1500, %v1501
      %1547 = vmax.xlane.f32.xlu0 %v1546
      %v1548 = vpop.xlane.xlu0 %1547
      %v1549 = vmax.f32 %v1502, %v1503
      %1550 = vmax.xlane.f32.xlu0 %v1549
      %v1551 = vpop.xlane.xlu0 %1550
      %vm1552 = vcmp.eq.f32.partialorder %v1472, %v1506
      %vm1553 = vcmp.eq.f32.partialorder %v1473, %v1506
      %vm1554 = vcmp.eq.f32.partialorder %v1474, %v1509
      %vm1555 = vcmp.eq.f32.partialorder %v1475, %v1509
      %vm1556 = vcmp.eq.f32.partialorder %v1476, %v1512
      %vm1557 = vcmp.eq.f32.partialorder %v1477, %v1512
      %vm1558 = vcmp.eq.f32.partialorder %v1478, %v1515
      %vm1559 = vcmp.eq.f32.partialorder %v1479, %v1515
      %vm1560 = vcmp.eq.f32.partialorder %v1480, %v1518
      %vm1561 = vcmp.eq.f32.partialorder %v1481, %v1518
      %vm1562 = vcmp.eq.f32.partialorder %v1482, %v1521
      %vm1563 = vcmp.eq.f32.partialorder %v1483, %v1521
      %vm1564 = vcmp.eq.f32.partialorder %v1484, %v1524
      %vm1565 = vcmp.eq.f32.partialorder %v1485, %v1524
      %vm1566 = vcmp.eq.f32.partialorder %v1486, %v1527
      %vm1567 = vcmp.eq.f32.partialorder %v1487, %v1527
      %vm1568 = vcmp.eq.f32.partialorder %v1488, %v1530
      %vm1569 = vcmp.eq.f32.partialorder %v1489, %v1530
      %vm1570 = vcmp.eq.f32.partialorder %v1490, %v1533
      %vm1571 = vcmp.eq.f32.partialorder %v1491, %v1533
      %vm1572 = vcmp.eq.f32.partialorder %v1492, %v1536
      %vm1573 = vcmp.eq.f32.partialorder %v1493, %v1536
      %vm1574 = vcmp.eq.f32.partialorder %v1494, %v1539
      %vm1575 = vcmp.eq.f32.partialorder %v1495, %v1539
      %vm1576 = vcmp.eq.f32.partialorder %v1496, %v1542
      %vm1577 = vcmp.eq.f32.partialorder %v1497, %v1542
      %vm1578 = vcmp.eq.f32.partialorder %v1498, %v1545
      %vm1579 = vcmp.eq.f32.partialorder %v1499, %v1545
      %vm1580 = vcmp.eq.f32.partialorder %v1500, %v1548
      %vm1581 = vcmp.eq.f32.partialorder %v1501, %v1548
      %vm1582 = vcmp.eq.f32.partialorder %v1502, %v1551
      %vm1583 = vcmp.eq.f32.partialorder %v1503, %v1551
      %v1584 = vsel %vm1552, %v572, 3e+38
      %v1585 = vsel %vm1553, %v588, 3e+38
      %v1586 = vsel %vm1554, %v573, 3e+38
      %v1587 = vsel %vm1555, %v588, 3e+38
      %v1588 = vsel %vm1556, %v574, 3e+38
      %v1589 = vsel %vm1557, %v588, 3e+38
      %v1590 = vsel %vm1558, %v575, 3e+38
      %v1591 = vsel %vm1559, %v588, 3e+38
      %v1592 = vsel %vm1560, %v576, 3e+38
      %v1593 = vsel %vm1561, %v588, 3e+38
      %v1594 = vsel %vm1562, %v577, 3e+38
      %v1595 = vsel %vm1563, %v588, 3e+38
      %v1596 = vsel %vm1564, %v578, 3e+38
      %v1597 = vsel %vm1565, %v588, 3e+38
      %v1598 = vsel %vm1566, %v579, 3e+38
      %v1599 = vsel %vm1567, %v588, 3e+38
      %v1600 = vsel %vm1568, %v580, 3e+38
      %v1601 = vsel %vm1569, %v588, 3e+38
      %v1602 = vsel %vm1570, %v581, 3e+38
      %v1603 = vsel %vm1571, %v588, 3e+38
      %v1604 = vsel %vm1572, %v582, 3e+38
      %v1605 = vsel %vm1573, %v588, 3e+38
      %v1606 = vsel %vm1574, %v583, 3e+38
      %v1607 = vsel %vm1575, %v588, 3e+38
      %v1608 = vsel %vm1576, %v584, 3e+38
      %v1609 = vsel %vm1577, %v588, 3e+38
      %v1610 = vsel %vm1578, %v585, 3e+38
      %v1611 = vsel %vm1579, %v588, 3e+38
      %v1612 = vsel %vm1580, %v586, 3e+38
      %v1613 = vsel %vm1581, %v588, 3e+38
      %v1614 = vsel %vm1582, %v587, 3e+38
      %v1615 = vsel %vm1583, %v588, 3e+38
      %v1616 = vmin.f32 %v1584, %v1585
      %1617 = vmin.xlane.f32.xlu0 %v1616
      %v1618 = vpop.xlane.xlu0 %1617
      %v1619 = vmin.f32 %v1586, %v1587
      %1620 = vmin.xlane.f32.xlu0 %v1619
      %v1621 = vpop.xlane.xlu0 %1620
      %v1622 = vmin.f32 %v1588, %v1589
      %1623 = vmin.xlane.f32.xlu0 %v1622
      %v1624 = vpop.xlane.xlu0 %1623
      %v1625 = vmin.f32 %v1590, %v1591
      %1626 = vmin.xlane.f32.xlu0 %v1625
      %v1627 = vpop.xlane.xlu0 %1626
      %v1628 = vmin.f32 %v1592, %v1593
      %1629 = vmin.xlane.f32.xlu0 %v1628
      %v1630 = vpop.xlane.xlu0 %1629
      %v1631 = vmin.f32 %v1594, %v1595
      %1632 = vmin.xlane.f32.xlu0 %v1631
      %v1633 = vpop.xlane.xlu0 %1632
      %v1634 = vmin.f32 %v1596, %v1597
      %1635 = vmin.xlane.f32.xlu0 %v1634
      %v1636 = vpop.xlane.xlu0 %1635
      %v1637 = vmin.f32 %v1598, %v1599
      %1638 = vmin.xlane.f32.xlu0 %v1637
      %v1639 = vpop.xlane.xlu0 %1638
      %v1640 = vmin.f32 %v1600, %v1601
      %1641 = vmin.xlane.f32.xlu0 %v1640
      %v1642 = vpop.xlane.xlu0 %1641
      %v1643 = vmin.f32 %v1602, %v1603
      %1644 = vmin.xlane.f32.xlu0 %v1643
      %v1645 = vpop.xlane.xlu0 %1644
      %v1646 = vmin.f32 %v1604, %v1605
      %1647 = vmin.xlane.f32.xlu0 %v1646
      %v1648 = vpop.xlane.xlu0 %1647
      %v1649 = vmin.f32 %v1606, %v1607
      %1650 = vmin.xlane.f32.xlu0 %v1649
      %v1651 = vpop.xlane.xlu0 %1650
      %v1652 = vmin.f32 %v1608, %v1609
      %1653 = vmin.xlane.f32.xlu0 %v1652
      %v1654 = vpop.xlane.xlu0 %1653
      %v1655 = vmin.f32 %v1610, %v1611
      %1656 = vmin.xlane.f32.xlu0 %v1655
      %v1657 = vpop.xlane.xlu0 %1656
      %v1658 = vmin.f32 %v1612, %v1613
      %1659 = vmin.xlane.f32.xlu0 %v1658
      %v1660 = vpop.xlane.xlu0 %1659
      %v1661 = vmin.f32 %v1614, %v1615
      %1662 = vmin.xlane.f32.xlu0 %v1661
      %v1663 = vpop.xlane.xlu0 %1662
      %vm1664 = vcmask 31768
      %1665 = vst.msk [vmem:[#allocation2] sm:$0xff] %vm1664, %v1506
      %1666 = vst.msk [vmem:[#allocation2 + $0x8] sm:$0xff] %vm1664, %v1509
      %1667 = vst.msk [vmem:[#allocation2 + $0x10] sm:$0xff] %vm1664, %v1512
      %1668 = vst.msk [vmem:[#allocation2 + $0x18] sm:$0xff] %vm1664, %v1515
      %1669 = vst.msk [vmem:[#allocation2 + $0x20] sm:$0xff] %vm1664, %v1518
      %1670 = vst.msk [vmem:[#allocation2 + $0x28] sm:$0xff] %vm1664, %v1521
      %1671 = vst.msk [vmem:[#allocation2 + $0x30] sm:$0xff] %vm1664, %v1524
      %1672 = vst.msk [vmem:[#allocation2 + $0x38] sm:$0xff] %vm1664, %v1527
      %1673 = vst.msk [vmem:[#allocation2 + $0x40] sm:$0xff] %vm1664, %v1530
      %1674 = vst.msk [vmem:[#allocation2 + $0x48] sm:$0xff] %vm1664, %v1533
      %1675 = vst.msk [vmem:[#allocation2 + $0x50] sm:$0xff] %vm1664, %v1536
      %1676 = vst.msk [vmem:[#allocation2 + $0x58] sm:$0xff] %vm1664, %v1539
      %1677 = vst.msk [vmem:[#allocation2 + $0x60] sm:$0xff] %vm1664, %v1542
      %1678 = vst.msk [vmem:[#allocation2 + $0x68] sm:$0xff] %vm1664, %v1545
      %1679 = vst.msk [vmem:[#allocation2 + $0x70] sm:$0xff] %vm1664, %v1548
      %1680 = vst.msk [vmem:[#allocation2 + $0x78] sm:$0xff] %vm1664, %v1551
      %v1681 = vcvt.f32.s32.to.zero.pseudo %v1618
      %v1682 = vcvt.f32.s32.to.zero.pseudo %v1621
      %v1683 = vcvt.f32.s32.to.zero.pseudo %v1624
      %v1684 = vcvt.f32.s32.to.zero.pseudo %v1627
      %v1685 = vcvt.f32.s32.to.zero.pseudo %v1630
      %v1686 = vcvt.f32.s32.to.zero.pseudo %v1633
      %v1687 = vcvt.f32.s32.to.zero.pseudo %v1636
      %v1688 = vcvt.f32.s32.to.zero.pseudo %v1639
      %v1689 = vcvt.f32.s32.to.zero.pseudo %v1642
      %v1690 = vcvt.f32.s32.to.zero.pseudo %v1645
      %v1691 = vcvt.f32.s32.to.zero.pseudo %v1648
      %v1692 = vcvt.f32.s32.to.zero.pseudo %v1651
      %v1693 = vcvt.f32.s32.to.zero.pseudo %v1654
      %v1694 = vcvt.f32.s32.to.zero.pseudo %v1657
      %v1695 = vcvt.f32.s32.to.zero.pseudo %v1660
      %v1696 = vcvt.f32.s32.to.zero.pseudo %v1663
      %1697 = vst.msk [vmem:[#allocation3] sm:$0xff] %vm1664, %v1681
      %1698 = vst.msk [vmem:[#allocation3 + $0x8] sm:$0xff] %vm1664, %v1682
      %1699 = vst.msk [vmem:[#allocation3 + $0x10] sm:$0xff] %vm1664, %v1683
      %1700 = vst.msk [vmem:[#allocation3 + $0x18] sm:$0xff] %vm1664, %v1684
      %1701 = vst.msk [vmem:[#allocation3 + $0x20] sm:$0xff] %vm1664, %v1685
      %1702 = vst.msk [vmem:[#allocation3 + $0x28] sm:$0xff] %vm1664, %v1686
      %1703 = vst.msk [vmem:[#allocation3 + $0x30] sm:$0xff] %vm1664, %v1687
      %1704 = vst.msk [vmem:[#allocation3 + $0x38] sm:$0xff] %vm1664, %v1688
      %1705 = vst.msk [vmem:[#allocation3 + $0x40] sm:$0xff] %vm1664, %v1689
      %1706 = vst.msk [vmem:[#allocation3 + $0x48] sm:$0xff] %vm1664, %v1690
      %1707 = vst.msk [vmem:[#allocation3 + $0x50] sm:$0xff] %vm1664, %v1691
      %1708 = vst.msk [vmem:[#allocation3 + $0x58] sm:$0xff] %vm1664, %v1692
      %1709 = vst.msk [vmem:[#allocation3 + $0x60] sm:$0xff] %vm1664, %v1693
      %1710 = vst.msk [vmem:[#allocation3 + $0x68] sm:$0xff] %vm1664, %v1694
      %1711 = vst.msk [vmem:[#allocation3 + $0x70] sm:$0xff] %vm1664, %v1695
      %1712 = vst.msk [vmem:[#allocation3 + $0x78] sm:$0xff] %vm1664, %v1696
      %vm1713 = vcmp.eq.f32.partialorder %v572, %v1618
      %vm1714 = vcmp.eq.f32.partialorder %v588, %v1618
      %vm1715 = vcmp.eq.f32.partialorder %v573, %v1621
      %vm1716 = vcmp.eq.f32.partialorder %v588, %v1621
      %vm1717 = vcmp.eq.f32.partialorder %v574, %v1624
      %vm1718 = vcmp.eq.f32.partialorder %v588, %v1624
      %vm1719 = vcmp.eq.f32.partialorder %v575, %v1627
      %vm1720 = vcmp.eq.f32.partialorder %v588, %v1627
      %vm1721 = vcmp.eq.f32.partialorder %v576, %v1630
      %vm1722 = vcmp.eq.f32.partialorder %v588, %v1630
      %vm1723 = vcmp.eq.f32.partialorder %v577, %v1633
      %vm1724 = vcmp.eq.f32.partialorder %v588, %v1633
      %vm1725 = vcmp.eq.f32.partialorder %v578, %v1636
      %vm1726 = vcmp.eq.f32.partialorder %v588, %v1636
      %vm1727 = vcmp.eq.f32.partialorder %v579, %v1639
      %vm1728 = vcmp.eq.f32.partialorder %v588, %v1639
      %vm1729 = vcmp.eq.f32.partialorder %v580, %v1642
      %vm1730 = vcmp.eq.f32.partialorder %v588, %v1642
      %vm1731 = vcmp.eq.f32.partialorder %v581, %v1645
      %vm1732 = vcmp.eq.f32.partialorder %v588, %v1645
      %vm1733 = vcmp.eq.f32.partialorder %v582, %v1648
      %vm1734 = vcmp.eq.f32.partialorder %v588, %v1648
      %vm1735 = vcmp.eq.f32.partialorder %v583, %v1651
      %vm1736 = vcmp.eq.f32.partialorder %v588, %v1651
      %vm1737 = vcmp.eq.f32.partialorder %v584, %v1654
      %vm1738 = vcmp.eq.f32.partialorder %v588, %v1654
      %vm1739 = vcmp.eq.f32.partialorder %v585, %v1657
      %vm1740 = vcmp.eq.f32.partialorder %v588, %v1657
      %vm1741 = vcmp.eq.f32.partialorder %v586, %v1660
      %vm1742 = vcmp.eq.f32.partialorder %v588, %v1660
      %vm1743 = vcmp.eq.f32.partialorder %v587, %v1663
      %vm1744 = vcmp.eq.f32.partialorder %v588, %v1663
      %vm1745 = vmand %vm1552, %vm1713
      %vm1746 = vmand %vm1553, %vm1714
      %vm1747 = vmand %vm1554, %vm1715
      %vm1748 = vmand %vm1555, %vm1716
      %vm1749 = vmand %vm1556, %vm1717
      %vm1750 = vmand %vm1557, %vm1718
      %vm1751 = vmand %vm1558, %vm1719
      %vm1752 = vmand %vm1559, %vm1720
      %vm1753 = vmand %vm1560, %vm1721
      %vm1754 = vmand %vm1561, %vm1722
      %vm1755 = vmand %vm1562, %vm1723
      %vm1756 = vmand %vm1563, %vm1724
      %vm1757 = vmand %vm1564, %vm1725
      %vm1758 = vmand %vm1565, %vm1726
      %vm1759 = vmand %vm1566, %vm1727
      %vm1760 = vmand %vm1567, %vm1728
      %vm1761 = vmand %vm1568, %vm1729
      %vm1762 = vmand %vm1569, %vm1730
      %vm1763 = vmand %vm1570, %vm1731
      %vm1764 = vmand %vm1571, %vm1732
      %vm1765 = vmand %vm1572, %vm1733
      %vm1766 = vmand %vm1573, %vm1734
      %vm1767 = vmand %vm1574, %vm1735
      %vm1768 = vmand %vm1575, %vm1736
      %vm1769 = vmand %vm1576, %vm1737
      %vm1770 = vmand %vm1577, %vm1738
      %vm1771 = vmand %vm1578, %vm1739
      %vm1772 = vmand %vm1579, %vm1740
      %vm1773 = vmand %vm1580, %vm1741
      %vm1774 = vmand %vm1581, %vm1742
      %vm1775 = vmand %vm1582, %vm1743
      %vm1776 = vmand %vm1583, %vm1744
      %v1777 = vsel %vm1745, -inf, %v1472
      %v1778 = vsel %vm1746, -inf, %v1473
      %v1779 = vsel %vm1747, -inf, %v1474
      %v1780 = vsel %vm1748, -inf, %v1475
      %v1781 = vsel %vm1749, -inf, %v1476
      %v1782 = vsel %vm1750, -inf, %v1477
      %v1783 = vsel %vm1751, -inf, %v1478
      %v1784 = vsel %vm1752, -inf, %v1479
      %v1785 = vsel %vm1753, -inf, %v1480
      %v1786 = vsel %vm1754, -inf, %v1481
      %v1787 = vsel %vm1755, -inf, %v1482
      %v1788 = vsel %vm1756, -inf, %v1483
      %v1789 = vsel %vm1757, -inf, %v1484
      %v1790 = vsel %vm1758, -inf, %v1485
      %v1791 = vsel %vm1759, -inf, %v1486
      %v1792 = vsel %vm1760, -inf, %v1487
      %v1793 = vsel %vm1761, -inf, %v1488
      %v1794 = vsel %vm1762, -inf, %v1489
      %v1795 = vsel %vm1763, -inf, %v1490
      %v1796 = vsel %vm1764, -inf, %v1491
      %v1797 = vsel %vm1765, -inf, %v1492
      %v1798 = vsel %vm1766, -inf, %v1493
      %v1799 = vsel %vm1767, -inf, %v1494
      %v1800 = vsel %vm1768, -inf, %v1495
      %v1801 = vsel %vm1769, -inf, %v1496
      %v1802 = vsel %vm1770, -inf, %v1497
      %v1803 = vsel %vm1771, -inf, %v1498
      %v1804 = vsel %vm1772, -inf, %v1499
      %v1805 = vsel %vm1773, -inf, %v1500
      %v1806 = vsel %vm1774, -inf, %v1501
      %v1807 = vsel %vm1775, -inf, %v1502
      %v1808 = vsel %vm1776, -inf, %v1503
      %v1809 = vmax.f32 %v1777, %v1778
      %1810 = vmax.xlane.f32.xlu0 %v1809
      %v1811 = vpop.xlane.xlu0 %1810
      %v1812 = vmax.f32 %v1779, %v1780
      %1813 = vmax.xlane.f32.xlu0 %v1812
      %v1814 = vpop.xlane.xlu0 %1813
      %v1815 = vmax.f32 %v1781, %v1782
      %1816 = vmax.xlane.f32.xlu0 %v1815
      %v1817 = vpop.xlane.xlu0 %1816
      %v1818 = vmax.f32 %v1783, %v1784
      %1819 = vmax.xlane.f32.xlu0 %v1818
      %v1820 = vpop.xlane.xlu0 %1819
      %v1821 = vmax.f32 %v1785, %v1786
      %1822 = vmax.xlane.f32.xlu0 %v1821
      %v1823 = vpop.xlane.xlu0 %1822
      %v1824 = vmax.f32 %v1787, %v1788
      %1825 = vmax.xlane.f32.xlu0 %v1824
      %v1826 = vpop.xlane.xlu0 %1825
      %v1827 = vmax.f32 %v1789, %v1790
      %1828 = vmax.xlane.f32.xlu0 %v1827
      %v1829 = vpop.xlane.xlu0 %1828
      %v1830 = vmax.f32 %v1791, %v1792
      %1831 = vmax.xlane.f32.xlu0 %v1830
      %v1832 = vpop.xlane.xlu0 %1831
      %v1833 = vmax.f32 %v1793, %v1794
      %1834 = vmax.xlane.f32.xlu0 %v1833
      %v1835 = vpop.xlane.xlu0 %1834
      %v1836 = vmax.f32 %v1795, %v1796
      %1837 = vmax.xlane.f32.xlu0 %v1836
      %v1838 = vpop.xlane.xlu0 %1837
      %v1839 = vmax.f32 %v1797, %v1798
      %1840 = vmax.xlane.f32.xlu0 %v1839
      %v1841 = vpop.xlane.xlu0 %1840
      %v1842 = vmax.f32 %v1799, %v1800
      %1843 = vmax.xlane.f32.xlu0 %v1842
      %v1844 = vpop.xlane.xlu0 %1843
      %v1845 = vmax.f32 %v1801, %v1802
      %1846 = vmax.xlane.f32.xlu0 %v1845
      %v1847 = vpop.xlane.xlu0 %1846
      %v1848 = vmax.f32 %v1803, %v1804
      %1849 = vmax.xlane.f32.xlu0 %v1848
      %v1850 = vpop.xlane.xlu0 %1849
      %v1851 = vmax.f32 %v1805, %v1806
      %1852 = vmax.xlane.f32.xlu0 %v1851
      %v1853 = vpop.xlane.xlu0 %1852
      %v1854 = vmax.f32 %v1807, %v1808
      %1855 = vmax.xlane.f32.xlu0 %v1854
      %v1856 = vpop.xlane.xlu0 %1855
      %vm1857 = vcmp.eq.f32.partialorder %v1777, %v1811
      %vm1858 = vcmp.eq.f32.partialorder %v1778, %v1811
      %vm1859 = vcmp.eq.f32.partialorder %v1779, %v1814
      %vm1860 = vcmp.eq.f32.partialorder %v1780, %v1814
      %vm1861 = vcmp.eq.f32.partialorder %v1781, %v1817
      %vm1862 = vcmp.eq.f32.partialorder %v1782, %v1817
      %vm1863 = vcmp.eq.f32.partialorder %v1783, %v1820
      %vm1864 = vcmp.eq.f32.partialorder %v1784, %v1820
      %vm1865 = vcmp.eq.f32.partialorder %v1785, %v1823
      %vm1866 = vcmp.eq.f32.partialorder %v1786, %v1823
      %vm1867 = vcmp.eq.f32.partialorder %v1787, %v1826
      %vm1868 = vcmp.eq.f32.partialorder %v1788, %v1826
      %vm1869 = vcmp.eq.f32.partialorder %v1789, %v1829
      %vm1870 = vcmp.eq.f32.partialorder %v1790, %v1829
      %vm1871 = vcmp.eq.f32.partialorder %v1791, %v1832
      %vm1872 = vcmp.eq.f32.partialorder %v1792, %v1832
      %vm1873 = vcmp.eq.f32.partialorder %v1793, %v1835
      %vm1874 = vcmp.eq.f32.partialorder %v1794, %v1835
      %vm1875 = vcmp.eq.f32.partialorder %v1795, %v1838
      %vm1876 = vcmp.eq.f32.partialorder %v1796, %v1838
      %vm1877 = vcmp.eq.f32.partialorder %v1797, %v1841
      %vm1878 = vcmp.eq.f32.partialorder %v1798, %v1841
      %vm1879 = vcmp.eq.f32.partialorder %v1799, %v1844
      %vm1880 = vcmp.eq.f32.partialorder %v1800, %v1844
      %vm1881 = vcmp.eq.f32.partialorder %v1801, %v1847
      %vm1882 = vcmp.eq.f32.partialorder %v1802, %v1847
      %vm1883 = vcmp.eq.f32.partialorder %v1803, %v1850
      %vm1884 = vcmp.eq.f32.partialorder %v1804, %v1850
      %vm1885 = vcmp.eq.f32.partialorder %v1805, %v1853
      %vm1886 = vcmp.eq.f32.partialorder %v1806, %v1853
      %vm1887 = vcmp.eq.f32.partialorder %v1807, %v1856
      %vm1888 = vcmp.eq.f32.partialorder %v1808, %v1856
      %v1889 = vsel %vm1857, %v572, 3e+38
      %v1890 = vsel %vm1858, %v588, 3e+38
      %v1891 = vsel %vm1859, %v573, 3e+38
      %v1892 = vsel %vm1860, %v588, 3e+38
      %v1893 = vsel %vm1861, %v574, 3e+38
      %v1894 = vsel %vm1862, %v588, 3e+38
      %v1895 = vsel %vm1863, %v575, 3e+38
      %v1896 = vsel %vm1864, %v588, 3e+38
      %v1897 = vsel %vm1865, %v576, 3e+38
      %v1898 = vsel %vm1866, %v588, 3e+38
      %v1899 = vsel %vm1867, %v577, 3e+38
      %v1900 = vsel %vm1868, %v588, 3e+38
      %v1901 = vsel %vm1869, %v578, 3e+38
      %v1902 = vsel %vm1870, %v588, 3e+38
      %v1903 = vsel %vm1871, %v579, 3e+38
      %v1904 = vsel %vm1872, %v588, 3e+38
      %v1905 = vsel %vm1873, %v580, 3e+38
      %v1906 = vsel %vm1874, %v588, 3e+38
      %v1907 = vsel %vm1875, %v581, 3e+38
      %v1908 = vsel %vm1876, %v588, 3e+38
      %v1909 = vsel %vm1877, %v582, 3e+38
      %v1910 = vsel %vm1878, %v588, 3e+38
      %v1911 = vsel %vm1879, %v583, 3e+38
      %v1912 = vsel %vm1880, %v588, 3e+38
      %v1913 = vsel %vm1881, %v584, 3e+38
      %v1914 = vsel %vm1882, %v588, 3e+38
      %v1915 = vsel %vm1883, %v585, 3e+38
      %v1916 = vsel %vm1884, %v588, 3e+38
      %v1917 = vsel %vm1885, %v586, 3e+38
      %v1918 = vsel %vm1886, %v588, 3e+38
      %v1919 = vsel %vm1887, %v587, 3e+38
      %v1920 = vsel %vm1888, %v588, 3e+38
      %v1921 = vmin.f32 %v1889, %v1890
      %1922 = vmin.xlane.f32.xlu0 %v1921
      %v1923 = vpop.xlane.xlu0 %1922
      %v1924 = vmin.f32 %v1891, %v1892
      %1925 = vmin.xlane.f32.xlu0 %v1924
      %v1926 = vpop.xlane.xlu0 %1925
      %v1927 = vmin.f32 %v1893, %v1894
      %1928 = vmin.xlane.f32.xlu0 %v1927
      %v1929 = vpop.xlane.xlu0 %1928
      %v1930 = vmin.f32 %v1895, %v1896
      %1931 = vmin.xlane.f32.xlu0 %v1930
      %v1932 = vpop.xlane.xlu0 %1931
      %v1933 = vmin.f32 %v1897, %v1898
      %1934 = vmin.xlane.f32.xlu0 %v1933
      %v1935 = vpop.xlane.xlu0 %1934
      %v1936 = vmin.f32 %v1899, %v1900
      %1937 = vmin.xlane.f32.xlu0 %v1936
      %v1938 = vpop.xlane.xlu0 %1937
      %v1939 = vmin.f32 %v1901, %v1902
      %1940 = vmin.xlane.f32.xlu0 %v1939
      %v1941 = vpop.xlane.xlu0 %1940
      %v1942 = vmin.f32 %v1903, %v1904
      %1943 = vmin.xlane.f32.xlu0 %v1942
      %v1944 = vpop.xlane.xlu0 %1943
      %v1945 = vmin.f32 %v1905, %v1906
      %1946 = vmin.xlane.f32.xlu0 %v1945
      %v1947 = vpop.xlane.xlu0 %1946
      %v1948 = vmin.f32 %v1907, %v1908
      %1949 = vmin.xlane.f32.xlu0 %v1948
      %v1950 = vpop.xlane.xlu0 %1949
      %v1951 = vmin.f32 %v1909, %v1910
      %1952 = vmin.xlane.f32.xlu0 %v1951
      %v1953 = vpop.xlane.xlu0 %1952
      %v1954 = vmin.f32 %v1911, %v1912
      %1955 = vmin.xlane.f32.xlu0 %v1954
      %v1956 = vpop.xlane.xlu0 %1955
      %v1957 = vmin.f32 %v1913, %v1914
      %1958 = vmin.xlane.f32.xlu0 %v1957
      %v1959 = vpop.xlane.xlu0 %1958
      %v1960 = vmin.f32 %v1915, %v1916
      %1961 = vmin.xlane.f32.xlu0 %v1960
      %v1962 = vpop.xlane.xlu0 %1961
      %v1963 = vmin.f32 %v1917, %v1918
      %1964 = vmin.xlane.f32.xlu0 %v1963
      %v1965 = vpop.xlane.xlu0 %1964
      %v1966 = vmin.f32 %v1919, %v1920
      %1967 = vmin.xlane.f32.xlu0 %v1966
      %v1968 = vpop.xlane.xlu0 %1967
      %vm1969 = vcmask 39968
      %1970 = vst.msk [vmem:[#allocation2] sm:$0xff] %vm1969, %v1811
      %1971 = vst.msk [vmem:[#allocation2 + $0x8] sm:$0xff] %vm1969, %v1814
      %1972 = vst.msk [vmem:[#allocation2 + $0x10] sm:$0xff] %vm1969, %v1817
      %1973 = vst.msk [vmem:[#allocation2 + $0x18] sm:$0xff] %vm1969, %v1820
      %1974 = vst.msk [vmem:[#allocation2 + $0x20] sm:$0xff] %vm1969, %v1823
      %1975 = vst.msk [vmem:[#allocation2 + $0x28] sm:$0xff] %vm1969, %v1826
      %1976 = vst.msk [vmem:[#allocation2 + $0x30] sm:$0xff] %vm1969, %v1829
      %1977 = vst.msk [vmem:[#allocation2 + $0x38] sm:$0xff] %vm1969, %v1832
      %1978 = vst.msk [vmem:[#allocation2 + $0x40] sm:$0xff] %vm1969, %v1835
      %1979 = vst.msk [vmem:[#allocation2 + $0x48] sm:$0xff] %vm1969, %v1838
      %1980 = vst.msk [vmem:[#allocation2 + $0x50] sm:$0xff] %vm1969, %v1841
      %1981 = vst.msk [vmem:[#allocation2 + $0x58] sm:$0xff] %vm1969, %v1844
      %1982 = vst.msk [vmem:[#allocation2 + $0x60] sm:$0xff] %vm1969, %v1847
      %1983 = vst.msk [vmem:[#allocation2 + $0x68] sm:$0xff] %vm1969, %v1850
      %1984 = vst.msk [vmem:[#allocation2 + $0x70] sm:$0xff] %vm1969, %v1853
      %1985 = vst.msk [vmem:[#allocation2 + $0x78] sm:$0xff] %vm1969, %v1856
      %v1986 = vcvt.f32.s32.to.zero.pseudo %v1923
      %v1987 = vcvt.f32.s32.to.zero.pseudo %v1926
      %v1988 = vcvt.f32.s32.to.zero.pseudo %v1929
      %v1989 = vcvt.f32.s32.to.zero.pseudo %v1932
      %v1990 = vcvt.f32.s32.to.zero.pseudo %v1935
      %v1991 = vcvt.f32.s32.to.zero.pseudo %v1938
      %v1992 = vcvt.f32.s32.to.zero.pseudo %v1941
      %v1993 = vcvt.f32.s32.to.zero.pseudo %v1944
      %v1994 = vcvt.f32.s32.to.zero.pseudo %v1947
      %v1995 = vcvt.f32.s32.to.zero.pseudo %v1950
      %v1996 = vcvt.f32.s32.to.zero.pseudo %v1953
      %v1997 = vcvt.f32.s32.to.zero.pseudo %v1956
      %v1998 = vcvt.f32.s32.to.zero.pseudo %v1959
      %v1999 = vcvt.f32.s32.to.zero.pseudo %v1962
      %v2000 = vcvt.f32.s32.to.zero.pseudo %v1965
      %v2001 = vcvt.f32.s32.to.zero.pseudo %v1968
      %2002 = vst.msk [vmem:[#allocation3] sm:$0xff] %vm1969, %v1986
      %2003 = vst.msk [vmem:[#allocation3 + $0x8] sm:$0xff] %vm1969, %v1987
      %2004 = vst.msk [vmem:[#allocation3 + $0x10] sm:$0xff] %vm1969, %v1988
      %2005 = vst.msk [vmem:[#allocation3 + $0x18] sm:$0xff] %vm1969, %v1989
      %2006 = vst.msk [vmem:[#allocation3 + $0x20] sm:$0xff] %vm1969, %v1990
      %2007 = vst.msk [vmem:[#allocation3 + $0x28] sm:$0xff] %vm1969, %v1991
      %2008 = vst.msk [vmem:[#allocation3 + $0x30] sm:$0xff] %vm1969, %v1992
      %2009 = vst.msk [vmem:[#allocation3 + $0x38] sm:$0xff] %vm1969, %v1993
      %2010 = vst.msk [vmem:[#allocation3 + $0x40] sm:$0xff] %vm1969, %v1994
      %2011 = vst.msk [vmem:[#allocation3 + $0x48] sm:$0xff] %vm1969, %v1995
      %2012 = vst.msk [vmem:[#allocation3 + $0x50] sm:$0xff] %vm1969, %v1996
      %2013 = vst.msk [vmem:[#allocation3 + $0x58] sm:$0xff] %vm1969, %v1997
      %2014 = vst.msk [vmem:[#allocation3 + $0x60] sm:$0xff] %vm1969, %v1998
      %2015 = vst.msk [vmem:[#allocation3 + $0x68] sm:$0xff] %vm1969, %v1999
      %2016 = vst.msk [vmem:[#allocation3 + $0x70] sm:$0xff] %vm1969, %v2000
      %2017 = vst.msk [vmem:[#allocation3 + $0x78] sm:$0xff] %vm1969, %v2001
      %vm2018 = vcmp.eq.f32.partialorder %v572, %v1923
      %vm2019 = vcmp.eq.f32.partialorder %v588, %v1923
      %vm2020 = vcmp.eq.f32.partialorder %v573, %v1926
      %vm2021 = vcmp.eq.f32.partialorder %v588, %v1926
      %vm2022 = vcmp.eq.f32.partialorder %v574, %v1929
      %vm2023 = vcmp.eq.f32.partialorder %v588, %v1929
      %vm2024 = vcmp.eq.f32.partialorder %v575, %v1932
      %vm2025 = vcmp.eq.f32.partialorder %v588, %v1932
      %vm2026 = vcmp.eq.f32.partialorder %v576, %v1935
      %vm2027 = vcmp.eq.f32.partialorder %v588, %v1935
      %vm2028 = vcmp.eq.f32.partialorder %v577, %v1938
      %vm2029 = vcmp.eq.f32.partialorder %v588, %v1938
      %vm2030 = vcmp.eq.f32.partialorder %v578, %v1941
      %vm2031 = vcmp.eq.f32.partialorder %v588, %v1941
      %vm2032 = vcmp.eq.f32.partialorder %v579, %v1944
      %vm2033 = vcmp.eq.f32.partialorder %v588, %v1944
      %vm2034 = vcmp.eq.f32.partialorder %v580, %v1947
      %vm2035 = vcmp.eq.f32.partialorder %v588, %v1947
      %vm2036 = vcmp.eq.f32.partialorder %v581, %v1950
      %vm2037 = vcmp.eq.f32.partialorder %v588, %v1950
      %vm2038 = vcmp.eq.f32.partialorder %v582, %v1953
      %vm2039 = vcmp.eq.f32.partialorder %v588, %v1953
      %vm2040 = vcmp.eq.f32.partialorder %v583, %v1956
      %vm2041 = vcmp.eq.f32.partialorder %v588, %v1956
      %vm2042 = vcmp.eq.f32.partialorder %v584, %v1959
      %vm2043 = vcmp.eq.f32.partialorder %v588, %v1959
      %vm2044 = vcmp.eq.f32.partialorder %v585, %v1962
      %vm2045 = vcmp.eq.f32.partialorder %v588, %v1962
      %vm2046 = vcmp.eq.f32.partialorder %v586, %v1965
      %vm2047 = vcmp.eq.f32.partialorder %v588, %v1965
      %vm2048 = vcmp.eq.f32.partialorder %v587, %v1968
      %vm2049 = vcmp.eq.f32.partialorder %v588, %v1968
      %vm2050 = vmand %vm1857, %vm2018
      %vm2051 = vmand %vm1858, %vm2019
      %vm2052 = vmand %vm1859, %vm2020
      %vm2053 = vmand %vm1860, %vm2021
      %vm2054 = vmand %vm1861, %vm2022
      %vm2055 = vmand %vm1862, %vm2023
      %vm2056 = vmand %vm1863, %vm2024
      %vm2057 = vmand %vm1864, %vm2025
      %vm2058 = vmand %vm1865, %vm2026
      %vm2059 = vmand %vm1866, %vm2027
      %vm2060 = vmand %vm1867, %vm2028
      %vm2061 = vmand %vm1868, %vm2029
      %vm2062 = vmand %vm1869, %vm2030
      %vm2063 = vmand %vm1870, %vm2031
      %vm2064 = vmand %vm1871, %vm2032
      %vm2065 = vmand %vm1872, %vm2033
      %vm2066 = vmand %vm1873, %vm2034
      %vm2067 = vmand %vm1874, %vm2035
      %vm2068 = vmand %vm1875, %vm2036
      %vm2069 = vmand %vm1876, %vm2037
      %vm2070 = vmand %vm1877, %vm2038
      %vm2071 = vmand %vm1878, %vm2039
      %vm2072 = vmand %vm1879, %vm2040
      %vm2073 = vmand %vm1880, %vm2041
      %vm2074 = vmand %vm1881, %vm2042
      %vm2075 = vmand %vm1882, %vm2043
      %vm2076 = vmand %vm1883, %vm2044
      %vm2077 = vmand %vm1884, %vm2045
      %vm2078 = vmand %vm1885, %vm2046
      %vm2079 = vmand %vm1886, %vm2047
      %vm2080 = vmand %vm1887, %vm2048
      %vm2081 = vmand %vm1888, %vm2049
      %v2082 = vsel %vm2050, -inf, %v1777
      %v2083 = vsel %vm2051, -inf, %v1778
      %v2084 = vsel %vm2052, -inf, %v1779
      %v2085 = vsel %vm2053, -inf, %v1780
      %v2086 = vsel %vm2054, -inf, %v1781
      %v2087 = vsel %vm2055, -inf, %v1782
      %v2088 = vsel %vm2056, -inf, %v1783
      %v2089 = vsel %vm2057, -inf, %v1784
      %v2090 = vsel %vm2058, -inf, %v1785
      %v2091 = vsel %vm2059, -inf, %v1786
      %v2092 = vsel %vm2060, -inf, %v1787
      %v2093 = vsel %vm2061, -inf, %v1788
      %v2094 = vsel %vm2062, -inf, %v1789
      %v2095 = vsel %vm2063, -inf, %v1790
      %v2096 = vsel %vm2064, -inf, %v1791
      %v2097 = vsel %vm2065, -inf, %v1792
      %v2098 = vsel %vm2066, -inf, %v1793
      %v2099 = vsel %vm2067, -inf, %v1794
      %v2100 = vsel %vm2068, -inf, %v1795
      %v2101 = vsel %vm2069, -inf, %v1796
      %v2102 = vsel %vm2070, -inf, %v1797
      %v2103 = vsel %vm2071, -inf, %v1798
      %v2104 = vsel %vm2072, -inf, %v1799
      %v2105 = vsel %vm2073, -inf, %v1800
      %v2106 = vsel %vm2074, -inf, %v1801
      %v2107 = vsel %vm2075, -inf, %v1802
      %v2108 = vsel %vm2076, -inf, %v1803
      %v2109 = vsel %vm2077, -inf, %v1804
      %v2110 = vsel %vm2078, -inf, %v1805
      %v2111 = vsel %vm2079, -inf, %v1806
      %v2112 = vsel %vm2080, -inf, %v1807
      %v2113 = vsel %vm2081, -inf, %v1808
      %v2114 = vmax.f32 %v2082, %v2083
      %2115 = vmax.xlane.f32.xlu0 %v2114
      %v2116 = vpop.xlane.xlu0 %2115
      %v2117 = vmax.f32 %v2084, %v2085
      %2118 = vmax.xlane.f32.xlu0 %v2117
      %v2119 = vpop.xlane.xlu0 %2118
      %v2120 = vmax.f32 %v2086, %v2087
      %2121 = vmax.xlane.f32.xlu0 %v2120
      %v2122 = vpop.xlane.xlu0 %2121
      %v2123 = vmax.f32 %v2088, %v2089
      %2124 = vmax.xlane.f32.xlu0 %v2123
      %v2125 = vpop.xlane.xlu0 %2124
      %v2126 = vmax.f32 %v2090, %v2091
      %2127 = vmax.xlane.f32.xlu0 %v2126
      %v2128 = vpop.xlane.xlu0 %2127
      %v2129 = vmax.f32 %v2092, %v2093
      %2130 = vmax.xlane.f32.xlu0 %v2129
      %v2131 = vpop.xlane.xlu0 %2130
      %v2132 = vmax.f32 %v2094, %v2095
      %2133 = vmax.xlane.f32.xlu0 %v2132
      %v2134 = vpop.xlane.xlu0 %2133
      %v2135 = vmax.f32 %v2096, %v2097
      %2136 = vmax.xlane.f32.xlu0 %v2135
      %v2137 = vpop.xlane.xlu0 %2136
      %v2138 = vmax.f32 %v2098, %v2099
      %2139 = vmax.xlane.f32.xlu0 %v2138
      %v2140 = vpop.xlane.xlu0 %2139
      %v2141 = vmax.f32 %v2100, %v2101
      %2142 = vmax.xlane.f32.xlu0 %v2141
      %v2143 = vpop.xlane.xlu0 %2142
      %v2144 = vmax.f32 %v2102, %v2103
      %2145 = vmax.xlane.f32.xlu0 %v2144
      %v2146 = vpop.xlane.xlu0 %2145
      %v2147 = vmax.f32 %v2104, %v2105
      %2148 = vmax.xlane.f32.xlu0 %v2147
      %v2149 = vpop.xlane.xlu0 %2148
      %v2150 = vmax.f32 %v2106, %v2107
      %2151 = vmax.xlane.f32.xlu0 %v2150
      %v2152 = vpop.xlane.xlu0 %2151
      %v2153 = vmax.f32 %v2108, %v2109
      %2154 = vmax.xlane.f32.xlu0 %v2153
      %v2155 = vpop.xlane.xlu0 %2154
      %v2156 = vmax.f32 %v2110, %v2111
      %2157 = vmax.xlane.f32.xlu0 %v2156
      %v2158 = vpop.xlane.xlu0 %2157
      %v2159 = vmax.f32 %v2112, %v2113
      %2160 = vmax.xlane.f32.xlu0 %v2159
      %v2161 = vpop.xlane.xlu0 %2160
      %vm2162 = vcmp.eq.f32.partialorder %v2082, %v2116
      %vm2163 = vcmp.eq.f32.partialorder %v2083, %v2116
      %vm2164 = vcmp.eq.f32.partialorder %v2084, %v2119
      %vm2165 = vcmp.eq.f32.partialorder %v2085, %v2119
      %vm2166 = vcmp.eq.f32.partialorder %v2086, %v2122
      %vm2167 = vcmp.eq.f32.partialorder %v2087, %v2122
      %vm2168 = vcmp.eq.f32.partialorder %v2088, %v2125
      %vm2169 = vcmp.eq.f32.partialorder %v2089, %v2125
      %vm2170 = vcmp.eq.f32.partialorder %v2090, %v2128
      %vm2171 = vcmp.eq.f32.partialorder %v2091, %v2128
      %vm2172 = vcmp.eq.f32.partialorder %v2092, %v2131
      %vm2173 = vcmp.eq.f32.partialorder %v2093, %v2131
      %vm2174 = vcmp.eq.f32.partialorder %v2094, %v2134
      %vm2175 = vcmp.eq.f32.partialorder %v2095, %v2134
      %vm2176 = vcmp.eq.f32.partialorder %v2096, %v2137
      %vm2177 = vcmp.eq.f32.partialorder %v2097, %v2137
      %vm2178 = vcmp.eq.f32.partialorder %v2098, %v2140
      %vm2179 = vcmp.eq.f32.partialorder %v2099, %v2140
      %vm2180 = vcmp.eq.f32.partialorder %v2100, %v2143
      %vm2181 = vcmp.eq.f32.partialorder %v2101, %v2143
      %vm2182 = vcmp.eq.f32.partialorder %v2102, %v2146
      %vm2183 = vcmp.eq.f32.partialorder %v2103, %v2146
      %vm2184 = vcmp.eq.f32.partialorder %v2104, %v2149
      %vm2185 = vcmp.eq.f32.partialorder %v2105, %v2149
      %vm2186 = vcmp.eq.f32.partialorder %v2106, %v2152
      %vm2187 = vcmp.eq.f32.partialorder %v2107, %v2152
      %vm2188 = vcmp.eq.f32.partialorder %v2108, %v2155
      %vm2189 = vcmp.eq.f32.partialorder %v2109, %v2155
      %vm2190 = vcmp.eq.f32.partialorder %v2110, %v2158
      %vm2191 = vcmp.eq.f32.partialorder %v2111, %v2158
      %vm2192 = vcmp.eq.f32.partialorder %v2112, %v2161
      %vm2193 = vcmp.eq.f32.partialorder %v2113, %v2161
      %v2194 = vsel %vm2162, %v572, 3e+38
      %v2195 = vsel %vm2163, %v588, 3e+38
      %v2196 = vsel %vm2164, %v573, 3e+38
      %v2197 = vsel %vm2165, %v588, 3e+38
      %v2198 = vsel %vm2166, %v574, 3e+38
      %v2199 = vsel %vm2167, %v588, 3e+38
      %v2200 = vsel %vm2168, %v575, 3e+38
      %v2201 = vsel %vm2169, %v588, 3e+38
      %v2202 = vsel %vm2170, %v576, 3e+38
      %v2203 = vsel %vm2171, %v588, 3e+38
      %v2204 = vsel %vm2172, %v577, 3e+38
      %v2205 = vsel %vm2173, %v588, 3e+38
      %v2206 = vsel %vm2174, %v578, 3e+38
      %v2207 = vsel %vm2175, %v588, 3e+38
      %v2208 = vsel %vm2176, %v579, 3e+38
      %v2209 = vsel %vm2177, %v588, 3e+38
      %v2210 = vsel %vm2178, %v580, 3e+38
      %v2211 = vsel %vm2179, %v588, 3e+38
      %v2212 = vsel %vm2180, %v581, 3e+38
      %v2213 = vsel %vm2181, %v588, 3e+38
      %v2214 = vsel %vm2182, %v582, 3e+38
      %v2215 = vsel %vm2183, %v588, 3e+38
      %v2216 = vsel %vm2184, %v583, 3e+38
      %v2217 = vsel %vm2185, %v588, 3e+38
      %v2218 = vsel %vm2186, %v584, 3e+38
      %v2219 = vsel %vm2187, %v588, 3e+38
      %v2220 = vsel %vm2188, %v585, 3e+38
      %v2221 = vsel %vm2189, %v588, 3e+38
      %v2222 = vsel %vm2190, %v586, 3e+38
      %v2223 = vsel %vm2191, %v588, 3e+38
      %v2224 = vsel %vm2192, %v587, 3e+38
      %v2225 = vsel %vm2193, %v588, 3e+38
      %v2226 = vmin.f32 %v2194, %v2195
      %2227 = vmin.xlane.f32.xlu0 %v2226
      %v2228 = vpop.xlane.xlu0 %2227
      %v2229 = vmin.f32 %v2196, %v2197
      %2230 = vmin.xlane.f32.xlu0 %v2229
      %v2231 = vpop.xlane.xlu0 %2230
      %v2232 = vmin.f32 %v2198, %v2199
      %2233 = vmin.xlane.f32.xlu0 %v2232
      %v2234 = vpop.xlane.xlu0 %2233
      %v2235 = vmin.f32 %v2200, %v2201
      %2236 = vmin.xlane.f32.xlu0 %v2235
      %v2237 = vpop.xlane.xlu0 %2236
      %v2238 = vmin.f32 %v2202, %v2203
      %2239 = vmin.xlane.f32.xlu0 %v2238
      %v2240 = vpop.xlane.xlu0 %2239
      %v2241 = vmin.f32 %v2204, %v2205
      %2242 = vmin.xlane.f32.xlu0 %v2241
      %v2243 = vpop.xlane.xlu0 %2242
      %v2244 = vmin.f32 %v2206, %v2207
      %2245 = vmin.xlane.f32.xlu0 %v2244
      %v2246 = vpop.xlane.xlu0 %2245
      %v2247 = vmin.f32 %v2208, %v2209
      %2248 = vmin.xlane.f32.xlu0 %v2247
      %v2249 = vpop.xlane.xlu0 %2248
      %v2250 = vmin.f32 %v2210, %v2211
      %2251 = vmin.xlane.f32.xlu0 %v2250
      %v2252 = vpop.xlane.xlu0 %2251
      %v2253 = vmin.f32 %v2212, %v2213
      %2254 = vmin.xlane.f32.xlu0 %v2253
      %v2255 = vpop.xlane.xlu0 %2254
      %v2256 = vmin.f32 %v2214, %v2215
      %2257 = vmin.xlane.f32.xlu0 %v2256
      %v2258 = vpop.xlane.xlu0 %2257
      %v2259 = vmin.f32 %v2216, %v2217
      %2260 = vmin.xlane.f32.xlu0 %v2259
      %v2261 = vpop.xlane.xlu0 %2260
      %v2262 = vmin.f32 %v2218, %v2219
      %2263 = vmin.xlane.f32.xlu0 %v2262
      %v2264 = vpop.xlane.xlu0 %2263
      %v2265 = vmin.f32 %v2220, %v2221
      %2266 = vmin.xlane.f32.xlu0 %v2265
      %v2267 = vpop.xlane.xlu0 %2266
      %v2268 = vmin.f32 %v2222, %v2223
      %2269 = vmin.xlane.f32.xlu0 %v2268
      %v2270 = vpop.xlane.xlu0 %2269
      %v2271 = vmin.f32 %v2224, %v2225
      %2272 = vmin.xlane.f32.xlu0 %v2271
      %v2273 = vpop.xlane.xlu0 %2272
      %vm2274 = vcmask 48168
      %2275 = vst.msk [vmem:[#allocation2] sm:$0xff] %vm2274, %v2116
      %2276 = vst.msk [vmem:[#allocation2 + $0x8] sm:$0xff] %vm2274, %v2119
      %2277 = vst.msk [vmem:[#allocation2 + $0x10] sm:$0xff] %vm2274, %v2122
      %2278 = vst.msk [vmem:[#allocation2 + $0x18] sm:$0xff] %vm2274, %v2125
      %2279 = vst.msk [vmem:[#allocation2 + $0x20] sm:$0xff] %vm2274, %v2128
      %2280 = vst.msk [vmem:[#allocation2 + $0x28] sm:$0xff] %vm2274, %v2131
      %2281 = vst.msk [vmem:[#allocation2 + $0x30] sm:$0xff] %vm2274, %v2134
      %2282 = vst.msk [vmem:[#allocation2 + $0x38] sm:$0xff] %vm2274, %v2137
      %2283 = vst.msk [vmem:[#allocation2 + $0x40] sm:$0xff] %vm2274, %v2140
      %2284 = vst.msk [vmem:[#allocation2 + $0x48] sm:$0xff] %vm2274, %v2143
      %2285 = vst.msk [vmem:[#allocation2 + $0x50] sm:$0xff] %vm2274, %v2146
      %2286 = vst.msk [vmem:[#allocation2 + $0x58] sm:$0xff] %vm2274, %v2149
      %2287 = vst.msk [vmem:[#allocation2 + $0x60] sm:$0xff] %vm2274, %v2152
      %2288 = vst.msk [vmem:[#allocation2 + $0x68] sm:$0xff] %vm2274, %v2155
      %2289 = vst.msk [vmem:[#allocation2 + $0x70] sm:$0xff] %vm2274, %v2158
      %2290 = vst.msk [vmem:[#allocation2 + $0x78] sm:$0xff] %vm2274, %v2161
      %v2291 = vcvt.f32.s32.to.zero.pseudo %v2228
      %v2292 = vcvt.f32.s32.to.zero.pseudo %v2231
      %v2293 = vcvt.f32.s32.to.zero.pseudo %v2234
      %v2294 = vcvt.f32.s32.to.zero.pseudo %v2237
      %v2295 = vcvt.f32.s32.to.zero.pseudo %v2240
      %v2296 = vcvt.f32.s32.to.zero.pseudo %v2243
      %v2297 = vcvt.f32.s32.to.zero.pseudo %v2246
      %v2298 = vcvt.f32.s32.to.zero.pseudo %v2249
      %v2299 = vcvt.f32.s32.to.zero.pseudo %v2252
      %v2300 = vcvt.f32.s32.to.zero.pseudo %v2255
      %v2301 = vcvt.f32.s32.to.zero.pseudo %v2258
      %v2302 = vcvt.f32.s32.to.zero.pseudo %v2261
      %v2303 = vcvt.f32.s32.to.zero.pseudo %v2264
      %v2304 = vcvt.f32.s32.to.zero.pseudo %v2267
      %v2305 = vcvt.f32.s32.to.zero.pseudo %v2270
      %v2306 = vcvt.f32.s32.to.zero.pseudo %v2273
      %2307 = vst.msk [vmem:[#allocation3] sm:$0xff] %vm2274, %v2291
      %2308 = vst.msk [vmem:[#allocation3 + $0x8] sm:$0xff] %vm2274, %v2292
      %2309 = vst.msk [vmem:[#allocation3 + $0x10] sm:$0xff] %vm2274, %v2293
      %2310 = vst.msk [vmem:[#allocation3 + $0x18] sm:$0xff] %vm2274, %v2294
      %2311 = vst.msk [vmem:[#allocation3 + $0x20] sm:$0xff] %vm2274, %v2295
      %2312 = vst.msk [vmem:[#allocation3 + $0x28] sm:$0xff] %vm2274, %v2296
      %2313 = vst.msk [vmem:[#allocation3 + $0x30] sm:$0xff] %vm2274, %v2297
      %2314 = vst.msk [vmem:[#allocation3 + $0x38] sm:$0xff] %vm2274, %v2298
      %2315 = vst.msk [vmem:[#allocation3 + $0x40] sm:$0xff] %vm2274, %v2299
      %2316 = vst.msk [vmem:[#allocation3 + $0x48] sm:$0xff] %vm2274, %v2300
      %2317 = vst.msk [vmem:[#allocation3 + $0x50] sm:$0xff] %vm2274, %v2301
      %2318 = vst.msk [vmem:[#allocation3 + $0x58] sm:$0xff] %vm2274, %v2302
      %2319 = vst.msk [vmem:[#allocation3 + $0x60] sm:$0xff] %vm2274, %v2303
      %2320 = vst.msk [vmem:[#allocation3 + $0x68] sm:$0xff] %vm2274, %v2304
      %2321 = vst.msk [vmem:[#allocation3 + $0x70] sm:$0xff] %vm2274, %v2305
      %2322 = vst.msk [vmem:[#allocation3 + $0x78] sm:$0xff] %vm2274, %v2306
      %vm2323 = vcmp.eq.f32.partialorder %v572, %v2228
      %vm2324 = vcmp.eq.f32.partialorder %v588, %v2228
      %vm2325 = vcmp.eq.f32.partialorder %v573, %v2231
      %vm2326 = vcmp.eq.f32.partialorder %v588, %v2231
      %vm2327 = vcmp.eq.f32.partialorder %v574, %v2234
      %vm2328 = vcmp.eq.f32.partialorder %v588, %v2234
      %vm2329 = vcmp.eq.f32.partialorder %v575, %v2237
      %vm2330 = vcmp.eq.f32.partialorder %v588, %v2237
      %vm2331 = vcmp.eq.f32.partialorder %v576, %v2240
      %vm2332 = vcmp.eq.f32.partialorder %v588, %v2240
      %vm2333 = vcmp.eq.f32.partialorder %v577, %v2243
      %vm2334 = vcmp.eq.f32.partialorder %v588, %v2243
      %vm2335 = vcmp.eq.f32.partialorder %v578, %v2246
      %vm2336 = vcmp.eq.f32.partialorder %v588, %v2246
      %vm2337 = vcmp.eq.f32.partialorder %v579, %v2249
      %vm2338 = vcmp.eq.f32.partialorder %v588, %v2249
      %vm2339 = vcmp.eq.f32.partialorder %v580, %v2252
      %vm2340 = vcmp.eq.f32.partialorder %v588, %v2252
      %vm2341 = vcmp.eq.f32.partialorder %v581, %v2255
      %vm2342 = vcmp.eq.f32.partialorder %v588, %v2255
      %vm2343 = vcmp.eq.f32.partialorder %v582, %v2258
      %vm2344 = vcmp.eq.f32.partialorder %v588, %v2258
      %vm2345 = vcmp.eq.f32.partialorder %v583, %v2261
      %vm2346 = vcmp.eq.f32.partialorder %v588, %v2261
      %vm2347 = vcmp.eq.f32.partialorder %v584, %v2264
      %vm2348 = vcmp.eq.f32.partialorder %v588, %v2264
      %vm2349 = vcmp.eq.f32.partialorder %v585, %v2267
      %vm2350 = vcmp.eq.f32.partialorder %v588, %v2267
      %vm2351 = vcmp.eq.f32.partialorder %v586, %v2270
      %vm2352 = vcmp.eq.f32.partialorder %v588, %v2270
      %vm2353 = vcmp.eq.f32.partialorder %v587, %v2273
      %vm2354 = vcmp.eq.f32.partialorder %v588, %v2273
      %vm2355 = vmand %vm2162, %vm2323
      %vm2356 = vmand %vm2163, %vm2324
      %vm2357 = vmand %vm2164, %vm2325
      %vm2358 = vmand %vm2165, %vm2326
      %vm2359 = vmand %vm2166, %vm2327
      %vm2360 = vmand %vm2167, %vm2328
      %vm2361 = vmand %vm2168, %vm2329
      %vm2362 = vmand %vm2169, %vm2330
      %vm2363 = vmand %vm2170, %vm2331
      %vm2364 = vmand %vm2171, %vm2332
      %vm2365 = vmand %vm2172, %vm2333
      %vm2366 = vmand %vm2173, %vm2334
      %vm2367 = vmand %vm2174, %vm2335
      %vm2368 = vmand %vm2175, %vm2336
      %vm2369 = vmand %vm2176, %vm2337
      %vm2370 = vmand %vm2177, %vm2338
      %vm2371 = vmand %vm2178, %vm2339
      %vm2372 = vmand %vm2179, %vm2340
      %vm2373 = vmand %vm2180, %vm2341
      %vm2374 = vmand %vm2181, %vm2342
      %vm2375 = vmand %vm2182, %vm2343
      %vm2376 = vmand %vm2183, %vm2344
      %vm2377 = vmand %vm2184, %vm2345
      %vm2378 = vmand %vm2185, %vm2346
      %vm2379 = vmand %vm2186, %vm2347
      %vm2380 = vmand %vm2187, %vm2348
      %vm2381 = vmand %vm2188, %vm2349
      %vm2382 = vmand %vm2189, %vm2350
      %vm2383 = vmand %vm2190, %vm2351
      %vm2384 = vmand %vm2191, %vm2352
      %vm2385 = vmand %vm2192, %vm2353
      %vm2386 = vmand %vm2193, %vm2354
      %v2387 = vsel %vm2355, -inf, %v2082
      %v2388 = vsel %vm2356, -inf, %v2083
      %v2389 = vsel %vm2357, -inf, %v2084
      %v2390 = vsel %vm2358, -inf, %v2085
      %v2391 = vsel %vm2359, -inf, %v2086
      %v2392 = vsel %vm2360, -inf, %v2087
      %v2393 = vsel %vm2361, -inf, %v2088
      %v2394 = vsel %vm2362, -inf, %v2089
      %v2395 = vsel %vm2363, -inf, %v2090
      %v2396 = vsel %vm2364, -inf, %v2091
      %v2397 = vsel %vm2365, -inf, %v2092
      %v2398 = vsel %vm2366, -inf, %v2093
      %v2399 = vsel %vm2367, -inf, %v2094
      %v2400 = vsel %vm2368, -inf, %v2095
      %v2401 = vsel %vm2369, -inf, %v2096
      %v2402 = vsel %vm2370, -inf, %v2097
      %v2403 = vsel %vm2371, -inf, %v2098
      %v2404 = vsel %vm2372, -inf, %v2099
      %v2405 = vsel %vm2373, -inf, %v2100
      %v2406 = vsel %vm2374, -inf, %v2101
      %v2407 = vsel %vm2375, -inf, %v2102
      %v2408 = vsel %vm2376, -inf, %v2103
      %v2409 = vsel %vm2377, -inf, %v2104
      %v2410 = vsel %vm2378, -inf, %v2105
      %v2411 = vsel %vm2379, -inf, %v2106
      %v2412 = vsel %vm2380, -inf, %v2107
      %v2413 = vsel %vm2381, -inf, %v2108
      %v2414 = vsel %vm2382, -inf, %v2109
      %v2415 = vsel %vm2383, -inf, %v2110
      %v2416 = vsel %vm2384, -inf, %v2111
      %v2417 = vsel %vm2385, -inf, %v2112
      %v2418 = vsel %vm2386, -inf, %v2113
      %v2419 = vmax.f32 %v2387, %v2388
      %2420 = vmax.xlane.f32.xlu0 %v2419
      %v2421 = vpop.xlane.xlu0 %2420
      %v2422 = vmax.f32 %v2389, %v2390
      %2423 = vmax.xlane.f32.xlu0 %v2422
      %v2424 = vpop.xlane.xlu0 %2423
      %v2425 = vmax.f32 %v2391, %v2392
      %2426 = vmax.xlane.f32.xlu0 %v2425
      %v2427 = vpop.xlane.xlu0 %2426
      %v2428 = vmax.f32 %v2393, %v2394
      %2429 = vmax.xlane.f32.xlu0 %v2428
      %v2430 = vpop.xlane.xlu0 %2429
      %v2431 = vmax.f32 %v2395, %v2396
      %2432 = vmax.xlane.f32.xlu0 %v2431
      %v2433 = vpop.xlane.xlu0 %2432
      %v2434 = vmax.f32 %v2397, %v2398
      %2435 = vmax.xlane.f32.xlu0 %v2434
      %v2436 = vpop.xlane.xlu0 %2435
      %v2437 = vmax.f32 %v2399, %v2400
      %2438 = vmax.xlane.f32.xlu0 %v2437
      %v2439 = vpop.xlane.xlu0 %2438
      %v2440 = vmax.f32 %v2401, %v2402
      %2441 = vmax.xlane.f32.xlu0 %v2440
      %v2442 = vpop.xlane.xlu0 %2441
      %v2443 = vmax.f32 %v2403, %v2404
      %2444 = vmax.xlane.f32.xlu0 %v2443
      %v2445 = vpop.xlane.xlu0 %2444
      %v2446 = vmax.f32 %v2405, %v2406
      %2447 = vmax.xlane.f32.xlu0 %v2446
      %v2448 = vpop.xlane.xlu0 %2447
      %v2449 = vmax.f32 %v2407, %v2408
      %2450 = vmax.xlane.f32.xlu0 %v2449
      %v2451 = vpop.xlane.xlu0 %2450
      %v2452 = vmax.f32 %v2409, %v2410
      %2453 = vmax.xlane.f32.xlu0 %v2452
      %v2454 = vpop.xlane.xlu0 %2453
      %v2455 = vmax.f32 %v2411, %v2412
      %2456 = vmax.xlane.f32.xlu0 %v2455
      %v2457 = vpop.xlane.xlu0 %2456
      %v2458 = vmax.f32 %v2413, %v2414
      %2459 = vmax.xlane.f32.xlu0 %v2458
      %v2460 = vpop.xlane.xlu0 %2459
      %v2461 = vmax.f32 %v2415, %v2416
      %2462 = vmax.xlane.f32.xlu0 %v2461
      %v2463 = vpop.xlane.xlu0 %2462
      %v2464 = vmax.f32 %v2417, %v2418
      %2465 = vmax.xlane.f32.xlu0 %v2464
      %v2466 = vpop.xlane.xlu0 %2465
      %vm2467 = vcmp.eq.f32.partialorder %v2387, %v2421
      %vm2468 = vcmp.eq.f32.partialorder %v2388, %v2421
      %vm2469 = vcmp.eq.f32.partialorder %v2389, %v2424
      %vm2470 = vcmp.eq.f32.partialorder %v2390, %v2424
      %vm2471 = vcmp.eq.f32.partialorder %v2391, %v2427
      %vm2472 = vcmp.eq.f32.partialorder %v2392, %v2427
      %vm2473 = vcmp.eq.f32.partialorder %v2393, %v2430
      %vm2474 = vcmp.eq.f32.partialorder %v2394, %v2430
      %vm2475 = vcmp.eq.f32.partialorder %v2395, %v2433
      %vm2476 = vcmp.eq.f32.partialorder %v2396, %v2433
      %vm2477 = vcmp.eq.f32.partialorder %v2397, %v2436
      %vm2478 = vcmp.eq.f32.partialorder %v2398, %v2436
      %vm2479 = vcmp.eq.f32.partialorder %v2399, %v2439
      %vm2480 = vcmp.eq.f32.partialorder %v2400, %v2439
      %vm2481 = vcmp.eq.f32.partialorder %v2401, %v2442
      %vm2482 = vcmp.eq.f32.partialorder %v2402, %v2442
      %vm2483 = vcmp.eq.f32.partialorder %v2403, %v2445
      %vm2484 = vcmp.eq.f32.partialorder %v2404, %v2445
      %vm2485 = vcmp.eq.f32.partialorder %v2405, %v2448
      %vm2486 = vcmp.eq.f32.partialorder %v2406, %v2448
      %vm2487 = vcmp.eq.f32.partialorder %v2407, %v2451
      %vm2488 = vcmp.eq.f32.partialorder %v2408, %v2451
      %vm2489 = vcmp.eq.f32.partialorder %v2409, %v2454
      %vm2490 = vcmp.eq.f32.partialorder %v2410, %v2454
      %vm2491 = vcmp.eq.f32.partialorder %v2411, %v2457
      %vm2492 = vcmp.eq.f32.partialorder %v2412, %v2457
      %vm2493 = vcmp.eq.f32.partialorder %v2413, %v2460
      %vm2494 = vcmp.eq.f32.partialorder %v2414, %v2460
      %vm2495 = vcmp.eq.f32.partialorder %v2415, %v2463
      %vm2496 = vcmp.eq.f32.partialorder %v2416, %v2463
      %vm2497 = vcmp.eq.f32.partialorder %v2417, %v2466
      %vm2498 = vcmp.eq.f32.partialorder %v2418, %v2466
      %v2499 = vsel %vm2467, %v572, 3e+38
      %v2500 = vsel %vm2468, %v588, 3e+38
      %v2501 = vsel %vm2469, %v573, 3e+38
      %v2502 = vsel %vm2470, %v588, 3e+38
      %v2503 = vsel %vm2471, %v574, 3e+38
      %v2504 = vsel %vm2472, %v588, 3e+38
      %v2505 = vsel %vm2473, %v575, 3e+38
      %v2506 = vsel %vm2474, %v588, 3e+38
      %v2507 = vsel %vm2475, %v576, 3e+38
      %v2508 = vsel %vm2476, %v588, 3e+38
      %v2509 = vsel %vm2477, %v577, 3e+38
      %v2510 = vsel %vm2478, %v588, 3e+38
      %v2511 = vsel %vm2479, %v578, 3e+38
      %v2512 = vsel %vm2480, %v588, 3e+38
      %v2513 = vsel %vm2481, %v579, 3e+38
      %v2514 = vsel %vm2482, %v588, 3e+38
      %v2515 = vsel %vm2483, %v580, 3e+38
      %v2516 = vsel %vm2484, %v588, 3e+38
      %v2517 = vsel %vm2485, %v581, 3e+38
      %v2518 = vsel %vm2486, %v588, 3e+38
      %v2519 = vsel %vm2487, %v582, 3e+38
      %v2520 = vsel %vm2488, %v588, 3e+38
      %v2521 = vsel %vm2489, %v583, 3e+38
      %v2522 = vsel %vm2490, %v588, 3e+38
      %v2523 = vsel %vm2491, %v584, 3e+38
      %v2524 = vsel %vm2492, %v588, 3e+38
      %v2525 = vsel %vm2493, %v585, 3e+38
      %v2526 = vsel %vm2494, %v588, 3e+38
      %v2527 = vsel %vm2495, %v586, 3e+38
      %v2528 = vsel %vm2496, %v588, 3e+38
      %v2529 = vsel %vm2497, %v587, 3e+38
      %v2530 = vsel %vm2498, %v588, 3e+38
      %v2531 = vmin.f32 %v2499, %v2500
      %2532 = vmin.xlane.f32.xlu0 %v2531
      %v2533 = vpop.xlane.xlu0 %2532
      %v2534 = vmin.f32 %v2501, %v2502
      %2535 = vmin.xlane.f32.xlu0 %v2534
      %v2536 = vpop.xlane.xlu0 %2535
      %v2537 = vmin.f32 %v2503, %v2504
      %2538 = vmin.xlane.f32.xlu0 %v2537
      %v2539 = vpop.xlane.xlu0 %2538
      %v2540 = vmin.f32 %v2505, %v2506
      %2541 = vmin.xlane.f32.xlu0 %v2540
      %v2542 = vpop.xlane.xlu0 %2541
      %v2543 = vmin.f32 %v2507, %v2508
      %2544 = vmin.xlane.f32.xlu0 %v2543
      %v2545 = vpop.xlane.xlu0 %2544
      %v2546 = vmin.f32 %v2509, %v2510
      %2547 = vmin.xlane.f32.xlu0 %v2546
      %v2548 = vpop.xlane.xlu0 %2547
      %v2549 = vmin.f32 %v2511, %v2512
      %2550 = vmin.xlane.f32.xlu0 %v2549
      %v2551 = vpop.xlane.xlu0 %2550
      %v2552 = vmin.f32 %v2513, %v2514
      %2553 = vmin.xlane.f32.xlu0 %v2552
      %v2554 = vpop.xlane.xlu0 %2553
      %v2555 = vmin.f32 %v2515, %v2516
      %2556 = vmin.xlane.f32.xlu0 %v2555
      %v2557 = vpop.xlane.xlu0 %2556
      %v2558 = vmin.f32 %v2517, %v2518
      %2559 = vmin.xlane.f32.xlu0 %v2558
      %v2560 = vpop.xlane.xlu0 %2559
      %v2561 = vmin.f32 %v2519, %v2520
      %2562 = vmin.xlane.f32.xlu0 %v2561
      %v2563 = vpop.xlane.xlu0 %2562
      %v2564 = vmin.f32 %v2521, %v2522
      %2565 = vmin.xlane.f32.xlu0 %v2564
      %v2566 = vpop.xlane.xlu0 %2565
      %v2567 = vmin.f32 %v2523, %v2524
      %2568 = vmin.xlane.f32.xlu0 %v2567
      %v2569 = vpop.xlane.xlu0 %2568
      %v2570 = vmin.f32 %v2525, %v2526
      %2571 = vmin.xlane.f32.xlu0 %v2570
      %v2572 = vpop.xlane.xlu0 %2571
      %v2573 = vmin.f32 %v2527, %v2528
      %2574 = vmin.xlane.f32.xlu0 %v2573
      %v2575 = vpop.xlane.xlu0 %2574
      %v2576 = vmin.f32 %v2529, %v2530
      %2577 = vmin.xlane.f32.xlu0 %v2576
      %v2578 = vpop.xlane.xlu0 %2577
      %vm2579 = vcmask 56368
      %2580 = vst.msk [vmem:[#allocation2] sm:$0xff] %vm2579, %v2421
      %2581 = vst.msk [vmem:[#allocation2 + $0x8] sm:$0xff] %vm2579, %v2424
      %2582 = vst.msk [vmem:[#allocation2 + $0x10] sm:$0xff] %vm2579, %v2427
      %2583 = vst.msk [vmem:[#allocation2 + $0x18] sm:$0xff] %vm2579, %v2430
      %2584 = vst.msk [vmem:[#allocation2 + $0x20] sm:$0xff] %vm2579, %v2433
      %2585 = vst.msk [vmem:[#allocation2 + $0x28] sm:$0xff] %vm2579, %v2436
      %2586 = vst.msk [vmem:[#allocation2 + $0x30] sm:$0xff] %vm2579, %v2439
      %2587 = vst.msk [vmem:[#allocation2 + $0x38] sm:$0xff] %vm2579, %v2442
      %2588 = vst.msk [vmem:[#allocation2 + $0x40] sm:$0xff] %vm2579, %v2445
      %2589 = vst.msk [vmem:[#allocation2 + $0x48] sm:$0xff] %vm2579, %v2448
      %2590 = vst.msk [vmem:[#allocation2 + $0x50] sm:$0xff] %vm2579, %v2451
      %2591 = vst.msk [vmem:[#allocation2 + $0x58] sm:$0xff] %vm2579, %v2454
      %2592 = vst.msk [vmem:[#allocation2 + $0x60] sm:$0xff] %vm2579, %v2457
      %2593 = vst.msk [vmem:[#allocation2 + $0x68] sm:$0xff] %vm2579, %v2460
      %2594 = vst.msk [vmem:[#allocation2 + $0x70] sm:$0xff] %vm2579, %v2463
      %2595 = vst.msk [vmem:[#allocation2 + $0x78] sm:$0xff] %vm2579, %v2466
      %v2596 = vcvt.f32.s32.to.zero.pseudo %v2533
      %v2597 = vcvt.f32.s32.to.zero.pseudo %v2536
      %v2598 = vcvt.f32.s32.to.zero.pseudo %v2539
      %v2599 = vcvt.f32.s32.to.zero.pseudo %v2542
      %v2600 = vcvt.f32.s32.to.zero.pseudo %v2545
      %v2601 = vcvt.f32.s32.to.zero.pseudo %v2548
      %v2602 = vcvt.f32.s32.to.zero.pseudo %v2551
      %v2603 = vcvt.f32.s32.to.zero.pseudo %v2554
      %v2604 = vcvt.f32.s32.to.zero.pseudo %v2557
      %v2605 = vcvt.f32.s32.to.zero.pseudo %v2560
      %v2606 = vcvt.f32.s32.to.zero.pseudo %v2563
      %v2607 = vcvt.f32.s32.to.zero.pseudo %v2566
      %v2608 = vcvt.f32.s32.to.zero.pseudo %v2569
      %v2609 = vcvt.f32.s32.to.zero.pseudo %v2572
      %v2610 = vcvt.f32.s32.to.zero.pseudo %v2575
      %v2611 = vcvt.f32.s32.to.zero.pseudo %v2578
      %2612 = vst.msk [vmem:[#allocation3] sm:$0xff] %vm2579, %v2596
      %2613 = vst.msk [vmem:[#allocation3 + $0x8] sm:$0xff] %vm2579, %v2597
      %2614 = vst.msk [vmem:[#allocation3 + $0x10] sm:$0xff] %vm2579, %v2598
      %2615 = vst.msk [vmem:[#allocation3 + $0x18] sm:$0xff] %vm2579, %v2599
      %2616 = vst.msk [vmem:[#allocation3 + $0x20] sm:$0xff] %vm2579, %v2600
      %2617 = vst.msk [vmem:[#allocation3 + $0x28] sm:$0xff] %vm2579, %v2601
      %2618 = vst.msk [vmem:[#allocation3 + $0x30] sm:$0xff] %vm2579, %v2602
      %2619 = vst.msk [vmem:[#allocation3 + $0x38] sm:$0xff] %vm2579, %v2603
      %2620 = vst.msk [vmem:[#allocation3 + $0x40] sm:$0xff] %vm2579, %v2604
      %2621 = vst.msk [vmem:[#allocation3 + $0x48] sm:$0xff] %vm2579, %v2605
      %2622 = vst.msk [vmem:[#allocation3 + $0x50] sm:$0xff] %vm2579, %v2606
      %2623 = vst.msk [vmem:[#allocation3 + $0x58] sm:$0xff] %vm2579, %v2607
      %2624 = vst.msk [vmem:[#allocation3 + $0x60] sm:$0xff] %vm2579, %v2608
      %2625 = vst.msk [vmem:[#allocation3 + $0x68] sm:$0xff] %vm2579, %v2609
      %2626 = vst.msk [vmem:[#allocation3 + $0x70] sm:$0xff] %vm2579, %v2610
      %2627 = vst.msk [vmem:[#allocation3 + $0x78] sm:$0xff] %vm2579, %v2611
      %vm2628 = vcmp.eq.f32.partialorder %v572, %v2533
      %vm2629 = vcmp.eq.f32.partialorder %v588, %v2533
      %vm2630 = vcmp.eq.f32.partialorder %v573, %v2536
      %vm2631 = vcmp.eq.f32.partialorder %v588, %v2536
      %vm2632 = vcmp.eq.f32.partialorder %v574, %v2539
      %vm2633 = vcmp.eq.f32.partialorder %v588, %v2539
      %vm2634 = vcmp.eq.f32.partialorder %v575, %v2542
      %vm2635 = vcmp.eq.f32.partialorder %v588, %v2542
      %vm2636 = vcmp.eq.f32.partialorder %v576, %v2545
      %vm2637 = vcmp.eq.f32.partialorder %v588, %v2545
      %vm2638 = vcmp.eq.f32.partialorder %v577, %v2548
      %vm2639 = vcmp.eq.f32.partialorder %v588, %v2548
      %vm2640 = vcmp.eq.f32.partialorder %v578, %v2551
      %vm2641 = vcmp.eq.f32.partialorder %v588, %v2551
      %vm2642 = vcmp.eq.f32.partialorder %v579, %v2554
      %vm2643 = vcmp.eq.f32.partialorder %v588, %v2554
      %vm2644 = vcmp.eq.f32.partialorder %v580, %v2557
      %vm2645 = vcmp.eq.f32.partialorder %v588, %v2557
      %vm2646 = vcmp.eq.f32.partialorder %v581, %v2560
      %vm2647 = vcmp.eq.f32.partialorder %v588, %v2560
      %vm2648 = vcmp.eq.f32.partialorder %v582, %v2563
      %vm2649 = vcmp.eq.f32.partialorder %v588, %v2563
      %vm2650 = vcmp.eq.f32.partialorder %v583, %v2566
      %vm2651 = vcmp.eq.f32.partialorder %v588, %v2566
      %vm2652 = vcmp.eq.f32.partialorder %v584, %v2569
      %vm2653 = vcmp.eq.f32.partialorder %v588, %v2569
      %vm2654 = vcmp.eq.f32.partialorder %v585, %v2572
      %vm2655 = vcmp.eq.f32.partialorder %v588, %v2572
      %vm2656 = vcmp.eq.f32.partialorder %v586, %v2575
      %vm2657 = vcmp.eq.f32.partialorder %v588, %v2575
      %vm2658 = vcmp.eq.f32.partialorder %v587, %v2578
      %vm2659 = vcmp.eq.f32.partialorder %v588, %v2578
      %vm2660 = vmand %vm2467, %vm2628
      %vm2661 = vmand %vm2468, %vm2629
      %vm2662 = vmand %vm2469, %vm2630
      %vm2663 = vmand %vm2470, %vm2631
      %vm2664 = vmand %vm2471, %vm2632
      %vm2665 = vmand %vm2472, %vm2633
      %vm2666 = vmand %vm2473, %vm2634
      %vm2667 = vmand %vm2474, %vm2635
      %vm2668 = vmand %vm2475, %vm2636
      %vm2669 = vmand %vm2476, %vm2637
      %vm2670 = vmand %vm2477, %vm2638
      %vm2671 = vmand %vm2478, %vm2639
      %vm2672 = vmand %vm2479, %vm2640
      %vm2673 = vmand %vm2480, %vm2641
      %vm2674 = vmand %vm2481, %vm2642
      %vm2675 = vmand %vm2482, %vm2643
      %vm2676 = vmand %vm2483, %vm2644
      %vm2677 = vmand %vm2484, %vm2645
      %vm2678 = vmand %vm2485, %vm2646
      %vm2679 = vmand %vm2486, %vm2647
      %vm2680 = vmand %vm2487, %vm2648
      %vm2681 = vmand %vm2488, %vm2649
      %vm2682 = vmand %vm2489, %vm2650
      %vm2683 = vmand %vm2490, %vm2651
      %vm2684 = vmand %vm2491, %vm2652
      %vm2685 = vmand %vm2492, %vm2653
      %vm2686 = vmand %vm2493, %vm2654
      %vm2687 = vmand %vm2494, %vm2655
      %vm2688 = vmand %vm2495, %vm2656
      %vm2689 = vmand %vm2496, %vm2657
      %vm2690 = vmand %vm2497, %vm2658
      %vm2691 = vmand %vm2498, %vm2659
      %v2692 = vsel %vm2660, -inf, %v2387
      %v2693 = vsel %vm2661, -inf, %v2388
      %v2694 = vsel %vm2662, -inf, %v2389
      %v2695 = vsel %vm2663, -inf, %v2390
      %v2696 = vsel %vm2664, -inf, %v2391
      %v2697 = vsel %vm2665, -inf, %v2392
      %v2698 = vsel %vm2666, -inf, %v2393
      %v2699 = vsel %vm2667, -inf, %v2394
      %v2700 = vsel %vm2668, -inf, %v2395
      %v2701 = vsel %vm2669, -inf, %v2396
      %v2702 = vsel %vm2670, -inf, %v2397
      %v2703 = vsel %vm2671, -inf, %v2398
      %v2704 = vsel %vm2672, -inf, %v2399
      %v2705 = vsel %vm2673, -inf, %v2400
      %v2706 = vsel %vm2674, -inf, %v2401
      %v2707 = vsel %vm2675, -inf, %v2402
      %v2708 = vsel %vm2676, -inf, %v2403
      %v2709 = vsel %vm2677, -inf, %v2404
      %v2710 = vsel %vm2678, -inf, %v2405
      %v2711 = vsel %vm2679, -inf, %v2406
      %v2712 = vsel %vm2680, -inf, %v2407
      %v2713 = vsel %vm2681, -inf, %v2408
      %v2714 = vsel %vm2682, -inf, %v2409
      %v2715 = vsel %vm2683, -inf, %v2410
      %v2716 = vsel %vm2684, -inf, %v2411
      %v2717 = vsel %vm2685, -inf, %v2412
      %v2718 = vsel %vm2686, -inf, %v2413
      %v2719 = vsel %vm2687, -inf, %v2414
      %v2720 = vsel %vm2688, -inf, %v2415
      %v2721 = vsel %vm2689, -inf, %v2416
      %v2722 = vsel %vm2690, -inf, %v2417
      %v2723 = vsel %vm2691, -inf, %v2418
      %v2724 = vmax.f32 %v2692, %v2693
      %2725 = vmax.xlane.f32.xlu0 %v2724
      %v2726 = vpop.xlane.xlu0 %2725
      %v2727 = vmax.f32 %v2694, %v2695
      %2728 = vmax.xlane.f32.xlu0 %v2727
      %v2729 = vpop.xlane.xlu0 %2728
      %v2730 = vmax.f32 %v2696, %v2697
      %2731 = vmax.xlane.f32.xlu0 %v2730
      %v2732 = vpop.xlane.xlu0 %2731
      %v2733 = vmax.f32 %v2698, %v2699
      %2734 = vmax.xlane.f32.xlu0 %v2733
      %v2735 = vpop.xlane.xlu0 %2734
      %v2736 = vmax.f32 %v2700, %v2701
      %2737 = vmax.xlane.f32.xlu0 %v2736
      %v2738 = vpop.xlane.xlu0 %2737
      %v2739 = vmax.f32 %v2702, %v2703
      %2740 = vmax.xlane.f32.xlu0 %v2739
      %v2741 = vpop.xlane.xlu0 %2740
      %v2742 = vmax.f32 %v2704, %v2705
      %2743 = vmax.xlane.f32.xlu0 %v2742
      %v2744 = vpop.xlane.xlu0 %2743
      %v2745 = vmax.f32 %v2706, %v2707
      %2746 = vmax.xlane.f32.xlu0 %v2745
      %v2747 = vpop.xlane.xlu0 %2746
      %v2748 = vmax.f32 %v2708, %v2709
      %2749 = vmax.xlane.f32.xlu0 %v2748
      %v2750 = vpop.xlane.xlu0 %2749
      %v2751 = vmax.f32 %v2710, %v2711
      %2752 = vmax.xlane.f32.xlu0 %v2751
      %v2753 = vpop.xlane.xlu0 %2752
      %v2754 = vmax.f32 %v2712, %v2713
      %2755 = vmax.xlane.f32.xlu0 %v2754
      %v2756 = vpop.xlane.xlu0 %2755
      %v2757 = vmax.f32 %v2714, %v2715
      %2758 = vmax.xlane.f32.xlu0 %v2757
      %v2759 = vpop.xlane.xlu0 %2758
      %v2760 = vmax.f32 %v2716, %v2717
      %2761 = vmax.xlane.f32.xlu0 %v2760
      %v2762 = vpop.xlane.xlu0 %2761
      %v2763 = vmax.f32 %v2718, %v2719
      %2764 = vmax.xlane.f32.xlu0 %v2763
      %v2765 = vpop.xlane.xlu0 %2764
      %v2766 = vmax.f32 %v2720, %v2721
      %2767 = vmax.xlane.f32.xlu0 %v2766
      %v2768 = vpop.xlane.xlu0 %2767
      %v2769 = vmax.f32 %v2722, %v2723
      %2770 = vmax.xlane.f32.xlu0 %v2769
      %v2771 = vpop.xlane.xlu0 %2770
      %vm2772 = vcmp.eq.f32.partialorder %v2692, %v2726
      %vm2773 = vcmp.eq.f32.partialorder %v2693, %v2726
      %vm2774 = vcmp.eq.f32.partialorder %v2694, %v2729
      %vm2775 = vcmp.eq.f32.partialorder %v2695, %v2729
      %vm2776 = vcmp.eq.f32.partialorder %v2696, %v2732
      %vm2777 = vcmp.eq.f32.partialorder %v2697, %v2732
      %vm2778 = vcmp.eq.f32.partialorder %v2698, %v2735
      %vm2779 = vcmp.eq.f32.partialorder %v2699, %v2735
      %vm2780 = vcmp.eq.f32.partialorder %v2700, %v2738
      %vm2781 = vcmp.eq.f32.partialorder %v2701, %v2738
      %vm2782 = vcmp.eq.f32.partialorder %v2702, %v2741
      %vm2783 = vcmp.eq.f32.partialorder %v2703, %v2741
      %vm2784 = vcmp.eq.f32.partialorder %v2704, %v2744
      %vm2785 = vcmp.eq.f32.partialorder %v2705, %v2744
      %vm2786 = vcmp.eq.f32.partialorder %v2706, %v2747
      %vm2787 = vcmp.eq.f32.partialorder %v2707, %v2747
      %vm2788 = vcmp.eq.f32.partialorder %v2708, %v2750
      %vm2789 = vcmp.eq.f32.partialorder %v2709, %v2750
      %vm2790 = vcmp.eq.f32.partialorder %v2710, %v2753
      %vm2791 = vcmp.eq.f32.partialorder %v2711, %v2753
      %vm2792 = vcmp.eq.f32.partialorder %v2712, %v2756
      %vm2793 = vcmp.eq.f32.partialorder %v2713, %v2756
      %vm2794 = vcmp.eq.f32.partialorder %v2714, %v2759
      %vm2795 = vcmp.eq.f32.partialorder %v2715, %v2759
      %vm2796 = vcmp.eq.f32.partialorder %v2716, %v2762
      %vm2797 = vcmp.eq.f32.partialorder %v2717, %v2762
      %vm2798 = vcmp.eq.f32.partialorder %v2718, %v2765
      %vm2799 = vcmp.eq.f32.partialorder %v2719, %v2765
      %vm2800 = vcmp.eq.f32.partialorder %v2720, %v2768
      %vm2801 = vcmp.eq.f32.partialorder %v2721, %v2768
      %vm2802 = vcmp.eq.f32.partialorder %v2722, %v2771
      %vm2803 = vcmp.eq.f32.partialorder %v2723, %v2771
      %v2804 = vsel %vm2772, %v572, 3e+38
      %v2805 = vsel %vm2773, %v588, 3e+38
      %v2806 = vsel %vm2774, %v573, 3e+38
      %v2807 = vsel %vm2775, %v588, 3e+38
      %v2808 = vsel %vm2776, %v574, 3e+38
      %v2809 = vsel %vm2777, %v588, 3e+38
      %v2810 = vsel %vm2778, %v575, 3e+38
      %v2811 = vsel %vm2779, %v588, 3e+38
      %v2812 = vsel %vm2780, %v576, 3e+38
      %v2813 = vsel %vm2781, %v588, 3e+38
      %v2814 = vsel %vm2782, %v577, 3e+38
      %v2815 = vsel %vm2783, %v588, 3e+38
      %v2816 = vsel %vm2784, %v578, 3e+38
      %v2817 = vsel %vm2785, %v588, 3e+38
      %v2818 = vsel %vm2786, %v579, 3e+38
      %v2819 = vsel %vm2787, %v588, 3e+38
      %v2820 = vsel %vm2788, %v580, 3e+38
      %v2821 = vsel %vm2789, %v588, 3e+38
      %v2822 = vsel %vm2790, %v581, 3e+38
      %v2823 = vsel %vm2791, %v588, 3e+38
      %v2824 = vsel %vm2792, %v582, 3e+38
      %v2825 = vsel %vm2793, %v588, 3e+38
      %v2826 = vsel %vm2794, %v583, 3e+38
      %v2827 = vsel %vm2795, %v588, 3e+38
      %v2828 = vsel %vm2796, %v584, 3e+38
      %v2829 = vsel %vm2797, %v588, 3e+38
      %v2830 = vsel %vm2798, %v585, 3e+38
      %v2831 = vsel %vm2799, %v588, 3e+38
      %v2832 = vsel %vm2800, %v586, 3e+38
      %v2833 = vsel %vm2801, %v588, 3e+38
      %v2834 = vsel %vm2802, %v587, 3e+38
      %v2835 = vsel %vm2803, %v588, 3e+38
      %v2836 = vmin.f32 %v2804, %v2805
      %2837 = vmin.xlane.f32.xlu0 %v2836
      %v2838 = vpop.xlane.xlu0 %2837
      %v2839 = vmin.f32 %v2806, %v2807
      %2840 = vmin.xlane.f32.xlu0 %v2839
      %v2841 = vpop.xlane.xlu0 %2840
      %v2842 = vmin.f32 %v2808, %v2809
      %2843 = vmin.xlane.f32.xlu0 %v2842
      %v2844 = vpop.xlane.xlu0 %2843
      %v2845 = vmin.f32 %v2810, %v2811
      %2846 = vmin.xlane.f32.xlu0 %v2845
      %v2847 = vpop.xlane.xlu0 %2846
      %v2848 = vmin.f32 %v2812, %v2813
      %2849 = vmin.xlane.f32.xlu0 %v2848
      %v2850 = vpop.xlane.xlu0 %2849
      %v2851 = vmin.f32 %v2814, %v2815
      %2852 = vmin.xlane.f32.xlu0 %v2851
      %v2853 = vpop.xlane.xlu0 %2852
      %v2854 = vmin.f32 %v2816, %v2817
      %2855 = vmin.xlane.f32.xlu0 %v2854
      %v2856 = vpop.xlane.xlu0 %2855
      %v2857 = vmin.f32 %v2818, %v2819
      %2858 = vmin.xlane.f32.xlu0 %v2857
      %v2859 = vpop.xlane.xlu0 %2858
      %v2860 = vmin.f32 %v2820, %v2821
      %2861 = vmin.xlane.f32.xlu0 %v2860
      %v2862 = vpop.xlane.xlu0 %2861
      %v2863 = vmin.f32 %v2822, %v2823
      %2864 = vmin.xlane.f32.xlu0 %v2863
      %v2865 = vpop.xlane.xlu0 %2864
      %v2866 = vmin.f32 %v2824, %v2825
      %2867 = vmin.xlane.f32.xlu0 %v2866
      %v2868 = vpop.xlane.xlu0 %2867
      %v2869 = vmin.f32 %v2826, %v2827
      %2870 = vmin.xlane.f32.xlu0 %v2869
      %v2871 = vpop.xlane.xlu0 %2870
      %v2872 = vmin.f32 %v2828, %v2829
      %2873 = vmin.xlane.f32.xlu0 %v2872
      %v2874 = vpop.xlane.xlu0 %2873
      %v2875 = vmin.f32 %v2830, %v2831
      %2876 = vmin.xlane.f32.xlu0 %v2875
      %v2877 = vpop.xlane.xlu0 %2876
      %v2878 = vmin.f32 %v2832, %v2833
      %2879 = vmin.xlane.f32.xlu0 %v2878
      %v2880 = vpop.xlane.xlu0 %2879
      %v2881 = vmin.f32 %v2834, %v2835
      %2882 = vmin.xlane.f32.xlu0 %v2881
      %v2883 = vpop.xlane.xlu0 %2882
      %vm2884 = vcmask 64568
      %2885 = vst.msk [vmem:[#allocation2] sm:$0xff] %vm2884, %v2726
      %2886 = vst.msk [vmem:[#allocation2 + $0x8] sm:$0xff] %vm2884, %v2729
      %2887 = vst.msk [vmem:[#allocation2 + $0x10] sm:$0xff] %vm2884, %v2732
      %2888 = vst.msk [vmem:[#allocation2 + $0x18] sm:$0xff] %vm2884, %v2735
      %2889 = vst.msk [vmem:[#allocation2 + $0x20] sm:$0xff] %vm2884, %v2738
      %2890 = vst.msk [vmem:[#allocation2 + $0x28] sm:$0xff] %vm2884, %v2741
      %2891 = vst.msk [vmem:[#allocation2 + $0x30] sm:$0xff] %vm2884, %v2744
      %2892 = vst.msk [vmem:[#allocation2 + $0x38] sm:$0xff] %vm2884, %v2747
      %2893 = vst.msk [vmem:[#allocation2 + $0x40] sm:$0xff] %vm2884, %v2750
      %2894 = vst.msk [vmem:[#allocation2 + $0x48] sm:$0xff] %vm2884, %v2753
      %2895 = vst.msk [vmem:[#allocation2 + $0x50] sm:$0xff] %vm2884, %v2756
      %2896 = vst.msk [vmem:[#allocation2 + $0x58] sm:$0xff] %vm2884, %v2759
      %2897 = vst.msk [vmem:[#allocation2 + $0x60] sm:$0xff] %vm2884, %v2762
      %2898 = vst.msk [vmem:[#allocation2 + $0x68] sm:$0xff] %vm2884, %v2765
      %2899 = vst.msk [vmem:[#allocation2 + $0x70] sm:$0xff] %vm2884, %v2768
      %2900 = vst.msk [vmem:[#allocation2 + $0x78] sm:$0xff] %vm2884, %v2771
      %v2901 = vcvt.f32.s32.to.zero.pseudo %v2838
      %v2902 = vcvt.f32.s32.to.zero.pseudo %v2841
      %v2903 = vcvt.f32.s32.to.zero.pseudo %v2844
      %v2904 = vcvt.f32.s32.to.zero.pseudo %v2847
      %v2905 = vcvt.f32.s32.to.zero.pseudo %v2850
      %v2906 = vcvt.f32.s32.to.zero.pseudo %v2853
      %v2907 = vcvt.f32.s32.to.zero.pseudo %v2856
      %v2908 = vcvt.f32.s32.to.zero.pseudo %v2859
      %v2909 = vcvt.f32.s32.to.zero.pseudo %v2862
      %v2910 = vcvt.f32.s32.to.zero.pseudo %v2865
      %v2911 = vcvt.f32.s32.to.zero.pseudo %v2868
      %v2912 = vcvt.f32.s32.to.zero.pseudo %v2871
      %v2913 = vcvt.f32.s32.to.zero.pseudo %v2874
      %v2914 = vcvt.f32.s32.to.zero.pseudo %v2877
      %v2915 = vcvt.f32.s32.to.zero.pseudo %v2880
      %v2916 = vcvt.f32.s32.to.zero.pseudo %v2883
      %2917 = vst.msk [vmem:[#allocation3] sm:$0xff] %vm2884, %v2901
      %2918 = vst.msk [vmem:[#allocation3 + $0x8] sm:$0xff] %vm2884, %v2902
      %2919 = vst.msk [vmem:[#allocation3 + $0x10] sm:$0xff] %vm2884, %v2903
      %2920 = vst.msk [vmem:[#allocation3 + $0x18] sm:$0xff] %vm2884, %v2904
      %2921 = vst.msk [vmem:[#allocation3 + $0x20] sm:$0xff] %vm2884, %v2905
      %2922 = vst.msk [vmem:[#allocation3 + $0x28] sm:$0xff] %vm2884, %v2906
      %2923 = vst.msk [vmem:[#allocation3 + $0x30] sm:$0xff] %vm2884, %v2907
      %2924 = vst.msk [vmem:[#allocation3 + $0x38] sm:$0xff] %vm2884, %v2908
      %2925 = vst.msk [vmem:[#allocation3 + $0x40] sm:$0xff] %vm2884, %v2909
      %2926 = vst.msk [vmem:[#allocation3 + $0x48] sm:$0xff] %vm2884, %v2910
      %2927 = vst.msk [vmem:[#allocation3 + $0x50] sm:$0xff] %vm2884, %v2911
      %2928 = vst.msk [vmem:[#allocation3 + $0x58] sm:$0xff] %vm2884, %v2912
      %2929 = vst.msk [vmem:[#allocation3 + $0x60] sm:$0xff] %vm2884, %v2913
      %2930 = vst.msk [vmem:[#allocation3 + $0x68] sm:$0xff] %vm2884, %v2914
      %2931 = vst.msk [vmem:[#allocation3 + $0x70] sm:$0xff] %vm2884, %v2915
      %2932 = vst.msk [vmem:[#allocation3 + $0x78] sm:$0xff] %vm2884, %v2916
      // Predicated region
      $region33: #{tpu_custom_call.1} parent=27 // pred_check
        %p2933 = pneg %p210
      $region34: #{tpu_custom_call.1} parent=27 // pred_check_branch
        %2935 = sbr.rel (%p2933) target = $region36
      $region35: #{tpu_custom_call.1} parent=27 // pred_region
        %v2936 = vld [vmem:[#allocation3] sm:$0xff]
        %v2937 = vld [vmem:[#allocation3 + $0x8] sm:$0xff]
        %v2938 = vld [vmem:[#allocation3 + $0x10] sm:$0xff]
        %v2939 = vld [vmem:[#allocation3 + $0x18] sm:$0xff]
        %v2940 = vld [vmem:[#allocation3 + $0x20] sm:$0xff]
        %v2941 = vld [vmem:[#allocation3 + $0x28] sm:$0xff]
        %v2942 = vld [vmem:[#allocation3 + $0x30] sm:$0xff]
        %v2943 = vld [vmem:[#allocation3 + $0x38] sm:$0xff]
        %v2944 = vld [vmem:[#allocation3 + $0x40] sm:$0xff]
        %v2945 = vld [vmem:[#allocation3 + $0x48] sm:$0xff]
        %v2946 = vld [vmem:[#allocation3 + $0x50] sm:$0xff]
        %v2947 = vld [vmem:[#allocation3 + $0x58] sm:$0xff]
        %v2948 = vld [vmem:[#allocation3 + $0x60] sm:$0xff]
        %v2949 = vld [vmem:[#allocation3 + $0x68] sm:$0xff]
        %v2950 = vld [vmem:[#allocation3 + $0x70] sm:$0xff]
        %v2951 = vld [vmem:[#allocation3 + $0x78] sm:$0xff]
        %vm2952 = vcmask 64512
        %2953 = vst.msk [vmem:[%s208] sm:$0xff] %vm2952, %v2936
        %2954 = vst.msk [vmem:[%s208 + $0x8] sm:$0xff] %vm2952, %v2937
        %2955 = vst.msk [vmem:[%s208 + $0x10] sm:$0xff] %vm2952, %v2938
        %2956 = vst.msk [vmem:[%s208 + $0x18] sm:$0xff] %vm2952, %v2939
        %2957 = vst.msk [vmem:[%s208 + $0x20] sm:$0xff] %vm2952, %v2940
        %2958 = vst.msk [vmem:[%s208 + $0x28] sm:$0xff] %vm2952, %v2941
        %2959 = vst.msk [vmem:[%s208 + $0x30] sm:$0xff] %vm2952, %v2942
        %2960 = vst.msk [vmem:[%s208 + $0x38] sm:$0xff] %vm2952, %v2943
        %2961 = vst.msk [vmem:[%s208 + $0x40] sm:$0xff] %vm2952, %v2944
        %2962 = vst.msk [vmem:[%s208 + $0x48] sm:$0xff] %vm2952, %v2945
        %2963 = vst.msk [vmem:[%s208 + $0x50] sm:$0xff] %vm2952, %v2946
        %2964 = vst.msk [vmem:[%s208 + $0x58] sm:$0xff] %vm2952, %v2947
        %2965 = vst.msk [vmem:[%s208 + $0x60] sm:$0xff] %vm2952, %v2948
        %2966 = vst.msk [vmem:[%s208 + $0x68] sm:$0xff] %vm2952, %v2949
        %2967 = vst.msk [vmem:[%s208 + $0x70] sm:$0xff] %vm2952, %v2950
        %2968 = vst.msk [vmem:[%s208 + $0x78] sm:$0xff] %vm2952, %v2951
      $region36: #{tpu_custom_call.1} parent=27 // pred_fallthru
        _
      %s2969 = smul.u32 16, %s19
      %p2970 = scmp.lt.s32.totalorder %s18, 1
      %s2971 = scalar_select %p2970, %s18, 1
      %p2972 = scmp.lt.s32.totalorder %s2969, 15
      %s2973 = scalar_select %p2972, %s2969, 15
      %s2974 = smul.addr %s2971, 16
      %s2975 = sadd.s32 %s2973, %s2974
      %s2976 = smul.addr %s2975, 8
      %s2977 = scalar_lea.vmem %s2, %s2976
      // Predicated region
      $region37: #{tpu_custom_call.1} parent=27 // pred_check
        %p2978 = pneg %p108
      $region38: #{tpu_custom_call.1} parent=27 // pred_check_branch
        %2980 = sbr.rel (%p2978) target = $region40
      $region39: #{tpu_custom_call.1} parent=27 // pred_region
        %s2981 = smul.u32 16, %s19
      $region40: #{tpu_custom_call.1} parent=27 // pred_fallthru
        _
    $region28: #{tpu_custom_call.1} parent=5 // pred_fallthru
      _
    %p2982 = scmp.le.s32.totalorder 2, %s8
    // Predicated region
    $region41: #{tpu_custom_call.1} parent=5 // pred_check
      %p2983 = pneg %p2982
    $region42: #{tpu_custom_call.1} parent=5 // pred_check_branch
      %2985 = sbr.rel (%p2983) target = $region44
    $region43: #{tpu_custom_call.1} parent=5 // pred_region
      %s2986 = ssub.s32 %s8, 2
      // Predicated region
      $region45: #{tpu_custom_call.1} parent=43 // pred_check
        %p2987 = pneg %p114
      $region46: #{tpu_custom_call.1} parent=43 // pred_check_branch
        %2989 = sbr.rel (%p2987) target = $region48
      $region47: #{tpu_custom_call.1} parent=43 // pred_region
        %s2990 = smul.u32 16, %s22
        %p2991 = scmp.lt.s32.totalorder %s21, 1
        %s2992 = scalar_select %p2991, %s21, 1
        %p2993 = scmp.lt.s32.totalorder %s2990, 15
        %s2994 = scalar_select %p2993, %s2990, 15
        %s2995 = smul.addr %s2992, 16
        %s2996 = sadd.s32 %s2994, %s2995
        %s2997 = smul.addr %s2996, 8
        %s2998 = scalar_lea.vmem %s2, %s2997
      $region48: #{tpu_custom_call.1} parent=43 // pred_fallthru
        _
    $region44: #{tpu_custom_call.1} parent=5 // pred_fallthru
      _
  $region6: #{tpu_custom_call.1} parent=0 // loop_footer
    %s12 = sadd.s32 1, %s8
  $region7: #{tpu_custom_call.1} parent=0 // loop_footer_branch
    %7 = sbr.rel target = $region3
  $region8: #{tpu_custom_call.1} parent=0 // loop_exit
    _

</llo_original>
